<compile_context>
chip_gen: v6e
topology: v6e:2x2x1
jax: 0.10.0
libtpu: 0.0.40
codegen_flags: <defaults>
</compile_context>

<pallas_src>
import functools

import jax
import jax.numpy as jnp
from jax import lax
from jax.experimental import pallas as pl
from jax.experimental.pallas import tpu as pltpu


def _self_attention_kernel(x_ref, wq_ref, wkv_ref, wp_ref, bp_ref, o_ref,
                           kv_ref, ctx_ref, *, num_heads, head_dim, q_tile):
    qi = pl.program_id(1)          # query-tile index (innermost grid axis)
    C = num_heads * head_dim

    # --- K / V projection: one dense (N, C) @ (C, 2C) per batch element ------
    @pl.when(qi == 0)
    def _():
        kv_ref[...] = jnp.dot(
            x_ref[0], wkv_ref[...],
            preferred_element_type=jnp.float32).astype(jnp.bfloat16)

    # --- Q projection for this query tile (scale pre-folded into Wq) ---------
    q_start = pl.multiple_of(qi * q_tile, q_tile)
    xq = x_ref[0, pl.ds(q_start, q_tile), :]                         # (tq, C) bf16
    q = jnp.dot(xq, wq_ref[...],
                preferred_element_type=jnp.float32).astype(jnp.bfloat16)

    kv = kv_ref[...]                                                 # (N, 2C) bf16

    # --- Per-head attention (static unrolled loop; only QK^T / PV narrow) ----
    for h in range(num_heads):
        lo, hi = h * head_dim, (h + 1) * head_dim
        qh = q[:, lo:hi]                                             # (tq, hd)
        kh = kv[:, lo:hi]                                            # (N, hd)
        vh = kv[:, C + lo:C + hi]                                    # (N, hd)

        # logits = qh @ kh^T via dot_general contraction (no transpose).
        logits = lax.dot_general(qh, kh, (((1,), (1,)), ((), ())),
                                 preferred_element_type=jnp.float32)  # (tq, N) f32

        # Numerically-stable softmax in f32; divide -> EUP reciprocal multiply.
        m = jnp.max(logits, axis=-1, keepdims=True)
        p = jnp.exp(logits - m)
        s = jnp.sum(p, axis=-1, keepdims=True)
        probs = (p * pl.reciprocal(s, approx=True)).astype(jnp.bfloat16)
        # attn_drop / proj_drop are identity at the module defaults (p = 0.0).

        ctx_ref[:, lo:hi] = jnp.dot(probs, vh,
                                    preferred_element_type=jnp.float32)

    # --- Dense output projection: (tq, C) @ (C, out_dim) + bias --------------
    out = jnp.dot(ctx_ref[...].astype(jnp.bfloat16), wp_ref[...],
                  preferred_element_type=jnp.float32) + bp_ref[...]
    o_ref[0] = out.astype(o_ref.dtype)


def self_attention_pallas(x, wq, wk, wv, wp, bp, *, num_heads, qk_scale=None,
                          q_tile=256):
    """x: (B, N, C); wq/wk/wv/wp: (C_in, C_out) pre-transposed; bp: (out_dim,)."""
    B, N, C = x.shape
    out_dim = wp.shape[1]
    head_dim = C // num_heads
    assert num_heads * head_dim == C
    scale = qk_scale if qk_scale is not None else head_dim ** (-0.5)

    tq = min(q_tile, N)
    assert N % tq == 0, "sequence length must be divisible by the query tile"
    # TODO(synk): ragged N would need logit masking; very large N*C needs a
    # flash-style KV inner loop instead of a whole-sequence-resident KV cache
    # (v7x has 64 MiB VMEM per TensorCore).

    # bf16 operands for the MXU (accumulation stays f32 inside the kernel);
    # qk scale folded into Wq, K and V weights fused into one (C, 2C) matrix.
    x_bf = x.astype(jnp.bfloat16)
    wq_b = (wq * scale).astype(jnp.bfloat16)
    wkv_b = jnp.concatenate([wk, wv], axis=1).astype(jnp.bfloat16)   # (C, 2C)
    wp_b = wp.astype(jnp.bfloat16)
    bp2d = bp.reshape(1, out_dim).astype(jnp.float32)

    kernel = functools.partial(_self_attention_kernel,
                               num_heads=num_heads, head_dim=head_dim, q_tile=tq)

    grid = (B, N // tq)
    return pl.pallas_call(
        kernel,
        out_shape=jax.ShapeDtypeStruct((B, N, out_dim), x.dtype),
        grid_spec=pltpu.PrefetchScalarGridSpec(
            num_scalar_prefetch=0,
            grid=grid,
            in_specs=[
                # x: one bf16 DMA per batch element, resident across qi.
                pl.BlockSpec((1, N, C), lambda b, qi: (b, 0, 0)),
                # Resident weights (constant index_map -> fetched once).
                pl.BlockSpec((C, C), lambda b, qi: (0, 0)),           # Wq (scaled)
                pl.BlockSpec((C, 2 * C), lambda b, qi: (0, 0)),       # [Wk | Wv]
                pl.BlockSpec((C, out_dim), lambda b, qi: (0, 0)),     # Wp
                pl.BlockSpec((1, out_dim), lambda b, qi: (0, 0)),     # proj bias
            ],
            out_specs=pl.BlockSpec((1, tq, out_dim), lambda b, qi: (b, qi, 0)),
            scratch_shapes=[
                pltpu.VMEM((N, 2 * C), jnp.bfloat16),   # K/V cache (per batch)
                pltpu.VMEM((tq, C), jnp.float32),       # per-head ctx assembly
            ],
        ),
        compiler_params=pltpu.CompilerParams(
            # Batch axis shardable across cores; the query-tile axis carries
            # the K/V cache (filled at qi == 0) so it must stay sequential.
            dimension_semantics=("parallel", "arbitrary")),
    )(x_bf, wq_b, wkv_b, wp_b, bp2d)


def self_attention_ref(x, wq, wk, wv, wp, bp, *, num_heads, qk_scale=None):
    """Pure-JAX f32 reference matching the PyTorch forward exactly."""
    B, N, C = x.shape
    head_dim = C // num_heads
    scale = qk_scale if qk_scale is not None else head_dim ** (-0.5)

    q = x @ wq
    k = x @ wk
    v = x @ wv
    q = q.reshape(B, N, num_heads, head_dim).transpose(0, 2, 1, 3) * scale
    k = k.reshape(B, N, num_heads, head_dim).transpose(0, 2, 1, 3)
    v = v.reshape(B, N, num_heads, head_dim).transpose(0, 2, 1, 3)
    attn = jnp.einsum("bhqd,bhkd->bhqk", q, k)
    attn = jax.nn.softmax(attn, axis=-1)
    out = jnp.einsum("bhqk,bhkd->bhqd", attn, v)
    out = out.transpose(0, 2, 1, 3).reshape(B, N, C)
    return out @ wp + bp


if __name__ == "__main__":
    # Small but lane-dense shapes: B=2, N=256 tokens, dim=128, 4 heads (hd=32).
    B, N, C = 2, 256, 128
    num_heads = 4
    out_dim = C  # out_dim defaults to dim

    key = jax.random.PRNGKey(0)
    kx, kq, kk, kv, kp, kb = jax.random.split(key, 6)

    x = jax.random.normal(kx, (B, N, C), dtype=jnp.float32)

    # Deterministic synthetic parameters, stored pre-transposed as (in, out).
    wq = jax.random.normal(kq, (C, C), dtype=jnp.float32) * 0.05
    wk = jax.random.normal(kk, (C, C), dtype=jnp.float32) * 0.05
    wv = jax.random.normal(kv, (C, C), dtype=jnp.float32) * 0.05
    wp = jax.random.normal(kp, (C, out_dim), dtype=jnp.float32) * 0.05
    bp = jax.random.normal(kb, (out_dim,), dtype=jnp.float32) * 0.05
    # qkv_bias=False (module default) -> no q/k/v biases.

    out = self_attention_pallas(x, wq, wk, wv, wp, bp, num_heads=num_heads)
    out = jax.block_until_ready(out)

    ref = self_attention_ref(x, wq, wk, wv, wp, bp, num_heads=num_heads)
    assert out.shape == (B, N, out_dim)
    # bf16 MXU operands + approx reciprocal -> loosened tolerance vs f32 ref.
    assert jnp.allclose(out, ref, atol=2e-2, rtol=2e-2), "mismatch vs reference"

    print("KERNEL_OK")
</pallas_src>

<mosaic_0001>
module attributes {stable_mosaic.version = 11 : i64} {
  func.func @_self_attention_kernel(%arg0: i32, %arg1: i32, %arg2: memref<1x256x128xbf16, #tpu.memory_space<vmem>>, %arg3: memref<128x128xbf16, #tpu.memory_space<vmem>>, %arg4: memref<128x256xbf16, #tpu.memory_space<vmem>>, %arg5: memref<128x128xbf16, #tpu.memory_space<vmem>>, %arg6: memref<1x128xf32, #tpu.memory_space<vmem>>, %arg7: memref<1x256x128xf32, #tpu.memory_space<vmem>>, %arg8: memref<256x256xbf16, #tpu.memory_space<vmem>>, %arg9: memref<256x128xf32, #tpu.memory_space<vmem>>) attributes {dimension_semantics = [#tpu.dimension_semantics<parallel>, #tpu.dimension_semantics<arbitrary>], iteration_bounds = array<i64: 2, 1>, scalar_prefetch = 0 : i64, scratch_operands = 2 : i64, tpu.core_type = #tpu.core_type<tc>, window_params = [{transform_indices = @transform_0, window_bounds = array<i64: 1, 256, 128>}, {pipeline_mode = #tpu.pipeline_mode<synchronous>, transform_indices = @transform_1, window_bounds = array<i64: 128, 128>}, {pipeline_mode = #tpu.pipeline_mode<synchronous>, transform_indices = @transform_2, window_bounds = array<i64: 128, 256>}, {pipeline_mode = #tpu.pipeline_mode<synchronous>, transform_indices = @transform_3, window_bounds = array<i64: 128, 128>}, {pipeline_mode = #tpu.pipeline_mode<synchronous>, transform_indices = @transform_4, window_bounds = array<i64: 1, 128>}, {transform_indices = @transform_5, window_bounds = array<i64: 1, 256, 128>}]} {
    %c0_i32 = arith.constant 0 : i32
    %0 = arith.cmpi eq, %arg1, %c0_i32 : i32
    %1 = arith.extui %0 : i1 to i32
    %c0_i32_0 = arith.constant 0 : i32
    %2 = arith.cmpi ne, %1, %c0_i32_0 : i32
    scf.if %2 {
      %c0_37 = arith.constant 0 : index
      %c0_38 = arith.constant 0 : index
      %c0_39 = arith.constant 0 : index
      %90 = vector.load %arg2[%c0_37, %c0_38, %c0_39] : memref<1x256x128xbf16, #tpu.memory_space<vmem>>, vector<1x256x128xbf16>
      %91 = vector.shape_cast %90 : vector<1x256x128xbf16> to vector<256x128xbf16>
      %c0_40 = arith.constant 0 : index
      %c0_41 = arith.constant 0 : index
      %92 = vector.load %arg4[%c0_40, %c0_41] : memref<128x256xbf16, #tpu.memory_space<vmem>>, vector<128x256xbf16>
      %cst_42 = arith.constant dense<0.000000e+00> : vector<256x256xf32>
      %93 = tpu.matmul %91, %92, %cst_42 {dimension_numbers = #tpu.dot_dimension_numbers<[1], [0], [0], [1], [0, 0, 1, 1], [], []>} : vector<256x128xbf16>, vector<128x256xbf16>, vector<256x256xf32> -> vector<256x256xf32>
      %94 = arith.truncf %93 : vector<256x256xf32> to vector<256x256xbf16>
      %c0_43 = arith.constant 0 : index
      %c0_44 = arith.constant 0 : index
      %95 = vector.load %arg8[%c0_43, %c0_44] : memref<256x256xbf16, #tpu.memory_space<vmem>>, vector<256x256xbf16>
      tpu.vector_store %arg8[%c0_43, %c0_44], %94 {strides = array<i32>} : memref<256x256xbf16, #tpu.memory_space<vmem>>, vector<256x256xbf16>,
    } else {
    }
    %c256_i32 = arith.constant 256 : i32
    %3 = arith.muli %arg1, %c256_i32 : i32
    %4 = tpu.assume_multiple %3, 256 : i32
    %c0 = arith.constant 0 : index
    %5 = arith.index_cast %4 : i32 to index
    %c0_1 = arith.constant 0 : index
    %6 = vector.load %arg2[%c0, %5, %c0_1] : memref<1x256x128xbf16, #tpu.memory_space<vmem>>, vector<1x256x128xbf16>
    %7 = vector.shape_cast %6 : vector<1x256x128xbf16> to vector<256x128xbf16>
    %c0_2 = arith.constant 0 : index
    %c0_3 = arith.constant 0 : index
    %8 = vector.load %arg3[%c0_2, %c0_3] : memref<128x128xbf16, #tpu.memory_space<vmem>>, vector<128x128xbf16>
    %cst = arith.constant dense<0.000000e+00> : vector<256x128xf32>
    %9 = tpu.matmul %7, %8, %cst {dimension_numbers = #tpu.dot_dimension_numbers<[1], [0], [0], [1], [0, 0, 1, 1], [], []>} : vector<256x128xbf16>, vector<128x128xbf16>, vector<256x128xf32> -> vector<256x128xf32>
    %10 = arith.truncf %9 : vector<256x128xf32> to vector<256x128xbf16>
    %c0_4 = arith.constant 0 : index
    %c0_5 = arith.constant 0 : index
    %11 = vector.load %arg8[%c0_4, %c0_5] : memref<256x256xbf16, #tpu.memory_space<vmem>>, vector<256x256xbf16>
    %12 = vector.extract_strided_slice %10 {offsets = [0, 0], sizes = [256, 32], strides = [1, 1]} : vector<256x128xbf16> to vector<256x32xbf16>
    %13 = vector.extract_strided_slice %11 {offsets = [0, 0], sizes = [256, 32], strides = [1, 1]} : vector<256x256xbf16> to vector<256x32xbf16>
    %14 = vector.extract_strided_slice %11 {offsets = [0, 128], sizes = [256, 32], strides = [1, 1]} : vector<256x256xbf16> to vector<256x32xbf16>
    %cst_6 = arith.constant dense<0.000000e+00> : vector<256x256xf32>
    %15 = tpu.matmul %12, %13, %cst_6 {dimension_numbers = #tpu.dot_dimension_numbers<[1], [1], [0], [0], [0, 0, 1, 0], [], []>} : vector<256x32xbf16>, vector<256x32xbf16>, vector<256x256xf32> -> vector<256x256xf32>
    %cst_7 = arith.constant dense<0xFF800000> : vector<256xf32>
    %16 = vector.multi_reduction <maximumf>, %15, %cst_7 [1] : vector<256x256xf32> to vector<256xf32>
    %17 = vector.shape_cast %16 : vector<256xf32> to vector<256x1xf32>
    %18 = vector.broadcast %17 : vector<256x1xf32> to vector<256x256xf32>
    %19 = arith.subf %15, %18 : vector<256x256xf32>
    %20 = math.exp %19 : vector<256x256xf32>
    %cst_8 = arith.constant dense<0.000000e+00> : vector<256xf32>
    %21 = vector.multi_reduction <add>, %20, %cst_8 [1] : vector<256x256xf32> to vector<256xf32>
    %22 = vector.shape_cast %21 : vector<256xf32> to vector<256x1xf32>
    %23 = tpu.reciprocal %22 {approx = true} : vector<256x1xf32> -> vector<256x1xf32>
    %24 = vector.broadcast %23 : vector<256x1xf32> to vector<256x256xf32>
    %25 = arith.mulf %20, %24 : vector<256x256xf32>
    %26 = arith.truncf %25 : vector<256x256xf32> to vector<256x256xbf16>
    %cst_9 = arith.constant dense<0.000000e+00> : vector<256x32xf32>
    %27 = tpu.matmul %26, %14, %cst_9 {dimension_numbers = #tpu.dot_dimension_numbers<[1], [0], [0], [1], [0, 0, 1, 1], [], []>} : vector<256x256xbf16>, vector<256x32xbf16>, vector<256x32xf32> -> vector<256x32xf32>
    %c0_10 = arith.constant 0 : index
    %c0_11 = arith.constant 0 : index
    %28 = vector.load %arg9[%c0_10, %c0_11] : memref<256x128xf32, #tpu.memory_space<vmem>>, vector<256x32xf32>
    tpu.vector_store %arg9[%c0_10, %c0_11], %27 {strides = array<i32>} : memref<256x128xf32, #tpu.memory_space<vmem>>, vector<256x32xf32>,
    %29 = vector.extract_strided_slice %10 {offsets = [0, 32], sizes = [256, 32], strides = [1, 1]} : vector<256x128xbf16> to vector<256x32xbf16>
    %30 = vector.extract_strided_slice %11 {offsets = [0, 32], sizes = [256, 32], strides = [1, 1]} : vector<256x256xbf16> to vector<256x32xbf16>
    %31 = vector.extract_strided_slice %11 {offsets = [0, 160], sizes = [256, 32], strides = [1, 1]} : vector<256x256xbf16> to vector<256x32xbf16>
    %cst_12 = arith.constant dense<0.000000e+00> : vector<256x256xf32>
    %32 = tpu.matmul %29, %30, %cst_12 {dimension_numbers = #tpu.dot_dimension_numbers<[1], [1], [0], [0], [0, 0, 1, 0], [], []>} : vector<256x32xbf16>, vector<256x32xbf16>, vector<256x256xf32> -> vector<256x256xf32>
    %cst_13 = arith.constant dense<0xFF800000> : vector<256xf32>
    %33 = vector.multi_reduction <maximumf>, %32, %cst_13 [1] : vector<256x256xf32> to vector<256xf32>
    %34 = vector.shape_cast %33 : vector<256xf32> to vector<256x1xf32>
    %35 = vector.broadcast %34 : vector<256x1xf32> to vector<256x256xf32>
    %36 = arith.subf %32, %35 : vector<256x256xf32>
    %37 = math.exp %36 : vector<256x256xf32>
    %cst_14 = arith.constant dense<0.000000e+00> : vector<256xf32>
    %38 = vector.multi_reduction <add>, %37, %cst_14 [1] : vector<256x256xf32> to vector<256xf32>
    %39 = vector.shape_cast %38 : vector<256xf32> to vector<256x1xf32>
    %40 = tpu.reciprocal %39 {approx = true} : vector<256x1xf32> -> vector<256x1xf32>
    %41 = vector.broadcast %40 : vector<256x1xf32> to vector<256x256xf32>
    %42 = arith.mulf %37, %41 : vector<256x256xf32>
    %43 = arith.truncf %42 : vector<256x256xf32> to vector<256x256xbf16>
    %cst_15 = arith.constant dense<0.000000e+00> : vector<256x32xf32>
    %44 = tpu.matmul %43, %31, %cst_15 {dimension_numbers = #tpu.dot_dimension_numbers<[1], [0], [0], [1], [0, 0, 1, 1], [], []>} : vector<256x256xbf16>, vector<256x32xbf16>, vector<256x32xf32> -> vector<256x32xf32>
    %c0_16 = arith.constant 0 : index
    %c32 = arith.constant 32 : index
    %45 = vector.load %arg9[%c0_16, %c32] : memref<256x128xf32, #tpu.memory_space<vmem>>, vector<256x32xf32>
    tpu.vector_store %arg9[%c0_16, %c32], %44 {strides = array<i32>} : memref<256x128xf32, #tpu.memory_space<vmem>>, vector<256x32xf32>,
    %46 = vector.extract_strided_slice %10 {offsets = [0, 64], sizes = [256, 32], strides = [1, 1]} : vector<256x128xbf16> to vector<256x32xbf16>
    %47 = vector.extract_strided_slice %11 {offsets = [0, 64], sizes = [256, 32], strides = [1, 1]} : vector<256x256xbf16> to vector<256x32xbf16>
    %48 = vector.extract_strided_slice %11 {offsets = [0, 192], sizes = [256, 32], strides = [1, 1]} : vector<256x256xbf16> to vector<256x32xbf16>
    %cst_17 = arith.constant dense<0.000000e+00> : vector<256x256xf32>
    %49 = tpu.matmul %46, %47, %cst_17 {dimension_numbers = #tpu.dot_dimension_numbers<[1], [1], [0], [0], [0, 0, 1, 0], [], []>} : vector<256x32xbf16>, vector<256x32xbf16>, vector<256x256xf32> -> vector<256x256xf32>
    %cst_18 = arith.constant dense<0xFF800000> : vector<256xf32>
    %50 = vector.multi_reduction <maximumf>, %49, %cst_18 [1] : vector<256x256xf32> to vector<256xf32>
    %51 = vector.shape_cast %50 : vector<256xf32> to vector<256x1xf32>
    %52 = vector.broadcast %51 : vector<256x1xf32> to vector<256x256xf32>
    %53 = arith.subf %49, %52 : vector<256x256xf32>
    %54 = math.exp %53 : vector<256x256xf32>
    %cst_19 = arith.constant dense<0.000000e+00> : vector<256xf32>
    %55 = vector.multi_reduction <add>, %54, %cst_19 [1] : vector<256x256xf32> to vector<256xf32>
    %56 = vector.shape_cast %55 : vector<256xf32> to vector<256x1xf32>
    %57 = tpu.reciprocal %56 {approx = true} : vector<256x1xf32> -> vector<256x1xf32>
    %58 = vector.broadcast %57 : vector<256x1xf32> to vector<256x256xf32>
    %59 = arith.mulf %54, %58 : vector<256x256xf32>
    %60 = arith.truncf %59 : vector<256x256xf32> to vector<256x256xbf16>
    %cst_20 = arith.constant dense<0.000000e+00> : vector<256x32xf32>
    %61 = tpu.matmul %60, %48, %cst_20 {dimension_numbers = #tpu.dot_dimension_numbers<[1], [0], [0], [1], [0, 0, 1, 1], [], []>} : vector<256x256xbf16>, vector<256x32xbf16>, vector<256x32xf32> -> vector<256x32xf32>
    %c0_21 = arith.constant 0 : index
    %c64 = arith.constant 64 : index
    %62 = vector.load %arg9[%c0_21, %c64] : memref<256x128xf32, #tpu.memory_space<vmem>>, vector<256x32xf32>
    tpu.vector_store %arg9[%c0_21, %c64], %61 {strides = array<i32>} : memref<256x128xf32, #tpu.memory_space<vmem>>, vector<256x32xf32>,
    %63 = vector.extract_strided_slice %10 {offsets = [0, 96], sizes = [256, 32], strides = [1, 1]} : vector<256x128xbf16> to vector<256x32xbf16>
    %64 = vector.extract_strided_slice %11 {offsets = [0, 96], sizes = [256, 32], strides = [1, 1]} : vector<256x256xbf16> to vector<256x32xbf16>
    %65 = vector.extract_strided_slice %11 {offsets = [0, 224], sizes = [256, 32], strides = [1, 1]} : vector<256x256xbf16> to vector<256x32xbf16>
    %cst_22 = arith.constant dense<0.000000e+00> : vector<256x256xf32>
    %66 = tpu.matmul %63, %64, %cst_22 {dimension_numbers = #tpu.dot_dimension_numbers<[1], [1], [0], [0], [0, 0, 1, 0], [], []>} : vector<256x32xbf16>, vector<256x32xbf16>, vector<256x256xf32> -> vector<256x256xf32>
    %cst_23 = arith.constant dense<0xFF800000> : vector<256xf32>
    %67 = vector.multi_reduction <maximumf>, %66, %cst_23 [1] : vector<256x256xf32> to vector<256xf32>
    %68 = vector.shape_cast %67 : vector<256xf32> to vector<256x1xf32>
    %69 = vector.broadcast %68 : vector<256x1xf32> to vector<256x256xf32>
    %70 = arith.subf %66, %69 : vector<256x256xf32>
    %71 = math.exp %70 : vector<256x256xf32>
    %cst_24 = arith.constant dense<0.000000e+00> : vector<256xf32>
    %72 = vector.multi_reduction <add>, %71, %cst_24 [1] : vector<256x256xf32> to vector<256xf32>
    %73 = vector.shape_cast %72 : vector<256xf32> to vector<256x1xf32>
    %74 = tpu.reciprocal %73 {approx = true} : vector<256x1xf32> -> vector<256x1xf32>
    %75 = vector.broadcast %74 : vector<256x1xf32> to vector<256x256xf32>
    %76 = arith.mulf %71, %75 : vector<256x256xf32>
    %77 = arith.truncf %76 : vector<256x256xf32> to vector<256x256xbf16>
    %cst_25 = arith.constant dense<0.000000e+00> : vector<256x32xf32>
    %78 = tpu.matmul %77, %65, %cst_25 {dimension_numbers = #tpu.dot_dimension_numbers<[1], [0], [0], [1], [0, 0, 1, 1], [], []>} : vector<256x256xbf16>, vector<256x32xbf16>, vector<256x32xf32> -> vector<256x32xf32>
    %c0_26 = arith.constant 0 : index
    %c96 = arith.constant 96 : index
    %79 = vector.load %arg9[%c0_26, %c96] : memref<256x128xf32, #tpu.memory_space<vmem>>, vector<256x32xf32>
    tpu.vector_store %arg9[%c0_26, %c96], %78 {strides = array<i32>} : memref<256x128xf32, #tpu.memory_space<vmem>>, vector<256x32xf32>,
    %c0_27 = arith.constant 0 : index
    %c0_28 = arith.constant 0 : index
    %80 = vector.load %arg9[%c0_27, %c0_28] : memref<256x128xf32, #tpu.memory_space<vmem>>, vector<256x128xf32>
    %81 = arith.truncf %80 : vector<256x128xf32> to vector<256x128xbf16>
    %c0_29 = arith.constant 0 : index
    %c0_30 = arith.constant 0 : index
    %82 = vector.load %arg5[%c0_29, %c0_30] : memref<128x128xbf16, #tpu.memory_space<vmem>>, vector<128x128xbf16>
    %cst_31 = arith.constant dense<0.000000e+00> : vector<256x128xf32>
    %83 = tpu.matmul %81, %82, %cst_31 {dimension_numbers = #tpu.dot_dimension_numbers<[1], [0], [0], [1], [0, 0, 1, 1], [], []>} : vector<256x128xbf16>, vector<128x128xbf16>, vector<256x128xf32> -> vector<256x128xf32>
    %c0_32 = arith.constant 0 : index
    %c0_33 = arith.constant 0 : index
    %84 = vector.load %arg6[%c0_32, %c0_33] : memref<1x128xf32, #tpu.memory_space<vmem>>, vector<1x128xf32>
    %85 = vector.broadcast %84 : vector<1x128xf32> to vector<256x128xf32>
    %86 = arith.addf %83, %85 : vector<256x128xf32>
    %c0_34 = arith.constant 0 : index
    %c0_35 = arith.constant 0 : index
    %c0_36 = arith.constant 0 : index
    %87 = vector.load %arg7[%c0_34, %c0_35, %c0_36] : memref<1x256x128xf32, #tpu.memory_space<vmem>>, vector<1x256x128xf32>
    %88 = vector.shape_cast %87 : vector<1x256x128xf32> to vector<256x128xf32>
    %89 = vector.shape_cast %86 : vector<256x128xf32> to vector<1x256x128xf32>
    tpu.vector_store %arg7[%c0_34, %c0_35, %c0_36], %89 {strides = array<i32>} : memref<1x256x128xf32, #tpu.memory_space<vmem>>, vector<1x256x128xf32>,
    return
  }
  func.func @transform_0(%arg0: i32, %arg1: i32) -> (i32, i32, i32) {
    %c0_i32 = arith.constant 0 : i32
    %c0_i32_0 = arith.constant 0 : i32
    %c0_i32_1 = arith.constant 0 : i32
    return %arg0, %c0_i32, %c0_i32_0 : i32, i32, i32
  }
  func.func @transform_1(%arg0: i32, %arg1: i32) -> (i32, i32) {
    %c0_i32 = arith.constant 0 : i32
    %c0_i32_0 = arith.constant 0 : i32
    %c0_i32_1 = arith.constant 0 : i32
    return %c0_i32, %c0_i32_0 : i32, i32
  }
  func.func @transform_2(%arg0: i32, %arg1: i32) -> (i32, i32) {
    %c0_i32 = arith.constant 0 : i32
    %c0_i32_0 = arith.constant 0 : i32
    %c0_i32_1 = arith.constant 0 : i32
    return %c0_i32, %c0_i32_0 : i32, i32
  }
  func.func @transform_3(%arg0: i32, %arg1: i32) -> (i32, i32) {
    %c0_i32 = arith.constant 0 : i32
    %c0_i32_0 = arith.constant 0 : i32
    %c0_i32_1 = arith.constant 0 : i32
    return %c0_i32, %c0_i32_0 : i32, i32
  }
  func.func @transform_4(%arg0: i32, %arg1: i32) -> (i32, i32) {
    %c0_i32 = arith.constant 0 : i32
    %c0_i32_0 = arith.constant 0 : i32
    %c0_i32_1 = arith.constant 0 : i32
    return %c0_i32, %c0_i32_0 : i32, i32
  }
  func.func @transform_5(%arg0: i32, %arg1: i32) -> (i32, i32, i32) {
    %c0_i32 = arith.constant 0 : i32
    %c0_i32_0 = arith.constant 0 : i32
    return %arg0, %arg1, %c0_i32 : i32, i32, i32
  }
}

</mosaic_0001>

<llo_original>
// kernel: tpu_custom_call.1
$region0: #{tpu_custom_call.1}
  #allocation0 [shape = 'u32[]', space=smem, size = 0x4, offset = 0x4, fixed_abs, tag = 'smem constant byte address 0x4 - core index']
  #allocation1 [shape = 'u32[144,128]{1,0:T(1,128)}', space=vmem, size = 0x12000, scoped, tag = 'internal scratch']
  #allocation2 [shape = 'bf16[256,256]{1,0:T(8,128)(2,1)}', space=vmem, size = 0x20000, scoped, tag = 'scratch operand']
  #allocation3 [shape = 'f32[256,128]{1,0:T(8,128)}', space=vmem, size = 0x20000, scoped, tag = 'scratch operand']
  %s0 = inlined_call_operand.hbm [shape: bf16[2,256,128], index: 0, kind: input, shape index: {}]
  %s1 = inlined_call_operand.hbm [shape: bf16[128,128], index: 1, kind: input, shape index: {}]
  %s2 = inlined_call_operand.hbm [shape: bf16[128,256], index: 2, kind: input, shape index: {}]
  %s3 = inlined_call_operand.hbm [shape: bf16[128,128], index: 3, kind: input, shape index: {}]
  %s4 = inlined_call_operand.vmem [shape: f32[1,128], index: 4, kind: input, shape index: {}]
  %s5 = inlined_call_operand.hbm [shape: f32[2,256,128], index: 5, kind: output, shape index: {}]
  %s6 = sld [smem:[#allocation0]]
  $region73: #{tpu_custom_call.1} parent=0
    _
  %s8 = ssub.s32 1, %s6
  %s9 = scalar_select 0, %s8, %s6
  $region1: #{tpu_custom_call.1} parent=0
    #allocation4 [shape = 'u8[131072]{0}', space=vmem, size = 0x20000, scoped, tag = 'input window, operand 0']
    #allocation5 [shape = 's32[2]{0}', space=sflag, size = 0x8, scoped, tag = 'scoped memory for tpu_custom_call.1']
    #allocation6 [shape = 's32[2]{0}', space=sflag, size = 0x8, scoped, tag = 'scoped memory for tpu_custom_call.1']
    #allocation7 [shape = 'u8[32768]{0}', space=vmem, size = 0x8000, scoped, tag = 'input window, operand 1, single buffered']
    #allocation8 [shape = 's32[1]{0}', space=sflag, size = 0x4, scoped, tag = 'scoped memory for tpu_custom_call.1']
    #allocation9 [shape = 'u8[65536]{0}', space=vmem, size = 0x10000, scoped, tag = 'input window, operand 2, single buffered']
    #allocation10 [shape = 'u8[32768]{0}', space=vmem, size = 0x8000, scoped, tag = 'input window, operand 3, single buffered']
    #allocation11 [shape = 's32[1]{0}', space=sflag, size = 0x4, scoped, tag = 'scoped memory for tpu_custom_call.1']
    #allocation12 [shape = 'u8[262144]{0}', space=vmem, size = 0x40000, scoped, tag = 'output window, operand 0']
    %10 = vsyncpa [#allocation5], 0
    %s11 = scalar_lea.sflag [#allocation5], 1
    %12 = vsyncpa %s11, 0
    %13 = vsyncpa [#allocation8], 0
    %14 = vsyncpa [#allocation11], 0
    %15 = vsyncpa [#allocation6], 0
    %s16 = scalar_lea.sflag [#allocation6], 1
    %17 = vsyncpa %s16, 0
    loop: start=0, step=1, limit=4
    $region2: #{tpu_custom_call.1} parent=1 // loop_pre_header
      _
    $region3: #{tpu_custom_call.1} parent=1 // loop_header
      %s19 = sphi 0, %s23
      %p20 = scmp.ge.s32.totalorder %s19, 4
      %s26 = sphi 0, %s38
      %s27 = sphi 0, %s34
      %s28 = sphi 0, %s26
      %s29 = sphi 0, %s27
      %s30 = sphi 0, %s28
      %s31 = sphi 0, %s29
      %s41 = sphi 0, %s43
      %s44 = sphi 0, %s41
      %s45 = sphi 0, %s44
      %s61 = sphi 0, %s45
      %s65 = sphi 0, %s65
      %s67 = sphi 0, %s65
      %s68 = sphi 0, %s67
      %s82 = sphi 0, %s68
      %s86 = sphi 0, %s86
      %s88 = sphi 0, %s86
      %s89 = sphi 0, %s88
      %s103 = sphi 0, %s89
      %s107 = sphi 0, %s107
      %s109 = sphi 0, %s107
      %s110 = sphi 0, %s109
      %s124 = sphi 0, %s110
      %s128 = sphi 0, %s128
      %s130 = sphi 0, %s128
      %s131 = sphi 0, %s130
      %s145 = sphi 0, %s131
      %s153 = sphi 0, %s155
      %s156 = sphi 0, %s153
      %s157 = sphi 0, %s156
      %s173 = sphi 0, %s157
    $region4: #{tpu_custom_call.1} parent=1 // loop_header_branch
      %22 = sbr.rel (%p20) target = $region8
    $region5: #{tpu_custom_call.1} parent=1 // loop_body
      %s24 = ssub.s32 %s19, 1
      %s25 = ssub.s32 %s19, 2
      %s32 = sadd.s32 1, %s27
      %p33 = scmp.ge.s32.totalorder %s32, 1
      %s34 = scalar_select %p33, 0, %s32
      %s35 = sadd.s32 1, %s26
      %s36 = scalar_select %p33, %s35, %s26
      %p37 = scmp.ge.s32.totalorder %s36, 2
      %s38 = scalar_select %p37, 0, %s36
      %s39 = ssub.s32 %s26, %s38
      %p40 = scmp.eq.s32.totalorder %s39, 0
      %s42 = sadd.s32 %s41, 1
      %s43 = scalar_select %p40, %s41, %s42
      %p46 = pneg %p40
      %p47 = scmp.eq.s32.totalorder %s19, 1
      %p48 = por %p46, %p47
      %p49 = scmp.ne.s32.totalorder %s41, %s44
      %p50 = scmp.eq.s32.totalorder %s19, 0
      %p51 = por %p49, %p50
      %p52 = scmp.ne.s32.totalorder %s41, %s44
      %p53 = scmp.eq.s32.totalorder %s24, 1
      %p54 = por %p52, %p53
      %p55 = scmp.ne.s32.totalorder %s44, %s45
      %p56 = scmp.eq.s32.totalorder %s24, 0
      %p57 = por %p55, %p56
      %p58 = scmp.ne.s32.totalorder %s44, %s45
      %p59 = scmp.eq.s32.totalorder %s25, 1
      %p60 = por %p58, %p59
      %p62 = scmp.ne.s32.totalorder %s45, %s61
      %p63 = scmp.eq.s32.totalorder %s25, 0
      %p64 = por %p62, %p63
      %s66 = sadd.s32 %s65, 1
      %p69 = scmp.eq.s32.totalorder %s19, 1
      %p70 = scmp.ne.s32.totalorder %s65, %s67
      %p71 = scmp.eq.s32.totalorder %s19, 0
      %p72 = por %p70, %p71
      %p73 = scmp.ne.s32.totalorder %s65, %s67
      %p74 = scmp.eq.s32.totalorder %s24, 1
      %p75 = por %p73, %p74
      %p76 = scmp.ne.s32.totalorder %s67, %s68
      %p77 = scmp.eq.s32.totalorder %s24, 0
      %p78 = por %p76, %p77
      %p79 = scmp.ne.s32.totalorder %s67, %s68
      %p80 = scmp.eq.s32.totalorder %s25, 1
      %p81 = por %p79, %p80
      %p83 = scmp.ne.s32.totalorder %s68, %s82
      %p84 = scmp.eq.s32.totalorder %s25, 0
      %p85 = por %p83, %p84
      %s87 = sadd.s32 %s86, 1
      %p90 = scmp.eq.s32.totalorder %s19, 1
      %p91 = scmp.ne.s32.totalorder %s86, %s88
      %p92 = scmp.eq.s32.totalorder %s19, 0
      %p93 = por %p91, %p92
      %p94 = scmp.ne.s32.totalorder %s86, %s88
      %p95 = scmp.eq.s32.totalorder %s24, 1
      %p96 = por %p94, %p95
      %p97 = scmp.ne.s32.totalorder %s88, %s89
      %p98 = scmp.eq.s32.totalorder %s24, 0
      %p99 = por %p97, %p98
      %p100 = scmp.ne.s32.totalorder %s88, %s89
      %p101 = scmp.eq.s32.totalorder %s25, 1
      %p102 = por %p100, %p101
      %p104 = scmp.ne.s32.totalorder %s89, %s103
      %p105 = scmp.eq.s32.totalorder %s25, 0
      %p106 = por %p104, %p105
      %s108 = sadd.s32 %s107, 1
      %p111 = scmp.eq.s32.totalorder %s19, 1
      %p112 = scmp.ne.s32.totalorder %s107, %s109
      %p113 = scmp.eq.s32.totalorder %s19, 0
      %p114 = por %p112, %p113
      %p115 = scmp.ne.s32.totalorder %s107, %s109
      %p116 = scmp.eq.s32.totalorder %s24, 1
      %p117 = por %p115, %p116
      %p118 = scmp.ne.s32.totalorder %s109, %s110
      %p119 = scmp.eq.s32.totalorder %s24, 0
      %p120 = por %p118, %p119
      %p121 = scmp.ne.s32.totalorder %s109, %s110
      %p122 = scmp.eq.s32.totalorder %s25, 1
      %p123 = por %p121, %p122
      %p125 = scmp.ne.s32.totalorder %s110, %s124
      %p126 = scmp.eq.s32.totalorder %s25, 0
      %p127 = por %p125, %p126
      %s129 = sadd.s32 %s128, 1
      %p132 = scmp.eq.s32.totalorder %s19, 1
      %p133 = scmp.ne.s32.totalorder %s128, %s130
      %p134 = scmp.eq.s32.totalorder %s19, 0
      %p135 = por %p133, %p134
      %p136 = scmp.ne.s32.totalorder %s128, %s130
      %p137 = scmp.eq.s32.totalorder %s24, 1
      %p138 = por %p136, %p137
      %p139 = scmp.ne.s32.totalorder %s130, %s131
      %p140 = scmp.eq.s32.totalorder %s24, 0
      %p141 = por %p139, %p140
      %p142 = scmp.ne.s32.totalorder %s130, %s131
      %p143 = scmp.eq.s32.totalorder %s25, 1
      %p144 = por %p142, %p143
      %p146 = scmp.ne.s32.totalorder %s131, %s145
      %p147 = scmp.eq.s32.totalorder %s25, 0
      %p148 = por %p146, %p147
      %s149 = ssub.s32 %s26, %s38
      %s150 = ssub.s32 %s27, %s34
      %s151 = sor.u32 %s149, %s150
      %p152 = scmp.eq.s32.totalorder %s151, 0
      %s154 = sadd.s32 %s153, 1
      %s155 = scalar_select %p152, %s153, %s154
      %p158 = pneg %p152
      %p159 = scmp.eq.s32.totalorder %s19, 1
      %p160 = por %p158, %p159
      %p161 = scmp.ne.s32.totalorder %s153, %s156
      %p162 = scmp.eq.s32.totalorder %s19, 0
      %p163 = por %p161, %p162
      %p164 = scmp.ne.s32.totalorder %s153, %s156
      %p165 = scmp.eq.s32.totalorder %s24, 1
      %p166 = por %p164, %p165
      %p167 = scmp.ne.s32.totalorder %s156, %s157
      %p168 = scmp.eq.s32.totalorder %s24, 0
      %p169 = por %p167, %p168
      %p170 = scmp.ne.s32.totalorder %s156, %s157
      %p171 = scmp.eq.s32.totalorder %s25, 1
      %p172 = por %p170, %p171
      %p174 = scmp.ne.s32.totalorder %s157, %s173
      %p175 = scmp.eq.s32.totalorder %s25, 0
      %p176 = por %p174, %p175
      %p177 = scmp.le.s32.totalorder 1, %s19
      %p178 = scmp.lt.s32.totalorder %s19, 3
      %p179 = pnand %p177, %p178
      %p180 = pneg %p179
      // Predicated region
      $region9: #{tpu_custom_call.1} parent=5 // pred_check
        _
      $region10: #{tpu_custom_call.1} parent=5 // pred_check_branch
        %182 = sbr.rel (%p179) target = $region12
      $region11: #{tpu_custom_call.1} parent=5 // pred_region
        %s183 = ssub.s32 %s19, 1
        // Predicated region
        $region13: #{tpu_custom_call.1} parent=11 // pred_check
          %p184 = pneg %p78
        $region14: #{tpu_custom_call.1} parent=11 // pred_check_branch
          %186 = sbr.rel (%p184) target = $region16
        $region15: #{tpu_custom_call.1} parent=11 // pred_region
          %s188 = ssub.s32 1024, 1024
          %189 = vsyncadd [#allocation8], %s188
          %s190 = sshll.u32 [#allocation7], 4
          %s191 = int_to_ptr.vmem [resolvable:$true] %s190
          %196 = dma.hbm_to_vmem [thread:$0]  %s1, 1024, %s191, [#allocation8], 64, 64, 4
        $region16: #{tpu_custom_call.1} parent=11 // pred_fallthru
          _
        // Predicated region
        $region17: #{tpu_custom_call.1} parent=11 // pred_check
          %p197 = pneg %p99
        $region18: #{tpu_custom_call.1} parent=11 // pred_check_branch
          %199 = sbr.rel (%p197) target = $region20
        $region19: #{tpu_custom_call.1} parent=11 // pred_region
          %s201 = ssub.s32 2048, 2048
          %202 = vsyncadd [#allocation8], %s201
          %s203 = sshll.u32 [#allocation9], 4
          %s204 = int_to_ptr.vmem [resolvable:$true] %s203
          %209 = dma.hbm_to_vmem [thread:$0]  %s2, 2048, %s204, [#allocation8], 128, 128, 8
        $region20: #{tpu_custom_call.1} parent=11 // pred_fallthru
          _
        // Predicated region
        $region21: #{tpu_custom_call.1} parent=11 // pred_check
          %p210 = pneg %p120
        $region22: #{tpu_custom_call.1} parent=11 // pred_check_branch
          %212 = sbr.rel (%p210) target = $region24
        $region23: #{tpu_custom_call.1} parent=11 // pred_region
          %s214 = ssub.s32 1024, 1024
          %215 = vsyncadd [#allocation11], %s214
          %s216 = sshll.u32 [#allocation10], 4
          %s217 = int_to_ptr.vmem [resolvable:$true] %s216
          %222 = dma.hbm_to_vmem [thread:$0]  %s3, 1024, %s217, [#allocation11], 64, 64, 4
        $region24: #{tpu_custom_call.1} parent=11 // pred_fallthru
          _
        // Predicated region
        $region25: #{tpu_custom_call.1} parent=11 // pred_check
          %p223 = pneg %p141
        $region26: #{tpu_custom_call.1} parent=11 // pred_check_branch
          %225 = sbr.rel (%p223) target = $region28
        $region27: #{tpu_custom_call.1} parent=11 // pred_region
          _
        $region28: #{tpu_custom_call.1} parent=11 // pred_fallthru
          _
      $region12: #{tpu_custom_call.1} parent=5 // pred_fallthru
        _
      %p226 = scmp.lt.s32.totalorder %s19, 2
      // Predicated region
      $region29: #{tpu_custom_call.1} parent=5 // pred_check
        %p227 = pneg %p226
      $region30: #{tpu_custom_call.1} parent=5 // pred_check_branch
        %229 = sbr.rel (%p227) target = $region32
      $region31: #{tpu_custom_call.1} parent=5 // pred_region
        // Predicated region
        $region33: #{tpu_custom_call.1} parent=31 // pred_check
          %p230 = pneg %p51
        $region34: #{tpu_custom_call.1} parent=31 // pred_check_branch
          %232 = sbr.rel (%p230) target = $region36
        $region35: #{tpu_custom_call.1} parent=31 // pred_region
          %s233 = sand.u32 %s41, 1
          %s234 = scalar_lea.sflag [#allocation5], %s233
          %s235 = sand.u32 %s41, 1
          %s236 = smul.addr %s235, 128
          %s237 = scalar_lea.vmem [#allocation4], %s236
          %s239 = ssub.s32 2048, 2048
          %240 = vsyncadd %s234, %s239
          %s241 = smul.addr %s26, 32
          %s242 = smul.addr %s241, 64
          %s243 = scalar_lea.hbm %s0, %s242
          %s244 = sshll.u32 %s237, 4
          %s245 = int_to_ptr.vmem [resolvable:$true] %s244
          %250 = dma.hbm_to_vmem [thread:$0]  %s243, 2048, %s245, %s234, 64, 64, 4
        $region36: #{tpu_custom_call.1} parent=31 // pred_fallthru
          _
      $region32: #{tpu_custom_call.1} parent=5 // pred_fallthru
        _
      %p251 = scmp.le.s32.totalorder 1, %s19
      %p252 = scmp.lt.s32.totalorder %s19, 3
      %p253 = pnand %p251, %p252
      %p254 = pneg %p253
      // Predicated region
      $region37: #{tpu_custom_call.1} parent=5 // pred_check
        _
      $region38: #{tpu_custom_call.1} parent=5 // pred_check_branch
        %256 = sbr.rel (%p253) target = $region40
      $region39: #{tpu_custom_call.1} parent=5 // pred_region
        %s257 = ssub.s32 %s19, 1
        %s258 = sand.u32 %s44, 1
        %s259 = scalar_lea.sflag [#allocation5], %s258
        %s260 = sand.u32 %s44, 1
        %s261 = smul.addr %s260, 128
        %s262 = scalar_lea.vmem [#allocation4], %s261
        // Predicated region
        $region41: #{tpu_custom_call.1} parent=39 // pred_check
          %p263 = pneg %p57
        $region42: #{tpu_custom_call.1} parent=39 // pred_check_branch
          %265 = sbr.rel (%p263) target = $region44
        $region43: #{tpu_custom_call.1} parent=39 // pred_region
          %266 = dma.done %s259, 2048
        $region44: #{tpu_custom_call.1} parent=39 // pred_fallthru
          _
        // Predicated region
        $region45: #{tpu_custom_call.1} parent=39 // pred_check
          %p267 = pneg %p78
        $region46: #{tpu_custom_call.1} parent=39 // pred_check_branch
          %269 = sbr.rel (%p267) target = $region48
        $region47: #{tpu_custom_call.1} parent=39 // pred_region
          %270 = dma.done [#allocation8], 1024
        $region48: #{tpu_custom_call.1} parent=39 // pred_fallthru
          _
        // Predicated region
        $region49: #{tpu_custom_call.1} parent=39 // pred_check
          %p271 = pneg %p99
        $region50: #{tpu_custom_call.1} parent=39 // pred_check_branch
          %273 = sbr.rel (%p271) target = $region52
        $region51: #{tpu_custom_call.1} parent=39 // pred_region
          %274 = dma.done [#allocation8], 2048
        $region52: #{tpu_custom_call.1} parent=39 // pred_fallthru
          _
        // Predicated region
        $region53: #{tpu_custom_call.1} parent=39 // pred_check
          %p275 = pneg %p120
        $region54: #{tpu_custom_call.1} parent=39 // pred_check_branch
          %277 = sbr.rel (%p275) target = $region56
        $region55: #{tpu_custom_call.1} parent=39 // pred_region
          %278 = dma.done [#allocation11], 1024
        $region56: #{tpu_custom_call.1} parent=39 // pred_fallthru
          _
        %s279 = sand.u32 %s44, 1
        %s280 = scalar_lea.sflag [#allocation5], %s279
        %s281 = sand.u32 %s44, 1
        %s282 = smul.addr %s281, 128
        %s283 = scalar_lea.vmem [#allocation4], %s282
        %p284 = pneg %p57
        %p285 = pneg %p54
        %p286 = pneg %p78
        %p287 = pneg %p75
        %p288 = pneg %p99
        %p289 = pneg %p96
        %p290 = pneg %p120
        %p291 = pneg %p117
        %p292 = pneg %p141
        %p293 = pneg %p138
        %p294 = pneg %p169
        %p295 = pneg %p166
        %s296 = sand.u32 %s156, 1
        %s297 = scalar_lea.sflag [#allocation6], %s296
        %s298 = sand.u32 %s156, 1
        %s299 = smul.addr %s298, 256
        %s300 = scalar_lea.vmem [#allocation12], %s299
        %s301 = smul.u32 32, %s29
        %p303 = scmp.eq.s32.totalorder %s29, 0
        // Predicated region
        $region57: #{tpu_custom_call.1} parent=39 // pred_check
          %p304 = pneg %p303
        $region58: #{tpu_custom_call.1} parent=39 // pred_check_branch
          %306 = sbr.rel (%p304) target = $region60
        $region59: #{tpu_custom_call.1} parent=39 // pred_region
          %v307 = vld [vmem:[%s262] sm:$0xf]
          %v308 = vld [vmem:[%s262 + $0x4] sm:$0xf]
          %v309 = vld [vmem:[%s262 + $0x8] sm:$0xf]
          %v310 = vld [vmem:[%s262 + $0xc] sm:$0xf]
          %v311 = vld [vmem:[%s262 + $0x10] sm:$0xf]
          %v312 = vld [vmem:[%s262 + $0x14] sm:$0xf]
          %v313 = vld [vmem:[%s262 + $0x18] sm:$0xf]
          %v314 = vld [vmem:[%s262 + $0x1c] sm:$0xf]
          %v315 = vld [vmem:[%s262 + $0x20] sm:$0xf]
          %v316 = vld [vmem:[%s262 + $0x24] sm:$0xf]
          %v317 = vld [vmem:[%s262 + $0x28] sm:$0xf]
          %v318 = vld [vmem:[%s262 + $0x2c] sm:$0xf]
          %v319 = vld [vmem:[%s262 + $0x30] sm:$0xf]
          %v320 = vld [vmem:[%s262 + $0x34] sm:$0xf]
          %v321 = vld [vmem:[%s262 + $0x38] sm:$0xf]
          %v322 = vld [vmem:[%s262 + $0x3c] sm:$0xf]
          %v323 = vld [vmem:[%s262 + $0x40] sm:$0xf]
          %v324 = vld [vmem:[%s262 + $0x44] sm:$0xf]
          %v325 = vld [vmem:[%s262 + $0x48] sm:$0xf]
          %v326 = vld [vmem:[%s262 + $0x4c] sm:$0xf]
          %v327 = vld [vmem:[%s262 + $0x50] sm:$0xf]
          %v328 = vld [vmem:[%s262 + $0x54] sm:$0xf]
          %v329 = vld [vmem:[%s262 + $0x58] sm:$0xf]
          %v330 = vld [vmem:[%s262 + $0x5c] sm:$0xf]
          %v331 = vld [vmem:[%s262 + $0x60] sm:$0xf]
          %v332 = vld [vmem:[%s262 + $0x64] sm:$0xf]
          %v333 = vld [vmem:[%s262 + $0x68] sm:$0xf]
          %v334 = vld [vmem:[%s262 + $0x6c] sm:$0xf]
          %v335 = vld [vmem:[%s262 + $0x70] sm:$0xf]
          %v336 = vld [vmem:[%s262 + $0x74] sm:$0xf]
          %v337 = vld [vmem:[%s262 + $0x78] sm:$0xf]
          %v338 = vld [vmem:[%s262 + $0x7c] sm:$0xf]
          %v339 = vld [vmem:[#allocation9] sm:$0xff]
          %v340 = vld [vmem:[#allocation9 + $0x8] sm:$0xff]
          %v341 = vld [vmem:[#allocation9 + $0x10] sm:$0xff]
          %v342 = vld [vmem:[#allocation9 + $0x18] sm:$0xff]
          %v343 = vld [vmem:[#allocation9 + $0x20] sm:$0xff]
          %v344 = vld [vmem:[#allocation9 + $0x28] sm:$0xff]
          %v345 = vld [vmem:[#allocation9 + $0x30] sm:$0xff]
          %v346 = vld [vmem:[#allocation9 + $0x38] sm:$0xff]
          %v347 = vld [vmem:[#allocation9 + $0x40] sm:$0xff]
          %v348 = vld [vmem:[#allocation9 + $0x48] sm:$0xff]
          %v349 = vld [vmem:[#allocation9 + $0x50] sm:$0xff]
          %v350 = vld [vmem:[#allocation9 + $0x58] sm:$0xff]
          %v351 = vld [vmem:[#allocation9 + $0x60] sm:$0xff]
          %v352 = vld [vmem:[#allocation9 + $0x68] sm:$0xff]
          %v353 = vld [vmem:[#allocation9 + $0x70] sm:$0xff]
          %v354 = vld [vmem:[#allocation9 + $0x78] sm:$0xff]
          %v387 = vunpack.c.l.b16 %v307
          %v388 = vunpack.c.l.b16 %v308
          %v389 = vunpack.c.l.b16 %v309
          %v390 = vunpack.c.l.b16 %v310
          %v391 = vunpack.c.l.b16 %v311
          %v392 = vunpack.c.l.b16 %v312
          %v393 = vunpack.c.l.b16 %v313
          %v394 = vunpack.c.l.b16 %v314
          %v395 = vunpack.c.l.b16 %v315
          %v396 = vunpack.c.l.b16 %v316
          %v397 = vunpack.c.l.b16 %v317
          %v398 = vunpack.c.l.b16 %v318
          %v399 = vunpack.c.l.b16 %v319
          %v400 = vunpack.c.l.b16 %v320
          %v401 = vunpack.c.l.b16 %v321
          %v402 = vunpack.c.l.b16 %v322
          %v403 = vunpack.c.l.b16 %v323
          %v404 = vunpack.c.l.b16 %v324
          %v405 = vunpack.c.l.b16 %v325
          %v406 = vunpack.c.l.b16 %v326
          %v407 = vunpack.c.l.b16 %v327
          %v408 = vunpack.c.l.b16 %v328
          %v409 = vunpack.c.l.b16 %v329
          %v410 = vunpack.c.l.b16 %v330
          %v411 = vunpack.c.l.b16 %v331
          %v412 = vunpack.c.l.b16 %v332
          %v413 = vunpack.c.l.b16 %v333
          %v414 = vunpack.c.l.b16 %v334
          %v415 = vunpack.c.l.b16 %v335
          %v416 = vunpack.c.l.b16 %v336
          %v417 = vunpack.c.l.b16 %v337
          %v418 = vunpack.c.l.b16 %v338
          %v419 = vpack.c.b16 %v388, %v387
          %v420 = vpack.c.b16 %v390, %v389
          %v421 = vpack.c.b16 %v392, %v391
          %v422 = vpack.c.b16 %v394, %v393
          %v423 = vpack.c.b16 %v396, %v395
          %v424 = vpack.c.b16 %v398, %v397
          %v425 = vpack.c.b16 %v400, %v399
          %v426 = vpack.c.b16 %v402, %v401
          %v427 = vpack.c.b16 %v404, %v403
          %v428 = vpack.c.b16 %v406, %v405
          %v429 = vpack.c.b16 %v408, %v407
          %v430 = vpack.c.b16 %v410, %v409
          %v431 = vpack.c.b16 %v412, %v411
          %v432 = vpack.c.b16 %v414, %v413
          %v433 = vpack.c.b16 %v416, %v415
          %v434 = vpack.c.b16 %v418, %v417
          %v467 = vunpack.c.l.b16 %v339
          %v468 = vunpack.c.h.b16 %v339
          %v469 = vunpack.c.l.b16 %v340
          %v470 = vunpack.c.h.b16 %v340
          %v471 = vunpack.c.l.b16 %v341
          %v472 = vunpack.c.h.b16 %v341
          %v473 = vunpack.c.l.b16 %v342
          %v474 = vunpack.c.h.b16 %v342
          %v475 = vunpack.c.l.b16 %v343
          %v476 = vunpack.c.h.b16 %v343
          %v477 = vunpack.c.l.b16 %v344
          %v478 = vunpack.c.h.b16 %v344
          %v479 = vunpack.c.l.b16 %v345
          %v480 = vunpack.c.h.b16 %v345
          %v481 = vunpack.c.l.b16 %v346
          %v482 = vunpack.c.h.b16 %v346
          %v483 = vunpack.c.l.b16 %v347
          %v484 = vunpack.c.h.b16 %v347
          %v485 = vunpack.c.l.b16 %v348
          %v486 = vunpack.c.h.b16 %v348
          %v487 = vunpack.c.l.b16 %v349
          %v488 = vunpack.c.h.b16 %v349
          %v489 = vunpack.c.l.b16 %v350
          %v490 = vunpack.c.h.b16 %v350
          %v491 = vunpack.c.l.b16 %v351
          %v492 = vunpack.c.h.b16 %v351
          %v493 = vunpack.c.l.b16 %v352
          %v494 = vunpack.c.h.b16 %v352
          %v495 = vunpack.c.l.b16 %v353
          %v496 = vunpack.c.h.b16 %v353
          %v497 = vunpack.c.l.b16 %v354
          %v498 = vunpack.c.h.b16 %v354
          %v499 = vpack.c.b16 %v469, %v467
          %v500 = vpack.c.b16 %v470, %v468
          %v501 = vpack.c.b16 %v473, %v471
          %v502 = vpack.c.b16 %v474, %v472
          %v503 = vpack.c.b16 %v477, %v475
          %v504 = vpack.c.b16 %v478, %v476
          %v505 = vpack.c.b16 %v481, %v479
          %v506 = vpack.c.b16 %v482, %v480
          %v507 = vpack.c.b16 %v485, %v483
          %v508 = vpack.c.b16 %v486, %v484
          %v509 = vpack.c.b16 %v489, %v487
          %v510 = vpack.c.b16 %v490, %v488
          %v511 = vpack.c.b16 %v493, %v491
          %v512 = vpack.c.b16 %v494, %v492
          %v513 = vpack.c.b16 %v497, %v495
          %v514 = vpack.c.b16 %v498, %v496
          %531 = vmatprep.subr.bf16.mxu0 %v514
          %532 = vmatpush1.bf16.msra.mxu0 %v513
          %533 = vmatprep.subr.bf16.mxu0 %v512
          %534 = vmatpush1.bf16.msra.mxu0 %v511
          %535 = vmatprep.subr.bf16.mxu0 %v510
          %536 = vmatpush1.bf16.msra.mxu0 %v509
          %537 = vmatprep.subr.bf16.mxu0 %v508
          %538 = vmatpush1.bf16.msra.mxu0 %v507
          %539 = vmatprep.subr.bf16.mxu0 %v506
          %540 = vmatpush1.bf16.msra.mxu0 %v505
          %541 = vmatprep.subr.bf16.mxu0 %v504
          %542 = vmatpush1.bf16.msra.mxu0 %v503
          %543 = vmatprep.subr.bf16.mxu0 %v502
          %544 = vmatpush1.bf16.msra.mxu0 %v501
          %545 = vmatprep.subr.bf16.mxu0 %v500
          %546 = vmatpush1.bf16.msra.mxu0 %v499
          %547 = vmatprep.subr.bf16.mxu0 0
          %548 = vmatpush2.bf16.msra.mxu0 0
          %549 = vmatprep.subr.bf16.mxu0 0
          %550 = vmatpush2.bf16.msra.mxu0 0
          %551 = vmatprep.subr.bf16.mxu0 0
          %552 = vmatpush2.bf16.msra.mxu0 0
          %553 = vmatprep.subr.bf16.mxu0 0
          %554 = vmatpush2.bf16.msra.mxu0 0
          %555 = vmatprep.subr.bf16.mxu0 0
          %556 = vmatpush2.bf16.msra.mxu0 0
          %557 = vmatprep.subr.bf16.mxu0 0
          %558 = vmatpush2.bf16.msra.mxu0 0
          %559 = vmatprep.subr.bf16.mxu0 0
          %560 = vmatpush2.bf16.msra.mxu0 0
          %561 = vmatprep.subr.bf16.mxu0 0
          %562 = vmatpush2.bf16.msra.mxu0 0
          %563 = vmatprep.mubr.bf16.mxu0 0
          %564 = vmatmul.mubr.bf16.gmra.mxu0 %v419
          %v565 = vpop.f32.mrf.mxu0
          %v566 = vadd.f32 0.0, %v565
          %v567 = vpop.f32.mrf.mxu0
          %v568 = vadd.f32 0.0, %v567
          %v569 = vpop.f32.mrf.mxu0
          %v570 = vadd.f32 0.0, %v569
          %v571 = vpop.f32.mrf.mxu0
          %v572 = vadd.f32 0.0, %v571
          %573 = vmatprep.mubr.bf16.mxu0 0
          %574 = vmatmul.mubr.bf16.gmra.mxu0 %v420
          %v575 = vpop.f32.mrf.mxu0
          %v576 = vadd.f32 0.0, %v575
          %v577 = vpop.f32.mrf.mxu0
          %v578 = vadd.f32 0.0, %v577
          %v579 = vpop.f32.mrf.mxu0
          %v580 = vadd.f32 0.0, %v579
          %v581 = vpop.f32.mrf.mxu0
          %v582 = vadd.f32 0.0, %v581
          %583 = vmatprep.mubr.bf16.mxu0 0
          %584 = vmatmul.mubr.bf16.gmra.mxu0 %v421
          %v585 = vpop.f32.mrf.mxu0
          %v586 = vadd.f32 0.0, %v585
          %v587 = vpop.f32.mrf.mxu0
          %v588 = vadd.f32 0.0, %v587
          %v589 = vpop.f32.mrf.mxu0
          %v590 = vadd.f32 0.0, %v589
          %v591 = vpop.f32.mrf.mxu0
          %v592 = vadd.f32 0.0, %v591
          %593 = vmatprep.mubr.bf16.mxu0 0
          %594 = vmatmul.mubr.bf16.gmra.mxu0 %v422
          %v595 = vpop.f32.mrf.mxu0
          %v596 = vadd.f32 0.0, %v595
          %v597 = vpop.f32.mrf.mxu0
          %v598 = vadd.f32 0.0, %v597
          %v599 = vpop.f32.mrf.mxu0
          %v600 = vadd.f32 0.0, %v599
          %v601 = vpop.f32.mrf.mxu0
          %v602 = vadd.f32 0.0, %v601
          %603 = vmatprep.mubr.bf16.mxu0 0
          %604 = vmatmul.mubr.bf16.gmra.mxu0 %v423
          %v605 = vpop.f32.mrf.mxu0
          %v606 = vadd.f32 0.0, %v605
          %v607 = vpop.f32.mrf.mxu0
          %v608 = vadd.f32 0.0, %v607
          %v609 = vpop.f32.mrf.mxu0
          %v610 = vadd.f32 0.0, %v609
          %v611 = vpop.f32.mrf.mxu0
          %v612 = vadd.f32 0.0, %v611
          %613 = vmatprep.mubr.bf16.mxu0 0
          %614 = vmatmul.mubr.bf16.gmra.mxu0 %v424
          %v615 = vpop.f32.mrf.mxu0
          %v616 = vadd.f32 0.0, %v615
          %v617 = vpop.f32.mrf.mxu0
          %v618 = vadd.f32 0.0, %v617
          %v619 = vpop.f32.mrf.mxu0
          %v620 = vadd.f32 0.0, %v619
          %v621 = vpop.f32.mrf.mxu0
          %v622 = vadd.f32 0.0, %v621
          %623 = vmatprep.mubr.bf16.mxu0 0
          %624 = vmatmul.mubr.bf16.gmra.mxu0 %v425
          %v625 = vpop.f32.mrf.mxu0
          %v626 = vadd.f32 0.0, %v625
          %v627 = vpop.f32.mrf.mxu0
          %v628 = vadd.f32 0.0, %v627
          %v629 = vpop.f32.mrf.mxu0
          %v630 = vadd.f32 0.0, %v629
          %v631 = vpop.f32.mrf.mxu0
          %v632 = vadd.f32 0.0, %v631
          %633 = vmatprep.mubr.bf16.mxu0 0
          %634 = vmatmul.mubr.bf16.gmra.mxu0 %v426
          %v635 = vpop.f32.mrf.mxu0
          %v636 = vadd.f32 0.0, %v635
          %v637 = vpop.f32.mrf.mxu0
          %v638 = vadd.f32 0.0, %v637
          %v639 = vpop.f32.mrf.mxu0
          %v640 = vadd.f32 0.0, %v639
          %v641 = vpop.f32.mrf.mxu0
          %v642 = vadd.f32 0.0, %v641
          %643 = vmatprep.mubr.bf16.mxu0 0
          %644 = vmatmul.mubr.bf16.gmra.mxu0 %v427
          %v645 = vpop.f32.mrf.mxu0
          %v646 = vadd.f32 0.0, %v645
          %v647 = vpop.f32.mrf.mxu0
          %v648 = vadd.f32 0.0, %v647
          %v649 = vpop.f32.mrf.mxu0
          %v650 = vadd.f32 0.0, %v649
          %v651 = vpop.f32.mrf.mxu0
          %v652 = vadd.f32 0.0, %v651
          %653 = vmatprep.mubr.bf16.mxu0 0
          %654 = vmatmul.mubr.bf16.gmra.mxu0 %v428
          %v655 = vpop.f32.mrf.mxu0
          %v656 = vadd.f32 0.0, %v655
          %v657 = vpop.f32.mrf.mxu0
          %v658 = vadd.f32 0.0, %v657
          %v659 = vpop.f32.mrf.mxu0
          %v660 = vadd.f32 0.0, %v659
          %v661 = vpop.f32.mrf.mxu0
          %v662 = vadd.f32 0.0, %v661
          %663 = vmatprep.mubr.bf16.mxu0 0
          %664 = vmatmul.mubr.bf16.gmra.mxu0 %v429
          %v665 = vpop.f32.mrf.mxu0
          %v666 = vadd.f32 0.0, %v665
          %v667 = vpop.f32.mrf.mxu0
          %v668 = vadd.f32 0.0, %v667
          %v669 = vpop.f32.mrf.mxu0
          %v670 = vadd.f32 0.0, %v669
          %v671 = vpop.f32.mrf.mxu0
          %v672 = vadd.f32 0.0, %v671
          %673 = vmatprep.mubr.bf16.mxu0 0
          %674 = vmatmul.mubr.bf16.gmra.mxu0 %v430
          %v675 = vpop.f32.mrf.mxu0
          %v676 = vadd.f32 0.0, %v675
          %v677 = vpop.f32.mrf.mxu0
          %v678 = vadd.f32 0.0, %v677
          %v679 = vpop.f32.mrf.mxu0
          %v680 = vadd.f32 0.0, %v679
          %v681 = vpop.f32.mrf.mxu0
          %v682 = vadd.f32 0.0, %v681
          %683 = vmatprep.mubr.bf16.mxu0 0
          %684 = vmatmul.mubr.bf16.gmra.mxu0 %v431
          %v685 = vpop.f32.mrf.mxu0
          %v686 = vadd.f32 0.0, %v685
          %v687 = vpop.f32.mrf.mxu0
          %v688 = vadd.f32 0.0, %v687
          %v689 = vpop.f32.mrf.mxu0
          %v690 = vadd.f32 0.0, %v689
          %v691 = vpop.f32.mrf.mxu0
          %v692 = vadd.f32 0.0, %v691
          %693 = vmatprep.mubr.bf16.mxu0 0
          %694 = vmatmul.mubr.bf16.gmra.mxu0 %v432
          %v695 = vpop.f32.mrf.mxu0
          %v696 = vadd.f32 0.0, %v695
          %v697 = vpop.f32.mrf.mxu0
          %v698 = vadd.f32 0.0, %v697
          %v699 = vpop.f32.mrf.mxu0
          %v700 = vadd.f32 0.0, %v699
          %v701 = vpop.f32.mrf.mxu0
          %v702 = vadd.f32 0.0, %v701
          %703 = vmatprep.mubr.bf16.mxu0 0
          %704 = vmatmul.mubr.bf16.gmra.mxu0 %v433
          %v705 = vpop.f32.mrf.mxu0
          %v706 = vadd.f32 0.0, %v705
          %v707 = vpop.f32.mrf.mxu0
          %v708 = vadd.f32 0.0, %v707
          %v709 = vpop.f32.mrf.mxu0
          %v710 = vadd.f32 0.0, %v709
          %v711 = vpop.f32.mrf.mxu0
          %v712 = vadd.f32 0.0, %v711
          %713 = vmatprep.mubr.bf16.mxu0 0
          %714 = vmatmul.mubr.bf16.gmra.mxu0 %v434
          %v715 = vpop.f32.mrf.mxu0
          %v716 = vadd.f32 0.0, %v715
          %v717 = vpop.f32.mrf.mxu0
          %v718 = vadd.f32 0.0, %v717
          %v719 = vpop.f32.mrf.mxu0
          %v720 = vadd.f32 0.0, %v719
          %v721 = vpop.f32.mrf.mxu0
          %v722 = vadd.f32 0.0, %v721
          %723 = vdwg.mxu0
          %v724 = vpack.c.bf16 %v570, %v566
          %v725 = vpack.c.bf16 %v572, %v568
          %v726 = vpack.c.bf16 %v580, %v576
          %v727 = vpack.c.bf16 %v582, %v578
          %v728 = vpack.c.bf16 %v590, %v586
          %v729 = vpack.c.bf16 %v592, %v588
          %v730 = vpack.c.bf16 %v600, %v596
          %v731 = vpack.c.bf16 %v602, %v598
          %v732 = vpack.c.bf16 %v610, %v606
          %v733 = vpack.c.bf16 %v612, %v608
          %v734 = vpack.c.bf16 %v620, %v616
          %v735 = vpack.c.bf16 %v622, %v618
          %v736 = vpack.c.bf16 %v630, %v626
          %v737 = vpack.c.bf16 %v632, %v628
          %v738 = vpack.c.bf16 %v640, %v636
          %v739 = vpack.c.bf16 %v642, %v638
          %v740 = vpack.c.bf16 %v650, %v646
          %v741 = vpack.c.bf16 %v652, %v648
          %v742 = vpack.c.bf16 %v660, %v656
          %v743 = vpack.c.bf16 %v662, %v658
          %v744 = vpack.c.bf16 %v670, %v666
          %v745 = vpack.c.bf16 %v672, %v668
          %v746 = vpack.c.bf16 %v680, %v676
          %v747 = vpack.c.bf16 %v682, %v678
          %v748 = vpack.c.bf16 %v690, %v686
          %v749 = vpack.c.bf16 %v692, %v688
          %v750 = vpack.c.bf16 %v700, %v696
          %v751 = vpack.c.bf16 %v702, %v698
          %v752 = vpack.c.bf16 %v710, %v706
          %v753 = vpack.c.bf16 %v712, %v708
          %v754 = vpack.c.bf16 %v720, %v716
          %v755 = vpack.c.bf16 %v722, %v718
          %v788 = vunpack.c.l.b16 %v724
          %v789 = vunpack.c.l.b16 %v725
          %v790 = vunpack.c.h.b16 %v724
          %v791 = vunpack.c.h.b16 %v725
          %v792 = vunpack.c.l.b16 %v726
          %v793 = vunpack.c.l.b16 %v727
          %v794 = vunpack.c.h.b16 %v726
          %v795 = vunpack.c.h.b16 %v727
          %v796 = vunpack.c.l.b16 %v728
          %v797 = vunpack.c.l.b16 %v729
          %v798 = vunpack.c.h.b16 %v728
          %v799 = vunpack.c.h.b16 %v729
          %v800 = vunpack.c.l.b16 %v730
          %v801 = vunpack.c.l.b16 %v731
          %v802 = vunpack.c.h.b16 %v730
          %v803 = vunpack.c.h.b16 %v731
          %v804 = vunpack.c.l.b16 %v732
          %v805 = vunpack.c.l.b16 %v733
          %v806 = vunpack.c.h.b16 %v732
          %v807 = vunpack.c.h.b16 %v733
          %v808 = vunpack.c.l.b16 %v734
          %v809 = vunpack.c.l.b16 %v735
          %v810 = vunpack.c.h.b16 %v734
          %v811 = vunpack.c.h.b16 %v735
          %v812 = vunpack.c.l.b16 %v736
          %v813 = vunpack.c.l.b16 %v737
          %v814 = vunpack.c.h.b16 %v736
          %v815 = vunpack.c.h.b16 %v737
          %v816 = vunpack.c.l.b16 %v738
          %v817 = vunpack.c.l.b16 %v739
          %v818 = vunpack.c.h.b16 %v738
          %v819 = vunpack.c.h.b16 %v739
          %v820 = vunpack.c.l.b16 %v740
          %v821 = vunpack.c.l.b16 %v741
          %v822 = vunpack.c.h.b16 %v740
          %v823 = vunpack.c.h.b16 %v741
          %v824 = vunpack.c.l.b16 %v742
          %v825 = vunpack.c.l.b16 %v743
          %v826 = vunpack.c.h.b16 %v742
          %v827 = vunpack.c.h.b16 %v743
          %v828 = vunpack.c.l.b16 %v744
          %v829 = vunpack.c.l.b16 %v745
          %v830 = vunpack.c.h.b16 %v744
          %v831 = vunpack.c.h.b16 %v745
          %v832 = vunpack.c.l.b16 %v746
          %v833 = vunpack.c.l.b16 %v747
          %v834 = vunpack.c.h.b16 %v746
          %v835 = vunpack.c.h.b16 %v747
          %v836 = vunpack.c.l.b16 %v748
          %v837 = vunpack.c.l.b16 %v749
          %v838 = vunpack.c.h.b16 %v748
          %v839 = vunpack.c.h.b16 %v749
          %v840 = vunpack.c.l.b16 %v750
          %v841 = vunpack.c.l.b16 %v751
          %v842 = vunpack.c.h.b16 %v750
          %v843 = vunpack.c.h.b16 %v751
          %v844 = vunpack.c.l.b16 %v752
          %v845 = vunpack.c.l.b16 %v753
          %v846 = vunpack.c.h.b16 %v752
          %v847 = vunpack.c.h.b16 %v753
          %v848 = vunpack.c.l.b16 %v754
          %v849 = vunpack.c.l.b16 %v755
          %v850 = vunpack.c.h.b16 %v754
          %v851 = vunpack.c.h.b16 %v755
          %v852 = vpack.c.b16 %v789, %v788
          %v853 = vpack.c.b16 %v791, %v790
          %v854 = vpack.c.b16 %v793, %v792
          %v855 = vpack.c.b16 %v795, %v794
          %v856 = vpack.c.b16 %v797, %v796
          %v857 = vpack.c.b16 %v799, %v798
          %v858 = vpack.c.b16 %v801, %v800
          %v859 = vpack.c.b16 %v803, %v802
          %v860 = vpack.c.b16 %v805, %v804
          %v861 = vpack.c.b16 %v807, %v806
          %v862 = vpack.c.b16 %v809, %v808
          %v863 = vpack.c.b16 %v811, %v810
          %v864 = vpack.c.b16 %v813, %v812
          %v865 = vpack.c.b16 %v815, %v814
          %v866 = vpack.c.b16 %v817, %v816
          %v867 = vpack.c.b16 %v819, %v818
          %v868 = vpack.c.b16 %v821, %v820
          %v869 = vpack.c.b16 %v823, %v822
          %v870 = vpack.c.b16 %v825, %v824
          %v871 = vpack.c.b16 %v827, %v826
          %v872 = vpack.c.b16 %v829, %v828
          %v873 = vpack.c.b16 %v831, %v830
          %v874 = vpack.c.b16 %v833, %v832
          %v875 = vpack.c.b16 %v835, %v834
          %v876 = vpack.c.b16 %v837, %v836
          %v877 = vpack.c.b16 %v839, %v838
          %v878 = vpack.c.b16 %v841, %v840
          %v879 = vpack.c.b16 %v843, %v842
          %v880 = vpack.c.b16 %v845, %v844
          %v881 = vpack.c.b16 %v847, %v846
          %v882 = vpack.c.b16 %v849, %v848
          %v883 = vpack.c.b16 %v851, %v850
          %916 = vst [vmem:[#allocation2] sm:$0xff] %v852
          %917 = vst [vmem:[#allocation2 + $0x8] sm:$0xff] %v853
          %918 = vst [vmem:[#allocation2 + $0x10] sm:$0xff] %v854
          %919 = vst [vmem:[#allocation2 + $0x18] sm:$0xff] %v855
          %920 = vst [vmem:[#allocation2 + $0x20] sm:$0xff] %v856
          %921 = vst [vmem:[#allocation2 + $0x28] sm:$0xff] %v857
          %922 = vst [vmem:[#allocation2 + $0x30] sm:$0xff] %v858
          %923 = vst [vmem:[#allocation2 + $0x38] sm:$0xff] %v859
          %924 = vst [vmem:[#allocation2 + $0x40] sm:$0xff] %v860
          %925 = vst [vmem:[#allocation2 + $0x48] sm:$0xff] %v861
          %926 = vst [vmem:[#allocation2 + $0x50] sm:$0xff] %v862
          %927 = vst [vmem:[#allocation2 + $0x58] sm:$0xff] %v863
          %928 = vst [vmem:[#allocation2 + $0x60] sm:$0xff] %v864
          %929 = vst [vmem:[#allocation2 + $0x68] sm:$0xff] %v865
          %930 = vst [vmem:[#allocation2 + $0x70] sm:$0xff] %v866
          %931 = vst [vmem:[#allocation2 + $0x78] sm:$0xff] %v867
          %932 = vst [vmem:[#allocation2 + $0x80] sm:$0xff] %v868
          %933 = vst [vmem:[#allocation2 + $0x88] sm:$0xff] %v869
          %934 = vst [vmem:[#allocation2 + $0x90] sm:$0xff] %v870
          %935 = vst [vmem:[#allocation2 + $0x98] sm:$0xff] %v871
          %936 = vst [vmem:[#allocation2 + $0xa0] sm:$0xff] %v872
          %937 = vst [vmem:[#allocation2 + $0xa8] sm:$0xff] %v873
          %938 = vst [vmem:[#allocation2 + $0xb0] sm:$0xff] %v874
          %939 = vst [vmem:[#allocation2 + $0xb8] sm:$0xff] %v875
          %940 = vst [vmem:[#allocation2 + $0xc0] sm:$0xff] %v876
          %941 = vst [vmem:[#allocation2 + $0xc8] sm:$0xff] %v877
          %942 = vst [vmem:[#allocation2 + $0xd0] sm:$0xff] %v878
          %943 = vst [vmem:[#allocation2 + $0xd8] sm:$0xff] %v879
          %944 = vst [vmem:[#allocation2 + $0xe0] sm:$0xff] %v880
          %945 = vst [vmem:[#allocation2 + $0xe8] sm:$0xff] %v881
          %946 = vst [vmem:[#allocation2 + $0xf0] sm:$0xff] %v882
          %947 = vst [vmem:[#allocation2 + $0xf8] sm:$0xff] %v883
        $region60: #{tpu_custom_call.1} parent=39 // pred_fallthru
          _
        %s948 = smul.u32 %s29, 256
        %s949 = sshra.s32 %s948, 3
        %s950 = sand.u32 %s948, 7
        %s951 = smul.addr %s949, 4
        %s952 = scalar_lea.vmem %s262, %s951 [#allocation4]
        %v953 = vld [vmem:[%s952] sm:$0xf]
        %v954 = vld [vmem:[%s952 + $0x4] sm:$0xf]
        %v955 = vld [vmem:[%s952 + $0x8] sm:$0xf]
        %v956 = vld [vmem:[%s952 + $0xc] sm:$0xf]
        %v957 = vld [vmem:[%s952 + $0x10] sm:$0xf]
        %v958 = vld [vmem:[%s952 + $0x14] sm:$0xf]
        %v959 = vld [vmem:[%s952 + $0x18] sm:$0xf]
        %v960 = vld [vmem:[%s952 + $0x1c] sm:$0xf]
        %v961 = vld [vmem:[%s952 + $0x20] sm:$0xf]
        %v962 = vld [vmem:[%s952 + $0x24] sm:$0xf]
        %v963 = vld [vmem:[%s952 + $0x28] sm:$0xf]
        %v964 = vld [vmem:[%s952 + $0x2c] sm:$0xf]
        %v965 = vld [vmem:[%s952 + $0x30] sm:$0xf]
        %v966 = vld [vmem:[%s952 + $0x34] sm:$0xf]
        %v967 = vld [vmem:[%s952 + $0x38] sm:$0xf]
        %v968 = vld [vmem:[%s952 + $0x3c] sm:$0xf]
        %v969 = vld [vmem:[%s952 + $0x40] sm:$0xf]
        %v970 = vld [vmem:[%s952 + $0x44] sm:$0xf]
        %v971 = vld [vmem:[%s952 + $0x48] sm:$0xf]
        %v972 = vld [vmem:[%s952 + $0x4c] sm:$0xf]
        %v973 = vld [vmem:[%s952 + $0x50] sm:$0xf]
        %v974 = vld [vmem:[%s952 + $0x54] sm:$0xf]
        %v975 = vld [vmem:[%s952 + $0x58] sm:$0xf]
        %v976 = vld [vmem:[%s952 + $0x5c] sm:$0xf]
        %v977 = vld [vmem:[%s952 + $0x60] sm:$0xf]
        %v978 = vld [vmem:[%s952 + $0x64] sm:$0xf]
        %v979 = vld [vmem:[%s952 + $0x68] sm:$0xf]
        %v980 = vld [vmem:[%s952 + $0x6c] sm:$0xf]
        %v981 = vld [vmem:[%s952 + $0x70] sm:$0xf]
        %v982 = vld [vmem:[%s952 + $0x74] sm:$0xf]
        %v983 = vld [vmem:[%s952 + $0x78] sm:$0xf]
        %v984 = vld [vmem:[%s952 + $0x7c] sm:$0xf]
        %v985 = vld [vmem:[#allocation7] sm:$0xf]
        %v986 = vld [vmem:[#allocation7 + $0x4] sm:$0xf]
        %v987 = vld [vmem:[#allocation7 + $0x8] sm:$0xf]
        %v988 = vld [vmem:[#allocation7 + $0xc] sm:$0xf]
        %v989 = vld [vmem:[#allocation7 + $0x10] sm:$0xf]
        %v990 = vld [vmem:[#allocation7 + $0x14] sm:$0xf]
        %v991 = vld [vmem:[#allocation7 + $0x18] sm:$0xf]
        %v992 = vld [vmem:[#allocation7 + $0x1c] sm:$0xf]
        %v993 = vld [vmem:[#allocation7 + $0x20] sm:$0xf]
        %v994 = vld [vmem:[#allocation7 + $0x24] sm:$0xf]
        %v995 = vld [vmem:[#allocation7 + $0x28] sm:$0xf]
        %v996 = vld [vmem:[#allocation7 + $0x2c] sm:$0xf]
        %v997 = vld [vmem:[#allocation7 + $0x30] sm:$0xf]
        %v998 = vld [vmem:[#allocation7 + $0x34] sm:$0xf]
        %v999 = vld [vmem:[#allocation7 + $0x38] sm:$0xf]
        %v1000 = vld [vmem:[#allocation7 + $0x3c] sm:$0xf]
        %v1033 = vunpack.c.l.b16 %v953
        %v1034 = vunpack.c.l.b16 %v954
        %v1035 = vunpack.c.l.b16 %v955
        %v1036 = vunpack.c.l.b16 %v956
        %v1037 = vunpack.c.l.b16 %v957
        %v1038 = vunpack.c.l.b16 %v958
        %v1039 = vunpack.c.l.b16 %v959
        %v1040 = vunpack.c.l.b16 %v960
        %v1041 = vunpack.c.l.b16 %v961
        %v1042 = vunpack.c.l.b16 %v962
        %v1043 = vunpack.c.l.b16 %v963
        %v1044 = vunpack.c.l.b16 %v964
        %v1045 = vunpack.c.l.b16 %v965
        %v1046 = vunpack.c.l.b16 %v966
        %v1047 = vunpack.c.l.b16 %v967
        %v1048 = vunpack.c.l.b16 %v968
        %v1049 = vunpack.c.l.b16 %v969
        %v1050 = vunpack.c.l.b16 %v970
        %v1051 = vunpack.c.l.b16 %v971
        %v1052 = vunpack.c.l.b16 %v972
        %v1053 = vunpack.c.l.b16 %v973
        %v1054 = vunpack.c.l.b16 %v974
        %v1055 = vunpack.c.l.b16 %v975
        %v1056 = vunpack.c.l.b16 %v976
        %v1057 = vunpack.c.l.b16 %v977
        %v1058 = vunpack.c.l.b16 %v978
        %v1059 = vunpack.c.l.b16 %v979
        %v1060 = vunpack.c.l.b16 %v980
        %v1061 = vunpack.c.l.b16 %v981
        %v1062 = vunpack.c.l.b16 %v982
        %v1063 = vunpack.c.l.b16 %v983
        %v1064 = vunpack.c.l.b16 %v984
        %v1065 = vpack.c.b16 %v1034, %v1033
        %v1066 = vpack.c.b16 %v1036, %v1035
        %v1067 = vpack.c.b16 %v1038, %v1037
        %v1068 = vpack.c.b16 %v1040, %v1039
        %v1069 = vpack.c.b16 %v1042, %v1041
        %v1070 = vpack.c.b16 %v1044, %v1043
        %v1071 = vpack.c.b16 %v1046, %v1045
        %v1072 = vpack.c.b16 %v1048, %v1047
        %v1073 = vpack.c.b16 %v1050, %v1049
        %v1074 = vpack.c.b16 %v1052, %v1051
        %v1075 = vpack.c.b16 %v1054, %v1053
        %v1076 = vpack.c.b16 %v1056, %v1055
        %v1077 = vpack.c.b16 %v1058, %v1057
        %v1078 = vpack.c.b16 %v1060, %v1059
        %v1079 = vpack.c.b16 %v1062, %v1061
        %v1080 = vpack.c.b16 %v1064, %v1063
        %v1113 = vunpack.c.l.b16 %v985
        %v1114 = vunpack.c.l.b16 %v986
        %v1115 = vunpack.c.l.b16 %v987
        %v1116 = vunpack.c.l.b16 %v988
        %v1117 = vunpack.c.l.b16 %v989
        %v1118 = vunpack.c.l.b16 %v990
        %v1119 = vunpack.c.l.b16 %v991
        %v1120 = vunpack.c.l.b16 %v992
        %v1121 = vunpack.c.l.b16 %v993
        %v1122 = vunpack.c.l.b16 %v994
        %v1123 = vunpack.c.l.b16 %v995
        %v1124 = vunpack.c.l.b16 %v996
        %v1125 = vunpack.c.l.b16 %v997
        %v1126 = vunpack.c.l.b16 %v998
        %v1127 = vunpack.c.l.b16 %v999
        %v1128 = vunpack.c.l.b16 %v1000
        %v1129 = vpack.c.b16 %v1114, %v1113
        %v1130 = vpack.c.b16 %v1116, %v1115
        %v1131 = vpack.c.b16 %v1118, %v1117
        %v1132 = vpack.c.b16 %v1120, %v1119
        %v1133 = vpack.c.b16 %v1122, %v1121
        %v1134 = vpack.c.b16 %v1124, %v1123
        %v1135 = vpack.c.b16 %v1126, %v1125
        %v1136 = vpack.c.b16 %v1128, %v1127
        %1145 = vmatprep.subr.bf16.mxu0 0
        %1146 = vmatpush1.bf16.msra.mxu0 %v1136
        %1147 = vmatprep.subr.bf16.mxu0 0
        %1148 = vmatpush1.bf16.msra.mxu0 %v1135
        %1149 = vmatprep.subr.bf16.mxu0 0
        %1150 = vmatpush1.bf16.msra.mxu0 %v1134
        %1151 = vmatprep.subr.bf16.mxu0 0
        %1152 = vmatpush1.bf16.msra.mxu0 %v1133
        %1153 = vmatprep.subr.bf16.mxu0 0
        %1154 = vmatpush1.bf16.msra.mxu0 %v1132
        %1155 = vmatprep.subr.bf16.mxu0 0
        %1156 = vmatpush1.bf16.msra.mxu0 %v1131
        %1157 = vmatprep.subr.bf16.mxu0 0
        %1158 = vmatpush1.bf16.msra.mxu0 %v1130
        %1159 = vmatprep.subr.bf16.mxu0 0
        %1160 = vmatpush1.bf16.msra.mxu0 %v1129
        %1161 = vmatprep.subr.bf16.mxu0 0
        %1162 = vmatpush2.bf16.msra.mxu0 0
        %1163 = vmatprep.subr.bf16.mxu0 0
        %1164 = vmatpush2.bf16.msra.mxu0 0
        %1165 = vmatprep.subr.bf16.mxu0 0
        %1166 = vmatpush2.bf16.msra.mxu0 0
        %1167 = vmatprep.subr.bf16.mxu0 0
        %1168 = vmatpush2.bf16.msra.mxu0 0
        %1169 = vmatprep.subr.bf16.mxu0 0
        %1170 = vmatpush2.bf16.msra.mxu0 0
        %1171 = vmatprep.subr.bf16.mxu0 0
        %1172 = vmatpush2.bf16.msra.mxu0 0
        %1173 = vmatprep.subr.bf16.mxu0 0
        %1174 = vmatpush2.bf16.msra.mxu0 0
        %1175 = vmatprep.subr.bf16.mxu0 0
        %1176 = vmatpush2.bf16.msra.mxu0 0
        %1177 = vmatprep.mubr.bf16.mxu0 0
        %1178 = vmatmul.mubr.bf16.gmra.mxu0 %v1065
        %v1179 = vpop.f32.mrf.mxu0
        %v1180 = vadd.f32 0.0, %v1179
        %v1181 = vpop.f32.mrf.mxu0
        %v1182 = vpop.f32.mrf.mxu0
        %v1183 = vadd.f32 0.0, %v1182
        %v1184 = vpop.f32.mrf.mxu0
        %1185 = vmatprep.mubr.bf16.mxu0 0
        %1186 = vmatmul.mubr.bf16.gmra.mxu0 %v1066
        %v1187 = vpop.f32.mrf.mxu0
        %v1188 = vadd.f32 0.0, %v1187
        %v1189 = vpop.f32.mrf.mxu0
        %v1190 = vpop.f32.mrf.mxu0
        %v1191 = vadd.f32 0.0, %v1190
        %v1192 = vpop.f32.mrf.mxu0
        %1193 = vmatprep.mubr.bf16.mxu0 0
        %1194 = vmatmul.mubr.bf16.gmra.mxu0 %v1067
        %v1195 = vpop.f32.mrf.mxu0
        %v1196 = vadd.f32 0.0, %v1195
        %v1197 = vpop.f32.mrf.mxu0
        %v1198 = vpop.f32.mrf.mxu0
        %v1199 = vadd.f32 0.0, %v1198
        %v1200 = vpop.f32.mrf.mxu0
        %1201 = vmatprep.mubr.bf16.mxu0 0
        %1202 = vmatmul.mubr.bf16.gmra.mxu0 %v1068
        %v1203 = vpop.f32.mrf.mxu0
        %v1204 = vadd.f32 0.0, %v1203
        %v1205 = vpop.f32.mrf.mxu0
        %v1206 = vpop.f32.mrf.mxu0
        %v1207 = vadd.f32 0.0, %v1206
        %v1208 = vpop.f32.mrf.mxu0
        %1209 = vmatprep.mubr.bf16.mxu0 0
        %1210 = vmatmul.mubr.bf16.gmra.mxu0 %v1069
        %v1211 = vpop.f32.mrf.mxu0
        %v1212 = vadd.f32 0.0, %v1211
        %v1213 = vpop.f32.mrf.mxu0
        %v1214 = vpop.f32.mrf.mxu0
        %v1215 = vadd.f32 0.0, %v1214
        %v1216 = vpop.f32.mrf.mxu0
        %1217 = vmatprep.mubr.bf16.mxu0 0
        %1218 = vmatmul.mubr.bf16.gmra.mxu0 %v1070
        %v1219 = vpop.f32.mrf.mxu0
        %v1220 = vadd.f32 0.0, %v1219
        %v1221 = vpop.f32.mrf.mxu0
        %v1222 = vpop.f32.mrf.mxu0
        %v1223 = vadd.f32 0.0, %v1222
        %v1224 = vpop.f32.mrf.mxu0
        %1225 = vmatprep.mubr.bf16.mxu0 0
        %1226 = vmatmul.mubr.bf16.gmra.mxu0 %v1071
        %v1227 = vpop.f32.mrf.mxu0
        %v1228 = vadd.f32 0.0, %v1227
        %v1229 = vpop.f32.mrf.mxu0
        %v1230 = vpop.f32.mrf.mxu0
        %v1231 = vadd.f32 0.0, %v1230
        %v1232 = vpop.f32.mrf.mxu0
        %1233 = vmatprep.mubr.bf16.mxu0 0
        %1234 = vmatmul.mubr.bf16.gmra.mxu0 %v1072
        %v1235 = vpop.f32.mrf.mxu0
        %v1236 = vadd.f32 0.0, %v1235
        %v1237 = vpop.f32.mrf.mxu0
        %v1238 = vpop.f32.mrf.mxu0
        %v1239 = vadd.f32 0.0, %v1238
        %v1240 = vpop.f32.mrf.mxu0
        %1241 = vmatprep.mubr.bf16.mxu0 0
        %1242 = vmatmul.mubr.bf16.gmra.mxu0 %v1073
        %v1243 = vpop.f32.mrf.mxu0
        %v1244 = vadd.f32 0.0, %v1243
        %v1245 = vpop.f32.mrf.mxu0
        %v1246 = vpop.f32.mrf.mxu0
        %v1247 = vadd.f32 0.0, %v1246
        %v1248 = vpop.f32.mrf.mxu0
        %1249 = vmatprep.mubr.bf16.mxu0 0
        %1250 = vmatmul.mubr.bf16.gmra.mxu0 %v1074
        %v1251 = vpop.f32.mrf.mxu0
        %v1252 = vadd.f32 0.0, %v1251
        %v1253 = vpop.f32.mrf.mxu0
        %v1254 = vpop.f32.mrf.mxu0
        %v1255 = vadd.f32 0.0, %v1254
        %v1256 = vpop.f32.mrf.mxu0
        %1257 = vmatprep.mubr.bf16.mxu0 0
        %1258 = vmatmul.mubr.bf16.gmra.mxu0 %v1075
        %v1259 = vpop.f32.mrf.mxu0
        %v1260 = vadd.f32 0.0, %v1259
        %v1261 = vpop.f32.mrf.mxu0
        %v1262 = vpop.f32.mrf.mxu0
        %v1263 = vadd.f32 0.0, %v1262
        %v1264 = vpop.f32.mrf.mxu0
        %1265 = vmatprep.mubr.bf16.mxu0 0
        %1266 = vmatmul.mubr.bf16.gmra.mxu0 %v1076
        %v1267 = vpop.f32.mrf.mxu0
        %v1268 = vadd.f32 0.0, %v1267
        %v1269 = vpop.f32.mrf.mxu0
        %v1270 = vpop.f32.mrf.mxu0
        %v1271 = vadd.f32 0.0, %v1270
        %v1272 = vpop.f32.mrf.mxu0
        %1273 = vmatprep.mubr.bf16.mxu0 0
        %1274 = vmatmul.mubr.bf16.gmra.mxu0 %v1077
        %v1275 = vpop.f32.mrf.mxu0
        %v1276 = vadd.f32 0.0, %v1275
        %v1277 = vpop.f32.mrf.mxu0
        %v1278 = vpop.f32.mrf.mxu0
        %v1279 = vadd.f32 0.0, %v1278
        %v1280 = vpop.f32.mrf.mxu0
        %1281 = vmatprep.mubr.bf16.mxu0 0
        %1282 = vmatmul.mubr.bf16.gmra.mxu0 %v1078
        %v1283 = vpop.f32.mrf.mxu0
        %v1284 = vadd.f32 0.0, %v1283
        %v1285 = vpop.f32.mrf.mxu0
        %v1286 = vpop.f32.mrf.mxu0
        %v1287 = vadd.f32 0.0, %v1286
        %v1288 = vpop.f32.mrf.mxu0
        %1289 = vmatprep.mubr.bf16.mxu0 0
        %1290 = vmatmul.mubr.bf16.gmra.mxu0 %v1079
        %v1291 = vpop.f32.mrf.mxu0
        %v1292 = vadd.f32 0.0, %v1291
        %v1293 = vpop.f32.mrf.mxu0
        %v1294 = vpop.f32.mrf.mxu0
        %v1295 = vadd.f32 0.0, %v1294
        %v1296 = vpop.f32.mrf.mxu0
        %1297 = vmatprep.mubr.bf16.mxu0 0
        %1298 = vmatmul.mubr.bf16.gmra.mxu0 %v1080
        %v1299 = vpop.f32.mrf.mxu0
        %v1300 = vadd.f32 0.0, %v1299
        %v1301 = vpop.f32.mrf.mxu0
        %v1302 = vpop.f32.mrf.mxu0
        %v1303 = vadd.f32 0.0, %v1302
        %v1304 = vpop.f32.mrf.mxu0
        %1305 = vdwg.mxu0
        %v1306 = vpack.c.bf16 %v1183, %v1180
        %v1307 = vpack.c.bf16 %v1191, %v1188
        %v1308 = vpack.c.bf16 %v1199, %v1196
        %v1309 = vpack.c.bf16 %v1207, %v1204
        %v1310 = vpack.c.bf16 %v1215, %v1212
        %v1311 = vpack.c.bf16 %v1223, %v1220
        %v1312 = vpack.c.bf16 %v1231, %v1228
        %v1313 = vpack.c.bf16 %v1239, %v1236
        %v1314 = vpack.c.bf16 %v1247, %v1244
        %v1315 = vpack.c.bf16 %v1255, %v1252
        %v1316 = vpack.c.bf16 %v1263, %v1260
        %v1317 = vpack.c.bf16 %v1271, %v1268
        %v1318 = vpack.c.bf16 %v1279, %v1276
        %v1319 = vpack.c.bf16 %v1287, %v1284
        %v1320 = vpack.c.bf16 %v1295, %v1292
        %v1321 = vpack.c.bf16 %v1303, %v1300
        %v1322 = vld [vmem:[#allocation2] sm:$0xff]
        %v1323 = vld [vmem:[#allocation2 + $0x8] sm:$0xff]
        %v1324 = vld [vmem:[#allocation2 + $0x10] sm:$0xff]
        %v1325 = vld [vmem:[#allocation2 + $0x18] sm:$0xff]
        %v1326 = vld [vmem:[#allocation2 + $0x20] sm:$0xff]
        %v1327 = vld [vmem:[#allocation2 + $0x28] sm:$0xff]
        %v1328 = vld [vmem:[#allocation2 + $0x30] sm:$0xff]
        %v1329 = vld [vmem:[#allocation2 + $0x38] sm:$0xff]
        %v1330 = vld [vmem:[#allocation2 + $0x40] sm:$0xff]
        %v1331 = vld [vmem:[#allocation2 + $0x48] sm:$0xff]
        %v1332 = vld [vmem:[#allocation2 + $0x50] sm:$0xff]
        %v1333 = vld [vmem:[#allocation2 + $0x58] sm:$0xff]
        %v1334 = vld [vmem:[#allocation2 + $0x60] sm:$0xff]
        %v1335 = vld [vmem:[#allocation2 + $0x68] sm:$0xff]
        %v1336 = vld [vmem:[#allocation2 + $0x70] sm:$0xff]
        %v1337 = vld [vmem:[#allocation2 + $0x78] sm:$0xff]
        %v1338 = vld [vmem:[#allocation2 + $0x80] sm:$0xff]
        %v1339 = vld [vmem:[#allocation2 + $0x88] sm:$0xff]
        %v1340 = vld [vmem:[#allocation2 + $0x90] sm:$0xff]
        %v1341 = vld [vmem:[#allocation2 + $0x98] sm:$0xff]
        %v1342 = vld [vmem:[#allocation2 + $0xa0] sm:$0xff]
        %v1343 = vld [vmem:[#allocation2 + $0xa8] sm:$0xff]
        %v1344 = vld [vmem:[#allocation2 + $0xb0] sm:$0xff]
        %v1345 = vld [vmem:[#allocation2 + $0xb8] sm:$0xff]
        %v1346 = vld [vmem:[#allocation2 + $0xc0] sm:$0xff]
        %v1347 = vld [vmem:[#allocation2 + $0xc8] sm:$0xff]
        %v1348 = vld [vmem:[#allocation2 + $0xd0] sm:$0xff]
        %v1349 = vld [vmem:[#allocation2 + $0xd8] sm:$0xff]
        %v1350 = vld [vmem:[#allocation2 + $0xe0] sm:$0xff]
        %v1351 = vld [vmem:[#allocation2 + $0xe8] sm:$0xff]
        %v1352 = vld [vmem:[#allocation2 + $0xf0] sm:$0xff]
        %v1353 = vld [vmem:[#allocation2 + $0xf8] sm:$0xff]
        %v1386 = vunpack.c.l.b16 %v1322
        %v1387 = vunpack.c.l.b16 %v1323
        %v1388 = vunpack.c.l.b16 %v1324
        %v1389 = vunpack.c.l.b16 %v1325
        %v1390 = vunpack.c.l.b16 %v1326
        %v1391 = vunpack.c.l.b16 %v1327
        %v1392 = vunpack.c.l.b16 %v1328
        %v1393 = vunpack.c.l.b16 %v1329
        %v1394 = vunpack.c.l.b16 %v1330
        %v1395 = vunpack.c.l.b16 %v1331
        %v1396 = vunpack.c.l.b16 %v1332
        %v1397 = vunpack.c.l.b16 %v1333
        %v1398 = vunpack.c.l.b16 %v1334
        %v1399 = vunpack.c.l.b16 %v1335
        %v1400 = vunpack.c.l.b16 %v1336
        %v1401 = vunpack.c.l.b16 %v1337
        %v1402 = vunpack.c.l.b16 %v1338
        %v1403 = vunpack.c.l.b16 %v1339
        %v1404 = vunpack.c.l.b16 %v1340
        %v1405 = vunpack.c.l.b16 %v1341
        %v1406 = vunpack.c.l.b16 %v1342
        %v1407 = vunpack.c.l.b16 %v1343
        %v1408 = vunpack.c.l.b16 %v1344
        %v1409 = vunpack.c.l.b16 %v1345
        %v1410 = vunpack.c.l.b16 %v1346
        %v1411 = vunpack.c.l.b16 %v1347
        %v1412 = vunpack.c.l.b16 %v1348
        %v1413 = vunpack.c.l.b16 %v1349
        %v1414 = vunpack.c.l.b16 %v1350
        %v1415 = vunpack.c.l.b16 %v1351
        %v1416 = vunpack.c.l.b16 %v1352
        %v1417 = vunpack.c.l.b16 %v1353
        %v1418 = vpack.c.b16 %v1387, %v1386
        %v1419 = vpack.c.b16 %v1389, %v1388
        %v1420 = vpack.c.b16 %v1391, %v1390
        %v1421 = vpack.c.b16 %v1393, %v1392
        %v1422 = vpack.c.b16 %v1395, %v1394
        %v1423 = vpack.c.b16 %v1397, %v1396
        %v1424 = vpack.c.b16 %v1399, %v1398
        %v1425 = vpack.c.b16 %v1401, %v1400
        %v1426 = vpack.c.b16 %v1403, %v1402
        %v1427 = vpack.c.b16 %v1405, %v1404
        %v1428 = vpack.c.b16 %v1407, %v1406
        %v1429 = vpack.c.b16 %v1409, %v1408
        %v1430 = vpack.c.b16 %v1411, %v1410
        %v1431 = vpack.c.b16 %v1413, %v1412
        %v1432 = vpack.c.b16 %v1415, %v1414
        %v1433 = vpack.c.b16 %v1417, %v1416
        %vm1434 = vcmask 261120
        %v1436 = vsel %vm1434, %v1306, 0
        %v1439 = vsel %vm1434, %v1307, 0
        %v1442 = vsel %vm1434, %v1308, 0
        %v1445 = vsel %vm1434, %v1309, 0
        %v1448 = vsel %vm1434, %v1310, 0
        %v1451 = vsel %vm1434, %v1311, 0
        %v1454 = vsel %vm1434, %v1312, 0
        %v1457 = vsel %vm1434, %v1313, 0
        %v1460 = vsel %vm1434, %v1314, 0
        %v1463 = vsel %vm1434, %v1315, 0
        %v1466 = vsel %vm1434, %v1316, 0
        %v1469 = vsel %vm1434, %v1317, 0
        %v1472 = vsel %vm1434, %v1318, 0
        %v1475 = vsel %vm1434, %v1319, 0
        %v1478 = vsel %vm1434, %v1320, 0
        %v1481 = vsel %vm1434, %v1321, 0
        %v1484 = vsel %vm1434, %v1418, 0
        %v1487 = vsel %vm1434, %v1419, 0
        %v1490 = vsel %vm1434, %v1420, 0
        %v1493 = vsel %vm1434, %v1421, 0
        %v1496 = vsel %vm1434, %v1422, 0
        %v1499 = vsel %vm1434, %v1423, 0
        %v1502 = vsel %vm1434, %v1424, 0
        %v1505 = vsel %vm1434, %v1425, 0
        %v1508 = vsel %vm1434, %v1426, 0
        %v1511 = vsel %vm1434, %v1427, 0
        %v1514 = vsel %vm1434, %v1428, 0
        %v1517 = vsel %vm1434, %v1429, 0
        %v1520 = vsel %vm1434, %v1430, 0
        %v1523 = vsel %vm1434, %v1431, 0
        %v1526 = vsel %vm1434, %v1432, 0
        %v1529 = vsel %vm1434, %v1433, 0
        %1531 = vmatprep.subr.bf16.mxu0 0
        %1532 = vmatpush1.bf16.xpose.msra.mxu0 %v1505
        %1533 = vmatprep.subr.bf16.mxu0 0
        %1534 = vmatpush1.bf16.xpose.msra.mxu0 %v1502
        %1535 = vmatprep.subr.bf16.mxu0 0
        %1536 = vmatpush1.bf16.xpose.msra.mxu0 %v1499
        %1537 = vmatprep.subr.bf16.mxu0 0
        %1538 = vmatpush1.bf16.xpose.msra.mxu0 %v1496
        %1539 = vmatprep.subr.bf16.mxu0 0
        %1540 = vmatpush1.bf16.xpose.msra.mxu0 %v1493
        %1541 = vmatprep.subr.bf16.mxu0 0
        %1542 = vmatpush1.bf16.xpose.msra.mxu0 %v1490
        %1543 = vmatprep.subr.bf16.mxu0 0
        %1544 = vmatpush1.bf16.xpose.msra.mxu0 %v1487
        %1545 = vmatprep.subr.bf16.mxu0 0
        %1546 = vmatpush1.bf16.xpose.msra.mxu0 %v1484
        %1547 = vmatprep.subr.bf16.mxu0 0
        %1548 = vmatpush2.bf16.xpose.msra.mxu0 %v1529
        %1549 = vmatprep.subr.bf16.mxu0 0
        %1550 = vmatpush2.bf16.xpose.msra.mxu0 %v1526
        %1551 = vmatprep.subr.bf16.mxu0 0
        %1552 = vmatpush2.bf16.xpose.msra.mxu0 %v1523
        %1553 = vmatprep.subr.bf16.mxu0 0
        %1554 = vmatpush2.bf16.xpose.msra.mxu0 %v1520
        %1555 = vmatprep.subr.bf16.mxu0 0
        %1556 = vmatpush2.bf16.xpose.msra.mxu0 %v1517
        %1557 = vmatprep.subr.bf16.mxu0 0
        %1558 = vmatpush2.bf16.xpose.msra.mxu0 %v1514
        %1559 = vmatprep.subr.bf16.mxu0 0
        %1560 = vmatpush2.bf16.xpose.msra.mxu0 %v1511
        %1561 = vmatprep.subr.bf16.mxu0 0
        %1562 = vmatpush2.bf16.xpose.msra.mxu0 %v1508
        %1563 = vmatprep.mubr.bf16.mxu0 0
        %1564 = vmatmul.mubr.bf16.gmra.mxu0 %v1436
        %v1565 = vpop.f32.mrf.mxu0
        %v1566 = vadd.f32 0.0, %v1565
        %v1567 = vpop.f32.mrf.mxu0
        %v1568 = vadd.f32 0.0, %v1567
        %v1569 = vpop.f32.mrf.mxu0
        %v1570 = vadd.f32 0.0, %v1569
        %v1571 = vpop.f32.mrf.mxu0
        %v1572 = vadd.f32 0.0, %v1571
        %1573 = vmatprep.mubr.bf16.mxu0 0
        %1574 = vmatmul.mubr.bf16.gmra.mxu0 %v1439
        %v1575 = vpop.f32.mrf.mxu0
        %v1576 = vadd.f32 0.0, %v1575
        %v1577 = vpop.f32.mrf.mxu0
        %v1578 = vadd.f32 0.0, %v1577
        %v1579 = vpop.f32.mrf.mxu0
        %v1580 = vadd.f32 0.0, %v1579
        %v1581 = vpop.f32.mrf.mxu0
        %v1582 = vadd.f32 0.0, %v1581
        %1583 = vmatprep.mubr.bf16.mxu0 0
        %1584 = vmatmul.mubr.bf16.gmra.mxu0 %v1442
        %v1585 = vpop.f32.mrf.mxu0
        %v1586 = vadd.f32 0.0, %v1585
        %v1587 = vpop.f32.mrf.mxu0
        %v1588 = vadd.f32 0.0, %v1587
        %v1589 = vpop.f32.mrf.mxu0
        %v1590 = vadd.f32 0.0, %v1589
        %v1591 = vpop.f32.mrf.mxu0
        %v1592 = vadd.f32 0.0, %v1591
        %1593 = vmatprep.mubr.bf16.mxu0 0
        %1594 = vmatmul.mubr.bf16.gmra.mxu0 %v1445
        %v1595 = vpop.f32.mrf.mxu0
        %v1596 = vadd.f32 0.0, %v1595
        %v1597 = vpop.f32.mrf.mxu0
        %v1598 = vadd.f32 0.0, %v1597
        %v1599 = vpop.f32.mrf.mxu0
        %v1600 = vadd.f32 0.0, %v1599
        %v1601 = vpop.f32.mrf.mxu0
        %v1602 = vadd.f32 0.0, %v1601
        %1603 = vmatprep.mubr.bf16.mxu0 0
        %1604 = vmatmul.mubr.bf16.gmra.mxu0 %v1448
        %v1605 = vpop.f32.mrf.mxu0
        %v1606 = vadd.f32 0.0, %v1605
        %v1607 = vpop.f32.mrf.mxu0
        %v1608 = vadd.f32 0.0, %v1607
        %v1609 = vpop.f32.mrf.mxu0
        %v1610 = vadd.f32 0.0, %v1609
        %v1611 = vpop.f32.mrf.mxu0
        %v1612 = vadd.f32 0.0, %v1611
        %1613 = vmatprep.mubr.bf16.mxu0 0
        %1614 = vmatmul.mubr.bf16.gmra.mxu0 %v1451
        %v1615 = vpop.f32.mrf.mxu0
        %v1616 = vadd.f32 0.0, %v1615
        %v1617 = vpop.f32.mrf.mxu0
        %v1618 = vadd.f32 0.0, %v1617
        %v1619 = vpop.f32.mrf.mxu0
        %v1620 = vadd.f32 0.0, %v1619
        %v1621 = vpop.f32.mrf.mxu0
        %v1622 = vadd.f32 0.0, %v1621
        %1623 = vmatprep.mubr.bf16.mxu0 0
        %1624 = vmatmul.mubr.bf16.gmra.mxu0 %v1454
        %v1625 = vpop.f32.mrf.mxu0
        %v1626 = vadd.f32 0.0, %v1625
        %v1627 = vpop.f32.mrf.mxu0
        %v1628 = vadd.f32 0.0, %v1627
        %v1629 = vpop.f32.mrf.mxu0
        %v1630 = vadd.f32 0.0, %v1629
        %v1631 = vpop.f32.mrf.mxu0
        %v1632 = vadd.f32 0.0, %v1631
        %1633 = vmatprep.mubr.bf16.mxu0 0
        %1634 = vmatmul.mubr.bf16.gmra.mxu0 %v1457
        %v1635 = vpop.f32.mrf.mxu0
        %v1636 = vadd.f32 0.0, %v1635
        %v1637 = vpop.f32.mrf.mxu0
        %v1638 = vadd.f32 0.0, %v1637
        %v1639 = vpop.f32.mrf.mxu0
        %v1640 = vadd.f32 0.0, %v1639
        %v1641 = vpop.f32.mrf.mxu0
        %v1642 = vadd.f32 0.0, %v1641
        %1643 = vmatprep.mubr.bf16.mxu0 0
        %1644 = vmatmul.mubr.bf16.gmra.mxu0 %v1460
        %v1645 = vpop.f32.mrf.mxu0
        %v1646 = vadd.f32 0.0, %v1645
        %v1647 = vpop.f32.mrf.mxu0
        %v1648 = vadd.f32 0.0, %v1647
        %v1649 = vpop.f32.mrf.mxu0
        %v1650 = vadd.f32 0.0, %v1649
        %v1651 = vpop.f32.mrf.mxu0
        %v1652 = vadd.f32 0.0, %v1651
        %1653 = vmatprep.mubr.bf16.mxu0 0
        %1654 = vmatmul.mubr.bf16.gmra.mxu0 %v1463
        %v1655 = vpop.f32.mrf.mxu0
        %v1656 = vadd.f32 0.0, %v1655
        %v1657 = vpop.f32.mrf.mxu0
        %v1658 = vadd.f32 0.0, %v1657
        %v1659 = vpop.f32.mrf.mxu0
        %v1660 = vadd.f32 0.0, %v1659
        %v1661 = vpop.f32.mrf.mxu0
        %v1662 = vadd.f32 0.0, %v1661
        %1663 = vmatprep.mubr.bf16.mxu0 0
        %1664 = vmatmul.mubr.bf16.gmra.mxu0 %v1466
        %v1665 = vpop.f32.mrf.mxu0
        %v1666 = vadd.f32 0.0, %v1665
        %v1667 = vpop.f32.mrf.mxu0
        %v1668 = vadd.f32 0.0, %v1667
        %v1669 = vpop.f32.mrf.mxu0
        %v1670 = vadd.f32 0.0, %v1669
        %v1671 = vpop.f32.mrf.mxu0
        %v1672 = vadd.f32 0.0, %v1671
        %1673 = vmatprep.mubr.bf16.mxu0 0
        %1674 = vmatmul.mubr.bf16.gmra.mxu0 %v1469
        %v1675 = vpop.f32.mrf.mxu0
        %v1676 = vadd.f32 0.0, %v1675
        %v1677 = vpop.f32.mrf.mxu0
        %v1678 = vadd.f32 0.0, %v1677
        %v1679 = vpop.f32.mrf.mxu0
        %v1680 = vadd.f32 0.0, %v1679
        %v1681 = vpop.f32.mrf.mxu0
        %v1682 = vadd.f32 0.0, %v1681
        %1683 = vmatprep.mubr.bf16.mxu0 0
        %1684 = vmatmul.mubr.bf16.gmra.mxu0 %v1472
        %v1685 = vpop.f32.mrf.mxu0
        %v1686 = vadd.f32 0.0, %v1685
        %v1687 = vpop.f32.mrf.mxu0
        %v1688 = vadd.f32 0.0, %v1687
        %v1689 = vpop.f32.mrf.mxu0
        %v1690 = vadd.f32 0.0, %v1689
        %v1691 = vpop.f32.mrf.mxu0
        %v1692 = vadd.f32 0.0, %v1691
        %1693 = vmatprep.mubr.bf16.mxu0 0
        %1694 = vmatmul.mubr.bf16.gmra.mxu0 %v1475
        %v1695 = vpop.f32.mrf.mxu0
        %v1696 = vadd.f32 0.0, %v1695
        %v1697 = vpop.f32.mrf.mxu0
        %v1698 = vadd.f32 0.0, %v1697
        %v1699 = vpop.f32.mrf.mxu0
        %v1700 = vadd.f32 0.0, %v1699
        %v1701 = vpop.f32.mrf.mxu0
        %v1702 = vadd.f32 0.0, %v1701
        %1703 = vmatprep.mubr.bf16.mxu0 0
        %1704 = vmatmul.mubr.bf16.gmra.mxu0 %v1478
        %v1705 = vpop.f32.mrf.mxu0
        %v1706 = vadd.f32 0.0, %v1705
        %v1707 = vpop.f32.mrf.mxu0
        %v1708 = vadd.f32 0.0, %v1707
        %v1709 = vpop.f32.mrf.mxu0
        %v1710 = vadd.f32 0.0, %v1709
        %v1711 = vpop.f32.mrf.mxu0
        %v1712 = vadd.f32 0.0, %v1711
        %1713 = vmatprep.mubr.bf16.mxu0 0
        %1714 = vmatmul.mubr.bf16.gmra.mxu0 %v1481
        %v1715 = vpop.f32.mrf.mxu0
        %v1716 = vadd.f32 0.0, %v1715
        %v1717 = vpop.f32.mrf.mxu0
        %v1718 = vadd.f32 0.0, %v1717
        %v1719 = vpop.f32.mrf.mxu0
        %v1720 = vadd.f32 0.0, %v1719
        %v1721 = vpop.f32.mrf.mxu0
        %v1722 = vadd.f32 0.0, %v1721
        %1723 = vdwg.mxu0
        %v1724 = vmax.f32 %v1566, %v1568
        %1725 = vmax.xlane.f32.xlu0 %v1724
        %v1726 = vpop.xlane.xlu0 %1725
        %v1727 = vmax.f32 %v1570, %v1572
        %1728 = vmax.xlane.f32.xlu0 %v1727
        %v1729 = vpop.xlane.xlu0 %1728
        %v1730 = vmax.f32 %v1576, %v1578
        %1731 = vmax.xlane.f32.xlu0 %v1730
        %v1732 = vpop.xlane.xlu0 %1731
        %v1733 = vmax.f32 %v1580, %v1582
        %1734 = vmax.xlane.f32.xlu0 %v1733
        %v1735 = vpop.xlane.xlu0 %1734
        %v1736 = vmax.f32 %v1586, %v1588
        %1737 = vmax.xlane.f32.xlu0 %v1736
        %v1738 = vpop.xlane.xlu0 %1737
        %v1739 = vmax.f32 %v1590, %v1592
        %1740 = vmax.xlane.f32.xlu0 %v1739
        %v1741 = vpop.xlane.xlu0 %1740
        %v1742 = vmax.f32 %v1596, %v1598
        %1743 = vmax.xlane.f32.xlu0 %v1742
        %v1744 = vpop.xlane.xlu0 %1743
        %v1745 = vmax.f32 %v1600, %v1602
        %1746 = vmax.xlane.f32.xlu0 %v1745
        %v1747 = vpop.xlane.xlu0 %1746
        %v1748 = vmax.f32 %v1606, %v1608
        %1749 = vmax.xlane.f32.xlu0 %v1748
        %v1750 = vpop.xlane.xlu0 %1749
        %v1751 = vmax.f32 %v1610, %v1612
        %1752 = vmax.xlane.f32.xlu0 %v1751
        %v1753 = vpop.xlane.xlu0 %1752
        %v1754 = vmax.f32 %v1616, %v1618
        %1755 = vmax.xlane.f32.xlu0 %v1754
        %v1756 = vpop.xlane.xlu0 %1755
        %v1757 = vmax.f32 %v1620, %v1622
        %1758 = vmax.xlane.f32.xlu0 %v1757
        %v1759 = vpop.xlane.xlu0 %1758
        %v1760 = vmax.f32 %v1626, %v1628
        %1761 = vmax.xlane.f32.xlu0 %v1760
        %v1762 = vpop.xlane.xlu0 %1761
        %v1763 = vmax.f32 %v1630, %v1632
        %1764 = vmax.xlane.f32.xlu0 %v1763
        %v1765 = vpop.xlane.xlu0 %1764
        %v1766 = vmax.f32 %v1636, %v1638
        %1767 = vmax.xlane.f32.xlu0 %v1766
        %v1768 = vpop.xlane.xlu0 %1767
        %v1769 = vmax.f32 %v1640, %v1642
        %1770 = vmax.xlane.f32.xlu0 %v1769
        %v1771 = vpop.xlane.xlu0 %1770
        %v1772 = vmax.f32 %v1646, %v1648
        %1773 = vmax.xlane.f32.xlu0 %v1772
        %v1774 = vpop.xlane.xlu0 %1773
        %v1775 = vmax.f32 %v1650, %v1652
        %1776 = vmax.xlane.f32.xlu0 %v1775
        %v1777 = vpop.xlane.xlu0 %1776
        %v1778 = vmax.f32 %v1656, %v1658
        %1779 = vmax.xlane.f32.xlu0 %v1778
        %v1780 = vpop.xlane.xlu0 %1779
        %v1781 = vmax.f32 %v1660, %v1662
        %1782 = vmax.xlane.f32.xlu0 %v1781
        %v1783 = vpop.xlane.xlu0 %1782
        %v1784 = vmax.f32 %v1666, %v1668
        %1785 = vmax.xlane.f32.xlu0 %v1784
        %v1786 = vpop.xlane.xlu0 %1785
        %v1787 = vmax.f32 %v1670, %v1672
        %1788 = vmax.xlane.f32.xlu0 %v1787
        %v1789 = vpop.xlane.xlu0 %1788
        %v1790 = vmax.f32 %v1676, %v1678
        %1791 = vmax.xlane.f32.xlu0 %v1790
        %v1792 = vpop.xlane.xlu0 %1791
        %v1793 = vmax.f32 %v1680, %v1682
        %1794 = vmax.xlane.f32.xlu0 %v1793
        %v1795 = vpop.xlane.xlu0 %1794
        %v1796 = vmax.f32 %v1686, %v1688
        %1797 = vmax.xlane.f32.xlu0 %v1796
        %v1798 = vpop.xlane.xlu0 %1797
        %v1799 = vmax.f32 %v1690, %v1692
        %1800 = vmax.xlane.f32.xlu0 %v1799
        %v1801 = vpop.xlane.xlu0 %1800
        %v1802 = vmax.f32 %v1696, %v1698
        %1803 = vmax.xlane.f32.xlu0 %v1802
        %v1804 = vpop.xlane.xlu0 %1803
        %v1805 = vmax.f32 %v1700, %v1702
        %1806 = vmax.xlane.f32.xlu0 %v1805
        %v1807 = vpop.xlane.xlu0 %1806
        %v1808 = vmax.f32 %v1706, %v1708
        %1809 = vmax.xlane.f32.xlu0 %v1808
        %v1810 = vpop.xlane.xlu0 %1809
        %v1811 = vmax.f32 %v1710, %v1712
        %1812 = vmax.xlane.f32.xlu0 %v1811
        %v1813 = vpop.xlane.xlu0 %1812
        %v1814 = vmax.f32 %v1716, %v1718
        %1815 = vmax.xlane.f32.xlu0 %v1814
        %v1816 = vpop.xlane.xlu0 %1815
        %v1817 = vmax.f32 %v1720, %v1722
        %1818 = vmax.xlane.f32.xlu0 %v1817
        %v1819 = vpop.xlane.xlu0 %1818
        %v1820 = vsub.f32 %v1566, %v1726
        %v1821 = vsub.f32 %v1568, %v1726
        %v1822 = vsub.f32 %v1570, %v1729
        %v1823 = vsub.f32 %v1572, %v1729
        %v1824 = vsub.f32 %v1576, %v1732
        %v1825 = vsub.f32 %v1578, %v1732
        %v1826 = vsub.f32 %v1580, %v1735
        %v1827 = vsub.f32 %v1582, %v1735
        %v1828 = vsub.f32 %v1586, %v1738
        %v1829 = vsub.f32 %v1588, %v1738
        %v1830 = vsub.f32 %v1590, %v1741
        %v1831 = vsub.f32 %v1592, %v1741
        %v1832 = vsub.f32 %v1596, %v1744
        %v1833 = vsub.f32 %v1598, %v1744
        %v1834 = vsub.f32 %v1600, %v1747
        %v1835 = vsub.f32 %v1602, %v1747
        %v1836 = vsub.f32 %v1606, %v1750
        %v1837 = vsub.f32 %v1608, %v1750
        %v1838 = vsub.f32 %v1610, %v1753
        %v1839 = vsub.f32 %v1612, %v1753
        %v1840 = vsub.f32 %v1616, %v1756
        %v1841 = vsub.f32 %v1618, %v1756
        %v1842 = vsub.f32 %v1620, %v1759
        %v1843 = vsub.f32 %v1622, %v1759
        %v1844 = vsub.f32 %v1626, %v1762
        %v1845 = vsub.f32 %v1628, %v1762
        %v1846 = vsub.f32 %v1630, %v1765
        %v1847 = vsub.f32 %v1632, %v1765
        %v1848 = vsub.f32 %v1636, %v1768
        %v1849 = vsub.f32 %v1638, %v1768
        %v1850 = vsub.f32 %v1640, %v1771
        %v1851 = vsub.f32 %v1642, %v1771
        %v1852 = vsub.f32 %v1646, %v1774
        %v1853 = vsub.f32 %v1648, %v1774
        %v1854 = vsub.f32 %v1650, %v1777
        %v1855 = vsub.f32 %v1652, %v1777
        %v1856 = vsub.f32 %v1656, %v1780
        %v1857 = vsub.f32 %v1658, %v1780
        %v1858 = vsub.f32 %v1660, %v1783
        %v1859 = vsub.f32 %v1662, %v1783
        %v1860 = vsub.f32 %v1666, %v1786
        %v1861 = vsub.f32 %v1668, %v1786
        %v1862 = vsub.f32 %v1670, %v1789
        %v1863 = vsub.f32 %v1672, %v1789
        %v1864 = vsub.f32 %v1676, %v1792
        %v1865 = vsub.f32 %v1678, %v1792
        %v1866 = vsub.f32 %v1680, %v1795
        %v1867 = vsub.f32 %v1682, %v1795
        %v1868 = vsub.f32 %v1686, %v1798
        %v1869 = vsub.f32 %v1688, %v1798
        %v1870 = vsub.f32 %v1690, %v1801
        %v1871 = vsub.f32 %v1692, %v1801
        %v1872 = vsub.f32 %v1696, %v1804
        %v1873 = vsub.f32 %v1698, %v1804
        %v1874 = vsub.f32 %v1700, %v1807
        %v1875 = vsub.f32 %v1702, %v1807
        %v1876 = vsub.f32 %v1706, %v1810
        %v1877 = vsub.f32 %v1708, %v1810
        %v1878 = vsub.f32 %v1710, %v1813
        %v1879 = vsub.f32 %v1712, %v1813
        %v1880 = vsub.f32 %v1716, %v1816
        %v1881 = vsub.f32 %v1718, %v1816
        %v1882 = vsub.f32 %v1720, %v1819
        %v1883 = vsub.f32 %v1722, %v1819
        %v1884 = vmul.f32 %v1820, 1.442695
        %v1885 = vpow.pop %v1884
        %v1886 = vmul.f32 %v1821, 1.442695
        %v1887 = vpow.pop %v1886
        %v1888 = vmul.f32 %v1822, 1.442695
        %v1889 = vpow.pop %v1888
        %v1890 = vmul.f32 %v1823, 1.442695
        %v1891 = vpow.pop %v1890
        %v1892 = vmul.f32 %v1824, 1.442695
        %v1893 = vpow.pop %v1892
        %v1894 = vmul.f32 %v1825, 1.442695
        %v1895 = vpow.pop %v1894
        %v1896 = vmul.f32 %v1826, 1.442695
        %v1897 = vpow.pop %v1896
        %v1898 = vmul.f32 %v1827, 1.442695
        %v1899 = vpow.pop %v1898
        %v1900 = vmul.f32 %v1828, 1.442695
        %v1901 = vpow.pop %v1900
        %v1902 = vmul.f32 %v1829, 1.442695
        %v1903 = vpow.pop %v1902
        %v1904 = vmul.f32 %v1830, 1.442695
        %v1905 = vpow.pop %v1904
        %v1906 = vmul.f32 %v1831, 1.442695
        %v1907 = vpow.pop %v1906
        %v1908 = vmul.f32 %v1832, 1.442695
        %v1909 = vpow.pop %v1908
        %v1910 = vmul.f32 %v1833, 1.442695
        %v1911 = vpow.pop %v1910
        %v1912 = vmul.f32 %v1834, 1.442695
        %v1913 = vpow.pop %v1912
        %v1914 = vmul.f32 %v1835, 1.442695
        %v1915 = vpow.pop %v1914
        %v1916 = vmul.f32 %v1836, 1.442695
        %v1917 = vpow.pop %v1916
        %v1918 = vmul.f32 %v1837, 1.442695
        %v1919 = vpow.pop %v1918
        %v1920 = vmul.f32 %v1838, 1.442695
        %v1921 = vpow.pop %v1920
        %v1922 = vmul.f32 %v1839, 1.442695
        %v1923 = vpow.pop %v1922
        %v1924 = vmul.f32 %v1840, 1.442695
        %v1925 = vpow.pop %v1924
        %v1926 = vmul.f32 %v1841, 1.442695
        %v1927 = vpow.pop %v1926
        %v1928 = vmul.f32 %v1842, 1.442695
        %v1929 = vpow.pop %v1928
        %v1930 = vmul.f32 %v1843, 1.442695
        %v1931 = vpow.pop %v1930
        %v1932 = vmul.f32 %v1844, 1.442695
        %v1933 = vpow.pop %v1932
        %v1934 = vmul.f32 %v1845, 1.442695
        %v1935 = vpow.pop %v1934
        %v1936 = vmul.f32 %v1846, 1.442695
        %v1937 = vpow.pop %v1936
        %v1938 = vmul.f32 %v1847, 1.442695
        %v1939 = vpow.pop %v1938
        %v1940 = vmul.f32 %v1848, 1.442695
        %v1941 = vpow.pop %v1940
        %v1942 = vmul.f32 %v1849, 1.442695
        %v1943 = vpow.pop %v1942
        %v1944 = vmul.f32 %v1850, 1.442695
        %v1945 = vpow.pop %v1944
        %v1946 = vmul.f32 %v1851, 1.442695
        %v1947 = vpow.pop %v1946
        %v1948 = vmul.f32 %v1852, 1.442695
        %v1949 = vpow.pop %v1948
        %v1950 = vmul.f32 %v1853, 1.442695
        %v1951 = vpow.pop %v1950
        %v1952 = vmul.f32 %v1854, 1.442695
        %v1953 = vpow.pop %v1952
        %v1954 = vmul.f32 %v1855, 1.442695
        %v1955 = vpow.pop %v1954
        %v1956 = vmul.f32 %v1856, 1.442695
        %v1957 = vpow.pop %v1956
        %v1958 = vmul.f32 %v1857, 1.442695
        %v1959 = vpow.pop %v1958
        %v1960 = vmul.f32 %v1858, 1.442695
        %v1961 = vpow.pop %v1960
        %v1962 = vmul.f32 %v1859, 1.442695
        %v1963 = vpow.pop %v1962
        %v1964 = vmul.f32 %v1860, 1.442695
        %v1965 = vpow.pop %v1964
        %v1966 = vmul.f32 %v1861, 1.442695
        %v1967 = vpow.pop %v1966
        %v1968 = vmul.f32 %v1862, 1.442695
        %v1969 = vpow.pop %v1968
        %v1970 = vmul.f32 %v1863, 1.442695
        %v1971 = vpow.pop %v1970
        %v1972 = vmul.f32 %v1864, 1.442695
        %v1973 = vpow.pop %v1972
        %v1974 = vmul.f32 %v1865, 1.442695
        %v1975 = vpow.pop %v1974
        %v1976 = vmul.f32 %v1866, 1.442695
        %v1977 = vpow.pop %v1976
        %v1978 = vmul.f32 %v1867, 1.442695
        %v1979 = vpow.pop %v1978
        %v1980 = vmul.f32 %v1868, 1.442695
        %v1981 = vpow.pop %v1980
        %v1982 = vmul.f32 %v1869, 1.442695
        %v1983 = vpow.pop %v1982
        %v1984 = vmul.f32 %v1870, 1.442695
        %v1985 = vpow.pop %v1984
        %v1986 = vmul.f32 %v1871, 1.442695
        %v1987 = vpow.pop %v1986
        %v1988 = vmul.f32 %v1872, 1.442695
        %v1989 = vpow.pop %v1988
        %v1990 = vmul.f32 %v1873, 1.442695
        %v1991 = vpow.pop %v1990
        %v1992 = vmul.f32 %v1874, 1.442695
        %v1993 = vpow.pop %v1992
        %v1994 = vmul.f32 %v1875, 1.442695
        %v1995 = vpow.pop %v1994
        %v1996 = vmul.f32 %v1876, 1.442695
        %v1997 = vpow.pop %v1996
        %v1998 = vmul.f32 %v1877, 1.442695
        %v1999 = vpow.pop %v1998
        %v2000 = vmul.f32 %v1878, 1.442695
        %v2001 = vpow.pop %v2000
        %v2002 = vmul.f32 %v1879, 1.442695
        %v2003 = vpow.pop %v2002
        %v2004 = vmul.f32 %v1880, 1.442695
        %v2005 = vpow.pop %v2004
        %v2006 = vmul.f32 %v1881, 1.442695
        %v2007 = vpow.pop %v2006
        %v2008 = vmul.f32 %v1882, 1.442695
        %v2009 = vpow.pop %v2008
        %v2010 = vmul.f32 %v1883, 1.442695
        %v2011 = vpow.pop %v2010
        %v2012 = vadd.f32 %v1885, %v1887
        %2013 = vadd.xlane.f32.xlu0 %v2012
        %v2014 = vpop.xlane.xlu0 %2013
        %v2015 = vadd.f32 %v1889, %v1891
        %2016 = vadd.xlane.f32.xlu0 %v2015
        %v2017 = vpop.xlane.xlu0 %2016
        %v2018 = vadd.f32 %v1893, %v1895
        %2019 = vadd.xlane.f32.xlu0 %v2018
        %v2020 = vpop.xlane.xlu0 %2019
        %v2021 = vadd.f32 %v1897, %v1899
        %2022 = vadd.xlane.f32.xlu0 %v2021
        %v2023 = vpop.xlane.xlu0 %2022
        %v2024 = vadd.f32 %v1901, %v1903
        %2025 = vadd.xlane.f32.xlu0 %v2024
        %v2026 = vpop.xlane.xlu0 %2025
        %v2027 = vadd.f32 %v1905, %v1907
        %2028 = vadd.xlane.f32.xlu0 %v2027
        %v2029 = vpop.xlane.xlu0 %2028
        %v2030 = vadd.f32 %v1909, %v1911
        %2031 = vadd.xlane.f32.xlu0 %v2030
        %v2032 = vpop.xlane.xlu0 %2031
        %v2033 = vadd.f32 %v1913, %v1915
        %2034 = vadd.xlane.f32.xlu0 %v2033
        %v2035 = vpop.xlane.xlu0 %2034
        %v2036 = vadd.f32 %v1917, %v1919
        %2037 = vadd.xlane.f32.xlu0 %v2036
        %v2038 = vpop.xlane.xlu0 %2037
        %v2039 = vadd.f32 %v1921, %v1923
        %2040 = vadd.xlane.f32.xlu0 %v2039
        %v2041 = vpop.xlane.xlu0 %2040
        %v2042 = vadd.f32 %v1925, %v1927
        %2043 = vadd.xlane.f32.xlu0 %v2042
        %v2044 = vpop.xlane.xlu0 %2043
        %v2045 = vadd.f32 %v1929, %v1931
        %2046 = vadd.xlane.f32.xlu0 %v2045
        %v2047 = vpop.xlane.xlu0 %2046
        %v2048 = vadd.f32 %v1933, %v1935
        %2049 = vadd.xlane.f32.xlu0 %v2048
        %v2050 = vpop.xlane.xlu0 %2049
        %v2051 = vadd.f32 %v1937, %v1939
        %2052 = vadd.xlane.f32.xlu0 %v2051
        %v2053 = vpop.xlane.xlu0 %2052
        %v2054 = vadd.f32 %v1941, %v1943
        %2055 = vadd.xlane.f32.xlu0 %v2054
        %v2056 = vpop.xlane.xlu0 %2055
        %v2057 = vadd.f32 %v1945, %v1947
        %2058 = vadd.xlane.f32.xlu0 %v2057
        %v2059 = vpop.xlane.xlu0 %2058
        %v2060 = vadd.f32 %v1949, %v1951
        %2061 = vadd.xlane.f32.xlu0 %v2060
        %v2062 = vpop.xlane.xlu0 %2061
        %v2063 = vadd.f32 %v1953, %v1955
        %2064 = vadd.xlane.f32.xlu0 %v2063
        %v2065 = vpop.xlane.xlu0 %2064
        %v2066 = vadd.f32 %v1957, %v1959
        %2067 = vadd.xlane.f32.xlu0 %v2066
        %v2068 = vpop.xlane.xlu0 %2067
        %v2069 = vadd.f32 %v1961, %v1963
        %2070 = vadd.xlane.f32.xlu0 %v2069
        %v2071 = vpop.xlane.xlu0 %2070
        %v2072 = vadd.f32 %v1965, %v1967
        %2073 = vadd.xlane.f32.xlu0 %v2072
        %v2074 = vpop.xlane.xlu0 %2073
        %v2075 = vadd.f32 %v1969, %v1971
        %2076 = vadd.xlane.f32.xlu0 %v2075
        %v2077 = vpop.xlane.xlu0 %2076
        %v2078 = vadd.f32 %v1973, %v1975
        %2079 = vadd.xlane.f32.xlu0 %v2078
        %v2080 = vpop.xlane.xlu0 %2079
        %v2081 = vadd.f32 %v1977, %v1979
        %2082 = vadd.xlane.f32.xlu0 %v2081
        %v2083 = vpop.xlane.xlu0 %2082
        %v2084 = vadd.f32 %v1981, %v1983
        %2085 = vadd.xlane.f32.xlu0 %v2084
        %v2086 = vpop.xlane.xlu0 %2085
        %v2087 = vadd.f32 %v1985, %v1987
        %2088 = vadd.xlane.f32.xlu0 %v2087
        %v2089 = vpop.xlane.xlu0 %2088
        %v2090 = vadd.f32 %v1989, %v1991
        %2091 = vadd.xlane.f32.xlu0 %v2090
        %v2092 = vpop.xlane.xlu0 %2091
        %v2093 = vadd.f32 %v1993, %v1995
        %2094 = vadd.xlane.f32.xlu0 %v2093
        %v2095 = vpop.xlane.xlu0 %2094
        %v2096 = vadd.f32 %v1997, %v1999
        %2097 = vadd.xlane.f32.xlu0 %v2096
        %v2098 = vpop.xlane.xlu0 %2097
        %v2099 = vadd.f32 %v2001, %v2003
        %2100 = vadd.xlane.f32.xlu0 %v2099
        %v2101 = vpop.xlane.xlu0 %2100
        %v2102 = vadd.f32 %v2005, %v2007
        %2103 = vadd.xlane.f32.xlu0 %v2102
        %v2104 = vpop.xlane.xlu0 %2103
        %v2105 = vadd.f32 %v2009, %v2011
        %2106 = vadd.xlane.f32.xlu0 %v2105
        %v2107 = vpop.xlane.xlu0 %2106
        %v2108 = vrcp.pop %v2014
        %v2109 = vrcp.pop %v2017
        %v2110 = vrcp.pop %v2020
        %v2111 = vrcp.pop %v2023
        %v2112 = vrcp.pop %v2026
        %v2113 = vrcp.pop %v2029
        %v2114 = vrcp.pop %v2032
        %v2115 = vrcp.pop %v2035
        %v2116 = vrcp.pop %v2038
        %v2117 = vrcp.pop %v2041
        %v2118 = vrcp.pop %v2044
        %v2119 = vrcp.pop %v2047
        %v2120 = vrcp.pop %v2050
        %v2121 = vrcp.pop %v2053
        %v2122 = vrcp.pop %v2056
        %v2123 = vrcp.pop %v2059
        %v2124 = vrcp.pop %v2062
        %v2125 = vrcp.pop %v2065
        %v2126 = vrcp.pop %v2068
        %v2127 = vrcp.pop %v2071
        %v2128 = vrcp.pop %v2074
        %v2129 = vrcp.pop %v2077
        %v2130 = vrcp.pop %v2080
        %v2131 = vrcp.pop %v2083
        %v2132 = vrcp.pop %v2086
        %v2133 = vrcp.pop %v2089
        %v2134 = vrcp.pop %v2092
        %v2135 = vrcp.pop %v2095
        %v2136 = vrcp.pop %v2098
        %v2137 = vrcp.pop %v2101
        %v2138 = vrcp.pop %v2104
        %v2139 = vrcp.pop %v2107
        %v2140 = vmul.f32 %v1885, %v2108
        %v2141 = vmul.f32 %v1887, %v2108
        %v2142 = vmul.f32 %v1889, %v2109
        %v2143 = vmul.f32 %v1891, %v2109
        %v2144 = vmul.f32 %v1893, %v2110
        %v2145 = vmul.f32 %v1895, %v2110
        %v2146 = vmul.f32 %v1897, %v2111
        %v2147 = vmul.f32 %v1899, %v2111
        %v2148 = vmul.f32 %v1901, %v2112
        %v2149 = vmul.f32 %v1903, %v2112
        %v2150 = vmul.f32 %v1905, %v2113
        %v2151 = vmul.f32 %v1907, %v2113
        %v2152 = vmul.f32 %v1909, %v2114
        %v2153 = vmul.f32 %v1911, %v2114
        %v2154 = vmul.f32 %v1913, %v2115
        %v2155 = vmul.f32 %v1915, %v2115
        %v2156 = vmul.f32 %v1917, %v2116
        %v2157 = vmul.f32 %v1919, %v2116
        %v2158 = vmul.f32 %v1921, %v2117
        %v2159 = vmul.f32 %v1923, %v2117
        %v2160 = vmul.f32 %v1925, %v2118
        %v2161 = vmul.f32 %v1927, %v2118
        %v2162 = vmul.f32 %v1929, %v2119
        %v2163 = vmul.f32 %v1931, %v2119
        %v2164 = vmul.f32 %v1933, %v2120
        %v2165 = vmul.f32 %v1935, %v2120
        %v2166 = vmul.f32 %v1937, %v2121
        %v2167 = vmul.f32 %v1939, %v2121
        %v2168 = vmul.f32 %v1941, %v2122
        %v2169 = vmul.f32 %v1943, %v2122
        %v2170 = vmul.f32 %v1945, %v2123
        %v2171 = vmul.f32 %v1947, %v2123
        %v2172 = vmul.f32 %v1949, %v2124
        %v2173 = vmul.f32 %v1951, %v2124
        %v2174 = vmul.f32 %v1953, %v2125
        %v2175 = vmul.f32 %v1955, %v2125
        %v2176 = vmul.f32 %v1957, %v2126
        %v2177 = vmul.f32 %v1959, %v2126
        %v2178 = vmul.f32 %v1961, %v2127
        %v2179 = vmul.f32 %v1963, %v2127
        %v2180 = vmul.f32 %v1965, %v2128
        %v2181 = vmul.f32 %v1967, %v2128
        %v2182 = vmul.f32 %v1969, %v2129
        %v2183 = vmul.f32 %v1971, %v2129
        %v2184 = vmul.f32 %v1973, %v2130
        %v2185 = vmul.f32 %v1975, %v2130
        %v2186 = vmul.f32 %v1977, %v2131
        %v2187 = vmul.f32 %v1979, %v2131
        %v2188 = vmul.f32 %v1981, %v2132
        %v2189 = vmul.f32 %v1983, %v2132
        %v2190 = vmul.f32 %v1985, %v2133
        %v2191 = vmul.f32 %v1987, %v2133
        %v2192 = vmul.f32 %v1989, %v2134
        %v2193 = vmul.f32 %v1991, %v2134
        %v2194 = vmul.f32 %v1993, %v2135
        %v2195 = vmul.f32 %v1995, %v2135
        %v2196 = vmul.f32 %v1997, %v2136
        %v2197 = vmul.f32 %v1999, %v2136
        %v2198 = vmul.f32 %v2001, %v2137
        %v2199 = vmul.f32 %v2003, %v2137
        %v2200 = vmul.f32 %v2005, %v2138
        %v2201 = vmul.f32 %v2007, %v2138
        %v2202 = vmul.f32 %v2009, %v2139
        %v2203 = vmul.f32 %v2011, %v2139
        %v2204 = vpack.c.bf16 %v2142, %v2140
        %v2205 = vpack.c.bf16 %v2143, %v2141
        %v2206 = vpack.c.bf16 %v2146, %v2144
        %v2207 = vpack.c.bf16 %v2147, %v2145
        %v2208 = vpack.c.bf16 %v2150, %v2148
        %v2209 = vpack.c.bf16 %v2151, %v2149
        %v2210 = vpack.c.bf16 %v2154, %v2152
        %v2211 = vpack.c.bf16 %v2155, %v2153
        %v2212 = vpack.c.bf16 %v2158, %v2156
        %v2213 = vpack.c.bf16 %v2159, %v2157
        %v2214 = vpack.c.bf16 %v2162, %v2160
        %v2215 = vpack.c.bf16 %v2163, %v2161
        %v2216 = vpack.c.bf16 %v2166, %v2164
        %v2217 = vpack.c.bf16 %v2167, %v2165
        %v2218 = vpack.c.bf16 %v2170, %v2168
        %v2219 = vpack.c.bf16 %v2171, %v2169
        %v2220 = vpack.c.bf16 %v2174, %v2172
        %v2221 = vpack.c.bf16 %v2175, %v2173
        %v2222 = vpack.c.bf16 %v2178, %v2176
        %v2223 = vpack.c.bf16 %v2179, %v2177
        %v2224 = vpack.c.bf16 %v2182, %v2180
        %v2225 = vpack.c.bf16 %v2183, %v2181
        %v2226 = vpack.c.bf16 %v2186, %v2184
        %v2227 = vpack.c.bf16 %v2187, %v2185
        %v2228 = vpack.c.bf16 %v2190, %v2188
        %v2229 = vpack.c.bf16 %v2191, %v2189
        %v2230 = vpack.c.bf16 %v2194, %v2192
        %v2231 = vpack.c.bf16 %v2195, %v2193
        %v2232 = vpack.c.bf16 %v2198, %v2196
        %v2233 = vpack.c.bf16 %v2199, %v2197
        %v2234 = vpack.c.bf16 %v2202, %v2200
        %v2235 = vpack.c.bf16 %v2203, %v2201
        %v2236 = vunpack.c.h.b16 %v1322
        %v2237 = vunpack.c.h.b16 %v1323
        %v2238 = vunpack.c.h.b16 %v1324
        %v2239 = vunpack.c.h.b16 %v1325
        %v2240 = vunpack.c.h.b16 %v1326
        %v2241 = vunpack.c.h.b16 %v1327
        %v2242 = vunpack.c.h.b16 %v1328
        %v2243 = vunpack.c.h.b16 %v1329
        %v2244 = vunpack.c.h.b16 %v1330
        %v2245 = vunpack.c.h.b16 %v1331
        %v2246 = vunpack.c.h.b16 %v1332
        %v2247 = vunpack.c.h.b16 %v1333
        %v2248 = vunpack.c.h.b16 %v1334
        %v2249 = vunpack.c.h.b16 %v1335
        %v2250 = vunpack.c.h.b16 %v1336
        %v2251 = vunpack.c.h.b16 %v1337
        %v2252 = vunpack.c.h.b16 %v1338
        %v2253 = vunpack.c.h.b16 %v1339
        %v2254 = vunpack.c.h.b16 %v1340
        %v2255 = vunpack.c.h.b16 %v1341
        %v2256 = vunpack.c.h.b16 %v1342
        %v2257 = vunpack.c.h.b16 %v1343
        %v2258 = vunpack.c.h.b16 %v1344
        %v2259 = vunpack.c.h.b16 %v1345
        %v2260 = vunpack.c.h.b16 %v1346
        %v2261 = vunpack.c.h.b16 %v1347
        %v2262 = vunpack.c.h.b16 %v1348
        %v2263 = vunpack.c.h.b16 %v1349
        %v2264 = vunpack.c.h.b16 %v1350
        %v2265 = vunpack.c.h.b16 %v1351
        %v2266 = vunpack.c.h.b16 %v1352
        %v2267 = vunpack.c.h.b16 %v1353
        %v2268 = vpack.c.b16 %v2237, %v2236
        %v2269 = vpack.c.b16 %v2239, %v2238
        %v2270 = vpack.c.b16 %v2241, %v2240
        %v2271 = vpack.c.b16 %v2243, %v2242
        %v2272 = vpack.c.b16 %v2245, %v2244
        %v2273 = vpack.c.b16 %v2247, %v2246
        %v2274 = vpack.c.b16 %v2249, %v2248
        %v2275 = vpack.c.b16 %v2251, %v2250
        %v2276 = vpack.c.b16 %v2253, %v2252
        %v2277 = vpack.c.b16 %v2255, %v2254
        %v2278 = vpack.c.b16 %v2257, %v2256
        %v2279 = vpack.c.b16 %v2259, %v2258
        %v2280 = vpack.c.b16 %v2261, %v2260
        %v2281 = vpack.c.b16 %v2263, %v2262
        %v2282 = vpack.c.b16 %v2265, %v2264
        %v2283 = vpack.c.b16 %v2267, %v2266
        %2300 = vmatprep.subr.bf16.mxu0 0
        %2301 = vmatpush1.bf16.msra.mxu0 %v2275
        %2302 = vmatprep.subr.bf16.mxu0 0
        %2303 = vmatpush1.bf16.msra.mxu0 %v2274
        %2304 = vmatprep.subr.bf16.mxu0 0
        %2305 = vmatpush1.bf16.msra.mxu0 %v2273
        %2306 = vmatprep.subr.bf16.mxu0 0
        %2307 = vmatpush1.bf16.msra.mxu0 %v2272
        %2308 = vmatprep.subr.bf16.mxu0 0
        %2309 = vmatpush1.bf16.msra.mxu0 %v2271
        %2310 = vmatprep.subr.bf16.mxu0 0
        %2311 = vmatpush1.bf16.msra.mxu0 %v2270
        %2312 = vmatprep.subr.bf16.mxu0 0
        %2313 = vmatpush1.bf16.msra.mxu0 %v2269
        %2314 = vmatprep.subr.bf16.mxu0 0
        %2315 = vmatpush1.bf16.msra.mxu0 %v2268
        %2316 = vmatprep.subr.bf16.mxu0 0
        %2317 = vmatpush2.bf16.msra.mxu0 %v2283
        %2318 = vmatprep.subr.bf16.mxu0 0
        %2319 = vmatpush2.bf16.msra.mxu0 %v2282
        %2320 = vmatprep.subr.bf16.mxu0 0
        %2321 = vmatpush2.bf16.msra.mxu0 %v2281
        %2322 = vmatprep.subr.bf16.mxu0 0
        %2323 = vmatpush2.bf16.msra.mxu0 %v2280
        %2324 = vmatprep.subr.bf16.mxu0 0
        %2325 = vmatpush2.bf16.msra.mxu0 %v2279
        %2326 = vmatprep.subr.bf16.mxu0 0
        %2327 = vmatpush2.bf16.msra.mxu0 %v2278
        %2328 = vmatprep.subr.bf16.mxu0 0
        %2329 = vmatpush2.bf16.msra.mxu0 %v2277
        %2330 = vmatprep.subr.bf16.mxu0 0
        %2331 = vmatpush2.bf16.msra.mxu0 %v2276
        %2332 = vmatprep.mubr.bf16.mxu0 %v2205
        %2333 = vmatmul.mubr.bf16.gmra.mxu0 %v2204
        %v2334 = vpop.f32.mrf.mxu0
        %v2335 = vadd.f32 0.0, %v2334
        %v2336 = vpop.f32.mrf.mxu0
        %v2337 = vpop.f32.mrf.mxu0
        %v2338 = vadd.f32 0.0, %v2337
        %v2339 = vpop.f32.mrf.mxu0
        %2340 = vmatprep.mubr.bf16.mxu0 %v2207
        %2341 = vmatmul.mubr.bf16.gmra.mxu0 %v2206
        %v2342 = vpop.f32.mrf.mxu0
        %v2343 = vadd.f32 0.0, %v2342
        %v2344 = vpop.f32.mrf.mxu0
        %v2345 = vpop.f32.mrf.mxu0
        %v2346 = vadd.f32 0.0, %v2345
        %v2347 = vpop.f32.mrf.mxu0
        %2348 = vmatprep.mubr.bf16.mxu0 %v2209
        %2349 = vmatmul.mubr.bf16.gmra.mxu0 %v2208
        %v2350 = vpop.f32.mrf.mxu0
        %v2351 = vadd.f32 0.0, %v2350
        %v2352 = vpop.f32.mrf.mxu0
        %v2353 = vpop.f32.mrf.mxu0
        %v2354 = vadd.f32 0.0, %v2353
        %v2355 = vpop.f32.mrf.mxu0
        %2356 = vmatprep.mubr.bf16.mxu0 %v2211
        %2357 = vmatmul.mubr.bf16.gmra.mxu0 %v2210
        %v2358 = vpop.f32.mrf.mxu0
        %v2359 = vadd.f32 0.0, %v2358
        %v2360 = vpop.f32.mrf.mxu0
        %v2361 = vpop.f32.mrf.mxu0
        %v2362 = vadd.f32 0.0, %v2361
        %v2363 = vpop.f32.mrf.mxu0
        %2364 = vmatprep.mubr.bf16.mxu0 %v2213
        %2365 = vmatmul.mubr.bf16.gmra.mxu0 %v2212
        %v2366 = vpop.f32.mrf.mxu0
        %v2367 = vadd.f32 0.0, %v2366
        %v2368 = vpop.f32.mrf.mxu0
        %v2369 = vpop.f32.mrf.mxu0
        %v2370 = vadd.f32 0.0, %v2369
        %v2371 = vpop.f32.mrf.mxu0
        %2372 = vmatprep.mubr.bf16.mxu0 %v2215
        %2373 = vmatmul.mubr.bf16.gmra.mxu0 %v2214
        %v2374 = vpop.f32.mrf.mxu0
        %v2375 = vadd.f32 0.0, %v2374
        %v2376 = vpop.f32.mrf.mxu0
        %v2377 = vpop.f32.mrf.mxu0
        %v2378 = vadd.f32 0.0, %v2377
        %v2379 = vpop.f32.mrf.mxu0
        %2380 = vmatprep.mubr.bf16.mxu0 %v2217
        %2381 = vmatmul.mubr.bf16.gmra.mxu0 %v2216
        %v2382 = vpop.f32.mrf.mxu0
        %v2383 = vadd.f32 0.0, %v2382
        %v2384 = vpop.f32.mrf.mxu0
        %v2385 = vpop.f32.mrf.mxu0
        %v2386 = vadd.f32 0.0, %v2385
        %v2387 = vpop.f32.mrf.mxu0
        %2388 = vmatprep.mubr.bf16.mxu0 %v2219
        %2389 = vmatmul.mubr.bf16.gmra.mxu0 %v2218
        %v2390 = vpop.f32.mrf.mxu0
        %v2391 = vadd.f32 0.0, %v2390
        %v2392 = vpop.f32.mrf.mxu0
        %v2393 = vpop.f32.mrf.mxu0
        %v2394 = vadd.f32 0.0, %v2393
        %v2395 = vpop.f32.mrf.mxu0
        %2396 = vmatprep.mubr.bf16.mxu0 %v2221
        %2397 = vmatmul.mubr.bf16.gmra.mxu0 %v2220
        %v2398 = vpop.f32.mrf.mxu0
        %v2399 = vadd.f32 0.0, %v2398
        %v2400 = vpop.f32.mrf.mxu0
        %v2401 = vpop.f32.mrf.mxu0
        %v2402 = vadd.f32 0.0, %v2401
        %v2403 = vpop.f32.mrf.mxu0
        %2404 = vmatprep.mubr.bf16.mxu0 %v2223
        %2405 = vmatmul.mubr.bf16.gmra.mxu0 %v2222
        %v2406 = vpop.f32.mrf.mxu0
        %v2407 = vadd.f32 0.0, %v2406
        %v2408 = vpop.f32.mrf.mxu0
        %v2409 = vpop.f32.mrf.mxu0
        %v2410 = vadd.f32 0.0, %v2409
        %v2411 = vpop.f32.mrf.mxu0
        %2412 = vmatprep.mubr.bf16.mxu0 %v2225
        %2413 = vmatmul.mubr.bf16.gmra.mxu0 %v2224
        %v2414 = vpop.f32.mrf.mxu0
        %v2415 = vadd.f32 0.0, %v2414
        %v2416 = vpop.f32.mrf.mxu0
        %v2417 = vpop.f32.mrf.mxu0
        %v2418 = vadd.f32 0.0, %v2417
        %v2419 = vpop.f32.mrf.mxu0
        %2420 = vmatprep.mubr.bf16.mxu0 %v2227
        %2421 = vmatmul.mubr.bf16.gmra.mxu0 %v2226
        %v2422 = vpop.f32.mrf.mxu0
        %v2423 = vadd.f32 0.0, %v2422
        %v2424 = vpop.f32.mrf.mxu0
        %v2425 = vpop.f32.mrf.mxu0
        %v2426 = vadd.f32 0.0, %v2425
        %v2427 = vpop.f32.mrf.mxu0
        %2428 = vmatprep.mubr.bf16.mxu0 %v2229
        %2429 = vmatmul.mubr.bf16.gmra.mxu0 %v2228
        %v2430 = vpop.f32.mrf.mxu0
        %v2431 = vadd.f32 0.0, %v2430
        %v2432 = vpop.f32.mrf.mxu0
        %v2433 = vpop.f32.mrf.mxu0
        %v2434 = vadd.f32 0.0, %v2433
        %v2435 = vpop.f32.mrf.mxu0
        %2436 = vmatprep.mubr.bf16.mxu0 %v2231
        %2437 = vmatmul.mubr.bf16.gmra.mxu0 %v2230
        %v2438 = vpop.f32.mrf.mxu0
        %v2439 = vadd.f32 0.0, %v2438
        %v2440 = vpop.f32.mrf.mxu0
        %v2441 = vpop.f32.mrf.mxu0
        %v2442 = vadd.f32 0.0, %v2441
        %v2443 = vpop.f32.mrf.mxu0
        %2444 = vmatprep.mubr.bf16.mxu0 %v2233
        %2445 = vmatmul.mubr.bf16.gmra.mxu0 %v2232
        %v2446 = vpop.f32.mrf.mxu0
        %v2447 = vadd.f32 0.0, %v2446
        %v2448 = vpop.f32.mrf.mxu0
        %v2449 = vpop.f32.mrf.mxu0
        %v2450 = vadd.f32 0.0, %v2449
        %v2451 = vpop.f32.mrf.mxu0
        %2452 = vmatprep.mubr.bf16.mxu0 %v2235
        %2453 = vmatmul.mubr.bf16.gmra.mxu0 %v2234
        %v2454 = vpop.f32.mrf.mxu0
        %v2455 = vadd.f32 0.0, %v2454
        %v2456 = vpop.f32.mrf.mxu0
        %v2457 = vpop.f32.mrf.mxu0
        %v2458 = vadd.f32 0.0, %v2457
        %v2459 = vpop.f32.mrf.mxu0
        %2460 = vdwg.mxu0
        %2461 = vst.msk [vmem:[#allocation3] sm:$0xff] %vm1434, %v2335
        %2462 = vst.msk [vmem:[#allocation3 + $0x8] sm:$0xff] %vm1434, %v2338
        %2463 = vst.msk [vmem:[#allocation3 + $0x10] sm:$0xff] %vm1434, %v2343
        %2464 = vst.msk [vmem:[#allocation3 + $0x18] sm:$0xff] %vm1434, %v2346
        %2465 = vst.msk [vmem:[#allocation3 + $0x20] sm:$0xff] %vm1434, %v2351
        %2466 = vst.msk [vmem:[#allocation3 + $0x28] sm:$0xff] %vm1434, %v2354
        %2467 = vst.msk [vmem:[#allocation3 + $0x30] sm:$0xff] %vm1434, %v2359
        %2468 = vst.msk [vmem:[#allocation3 + $0x38] sm:$0xff] %vm1434, %v2362
        %2469 = vst.msk [vmem:[#allocation3 + $0x40] sm:$0xff] %vm1434, %v2367
        %2470 = vst.msk [vmem:[#allocation3 + $0x48] sm:$0xff] %vm1434, %v2370
        %2471 = vst.msk [vmem:[#allocation3 + $0x50] sm:$0xff] %vm1434, %v2375
        %2472 = vst.msk [vmem:[#allocation3 + $0x58] sm:$0xff] %vm1434, %v2378
        %2473 = vst.msk [vmem:[#allocation3 + $0x60] sm:$0xff] %vm1434, %v2383
        %2474 = vst.msk [vmem:[#allocation3 + $0x68] sm:$0xff] %vm1434, %v2386
        %2475 = vst.msk [vmem:[#allocation3 + $0x70] sm:$0xff] %vm1434, %v2391
        %2476 = vst.msk [vmem:[#allocation3 + $0x78] sm:$0xff] %vm1434, %v2394
        %2477 = vst.msk [vmem:[#allocation3 + $0x80] sm:$0xff] %vm1434, %v2399
        %2478 = vst.msk [vmem:[#allocation3 + $0x88] sm:$0xff] %vm1434, %v2402
        %2479 = vst.msk [vmem:[#allocation3 + $0x90] sm:$0xff] %vm1434, %v2407
        %2480 = vst.msk [vmem:[#allocation3 + $0x98] sm:$0xff] %vm1434, %v2410
        %2481 = vst.msk [vmem:[#allocation3 + $0xa0] sm:$0xff] %vm1434, %v2415
        %2482 = vst.msk [vmem:[#allocation3 + $0xa8] sm:$0xff] %vm1434, %v2418
        %2483 = vst.msk [vmem:[#allocation3 + $0xb0] sm:$0xff] %vm1434, %v2423
        %2484 = vst.msk [vmem:[#allocation3 + $0xb8] sm:$0xff] %vm1434, %v2426
        %2485 = vst.msk [vmem:[#allocation3 + $0xc0] sm:$0xff] %vm1434, %v2431
        %2486 = vst.msk [vmem:[#allocation3 + $0xc8] sm:$0xff] %vm1434, %v2434
        %2487 = vst.msk [vmem:[#allocation3 + $0xd0] sm:$0xff] %vm1434, %v2439
        %2488 = vst.msk [vmem:[#allocation3 + $0xd8] sm:$0xff] %vm1434, %v2442
        %2489 = vst.msk [vmem:[#allocation3 + $0xe0] sm:$0xff] %vm1434, %v2447
        %2490 = vst.msk [vmem:[#allocation3 + $0xe8] sm:$0xff] %vm1434, %v2450
        %2491 = vst.msk [vmem:[#allocation3 + $0xf0] sm:$0xff] %vm1434, %v2455
        %2492 = vst.msk [vmem:[#allocation3 + $0xf8] sm:$0xff] %vm1434, %v2458
        %2509 = vrot.lane.b32.xlu0 %v1306, 96
        %v2510 = vpop.permute.xlu0 %2509
        %2511 = vrot.lane.b32.xlu0 %v1307, 96
        %v2512 = vpop.permute.xlu0 %2511
        %2513 = vrot.lane.b32.xlu0 %v1308, 96
        %v2514 = vpop.permute.xlu0 %2513
        %2515 = vrot.lane.b32.xlu0 %v1309, 96
        %v2516 = vpop.permute.xlu0 %2515
        %2517 = vrot.lane.b32.xlu0 %v1310, 96
        %v2518 = vpop.permute.xlu0 %2517
        %2519 = vrot.lane.b32.xlu0 %v1311, 96
        %v2520 = vpop.permute.xlu0 %2519
        %2521 = vrot.lane.b32.xlu0 %v1312, 96
        %v2522 = vpop.permute.xlu0 %2521
        %2523 = vrot.lane.b32.xlu0 %v1313, 96
        %v2524 = vpop.permute.xlu0 %2523
        %2525 = vrot.lane.b32.xlu0 %v1314, 96
        %v2526 = vpop.permute.xlu0 %2525
        %2527 = vrot.lane.b32.xlu0 %v1315, 96
        %v2528 = vpop.permute.xlu0 %2527
        %2529 = vrot.lane.b32.xlu0 %v1316, 96
        %v2530 = vpop.permute.xlu0 %2529
        %2531 = vrot.lane.b32.xlu0 %v1317, 96
        %v2532 = vpop.permute.xlu0 %2531
        %2533 = vrot.lane.b32.xlu0 %v1318, 96
        %v2534 = vpop.permute.xlu0 %2533
        %2535 = vrot.lane.b32.xlu0 %v1319, 96
        %v2536 = vpop.permute.xlu0 %2535
        %2537 = vrot.lane.b32.xlu0 %v1320, 96
        %v2538 = vpop.permute.xlu0 %2537
        %2539 = vrot.lane.b32.xlu0 %v1321, 96
        %v2540 = vpop.permute.xlu0 %2539
        %2541 = vrot.lane.b32.xlu0 %v1418, 96
        %v2542 = vpop.permute.xlu0 %2541
        %2543 = vrot.lane.b32.xlu0 %v1419, 96
        %v2544 = vpop.permute.xlu0 %2543
        %2545 = vrot.lane.b32.xlu0 %v1420, 96
        %v2546 = vpop.permute.xlu0 %2545
        %2547 = vrot.lane.b32.xlu0 %v1421, 96
        %v2548 = vpop.permute.xlu0 %2547
        %2549 = vrot.lane.b32.xlu0 %v1422, 96
        %v2550 = vpop.permute.xlu0 %2549
        %2551 = vrot.lane.b32.xlu0 %v1423, 96
        %v2552 = vpop.permute.xlu0 %2551
        %2553 = vrot.lane.b32.xlu0 %v1424, 96
        %v2554 = vpop.permute.xlu0 %2553
        %2555 = vrot.lane.b32.xlu0 %v1425, 96
        %v2556 = vpop.permute.xlu0 %2555
        %2557 = vrot.lane.b32.xlu0 %v1426, 96
        %v2558 = vpop.permute.xlu0 %2557
        %2559 = vrot.lane.b32.xlu0 %v1427, 96
        %v2560 = vpop.permute.xlu0 %2559
        %2561 = vrot.lane.b32.xlu0 %v1428, 96
        %v2562 = vpop.permute.xlu0 %2561
        %2563 = vrot.lane.b32.xlu0 %v1429, 96
        %v2564 = vpop.permute.xlu0 %2563
        %2565 = vrot.lane.b32.xlu0 %v1430, 96
        %v2566 = vpop.permute.xlu0 %2565
        %2567 = vrot.lane.b32.xlu0 %v1431, 96
        %v2568 = vpop.permute.xlu0 %2567
        %2569 = vrot.lane.b32.xlu0 %v1432, 96
        %v2570 = vpop.permute.xlu0 %2569
        %2571 = vrot.lane.b32.xlu0 %v1433, 96
        %v2572 = vpop.permute.xlu0 %2571
        %v2574 = vsel %vm1434, %v2510, 0
        %v2577 = vsel %vm1434, %v2512, 0
        %v2580 = vsel %vm1434, %v2514, 0
        %v2583 = vsel %vm1434, %v2516, 0
        %v2586 = vsel %vm1434, %v2518, 0
        %v2589 = vsel %vm1434, %v2520, 0
        %v2592 = vsel %vm1434, %v2522, 0
        %v2595 = vsel %vm1434, %v2524, 0
        %v2598 = vsel %vm1434, %v2526, 0
        %v2601 = vsel %vm1434, %v2528, 0
        %v2604 = vsel %vm1434, %v2530, 0
        %v2607 = vsel %vm1434, %v2532, 0
        %v2610 = vsel %vm1434, %v2534, 0
        %v2613 = vsel %vm1434, %v2536, 0
        %v2616 = vsel %vm1434, %v2538, 0
        %v2619 = vsel %vm1434, %v2540, 0
        %v2622 = vsel %vm1434, %v2542, 0
        %v2625 = vsel %vm1434, %v2544, 0
        %v2628 = vsel %vm1434, %v2546, 0
        %v2631 = vsel %vm1434, %v2548, 0
        %v2634 = vsel %vm1434, %v2550, 0
        %v2637 = vsel %vm1434, %v2552, 0
        %v2640 = vsel %vm1434, %v2554, 0
        %v2643 = vsel %vm1434, %v2556, 0
        %v2646 = vsel %vm1434, %v2558, 0
        %v2649 = vsel %vm1434, %v2560, 0
        %v2652 = vsel %vm1434, %v2562, 0
        %v2655 = vsel %vm1434, %v2564, 0
        %v2658 = vsel %vm1434, %v2566, 0
        %v2661 = vsel %vm1434, %v2568, 0
        %v2664 = vsel %vm1434, %v2570, 0
        %v2667 = vsel %vm1434, %v2572, 0
        %2669 = vmatprep.subr.bf16.mxu0 0
        %2670 = vmatpush1.bf16.xpose.msra.mxu0 %v2643
        %2671 = vmatprep.subr.bf16.mxu0 0
        %2672 = vmatpush1.bf16.xpose.msra.mxu0 %v2640
        %2673 = vmatprep.subr.bf16.mxu0 0
        %2674 = vmatpush1.bf16.xpose.msra.mxu0 %v2637
        %2675 = vmatprep.subr.bf16.mxu0 0
        %2676 = vmatpush1.bf16.xpose.msra.mxu0 %v2634
        %2677 = vmatprep.subr.bf16.mxu0 0
        %2678 = vmatpush1.bf16.xpose.msra.mxu0 %v2631
        %2679 = vmatprep.subr.bf16.mxu0 0
        %2680 = vmatpush1.bf16.xpose.msra.mxu0 %v2628
        %2681 = vmatprep.subr.bf16.mxu0 0
        %2682 = vmatpush1.bf16.xpose.msra.mxu0 %v2625
        %2683 = vmatprep.subr.bf16.mxu0 0
        %2684 = vmatpush1.bf16.xpose.msra.mxu0 %v2622
        %2685 = vmatprep.subr.bf16.mxu0 0
        %2686 = vmatpush2.bf16.xpose.msra.mxu0 %v2667
        %2687 = vmatprep.subr.bf16.mxu0 0
        %2688 = vmatpush2.bf16.xpose.msra.mxu0 %v2664
        %2689 = vmatprep.subr.bf16.mxu0 0
        %2690 = vmatpush2.bf16.xpose.msra.mxu0 %v2661
        %2691 = vmatprep.subr.bf16.mxu0 0
        %2692 = vmatpush2.bf16.xpose.msra.mxu0 %v2658
        %2693 = vmatprep.subr.bf16.mxu0 0
        %2694 = vmatpush2.bf16.xpose.msra.mxu0 %v2655
        %2695 = vmatprep.subr.bf16.mxu0 0
        %2696 = vmatpush2.bf16.xpose.msra.mxu0 %v2652
        %2697 = vmatprep.subr.bf16.mxu0 0
        %2698 = vmatpush2.bf16.xpose.msra.mxu0 %v2649
        %2699 = vmatprep.subr.bf16.mxu0 0
        %2700 = vmatpush2.bf16.xpose.msra.mxu0 %v2646
        %2701 = vmatprep.mubr.bf16.mxu0 0
        %2702 = vmatmul.mubr.bf16.gmra.mxu0 %v2574
        %v2703 = vpop.f32.mrf.mxu0
        %v2704 = vadd.f32 0.0, %v2703
        %v2705 = vpop.f32.mrf.mxu0
        %v2706 = vadd.f32 0.0, %v2705
        %v2707 = vpop.f32.mrf.mxu0
        %v2708 = vadd.f32 0.0, %v2707
        %v2709 = vpop.f32.mrf.mxu0
        %v2710 = vadd.f32 0.0, %v2709
        %2711 = vmatprep.mubr.bf16.mxu0 0
        %2712 = vmatmul.mubr.bf16.gmra.mxu0 %v2577
        %v2713 = vpop.f32.mrf.mxu0
        %v2714 = vadd.f32 0.0, %v2713
        %v2715 = vpop.f32.mrf.mxu0
        %v2716 = vadd.f32 0.0, %v2715
        %v2717 = vpop.f32.mrf.mxu0
        %v2718 = vadd.f32 0.0, %v2717
        %v2719 = vpop.f32.mrf.mxu0
        %v2720 = vadd.f32 0.0, %v2719
        %2721 = vmatprep.mubr.bf16.mxu0 0
        %2722 = vmatmul.mubr.bf16.gmra.mxu0 %v2580
        %v2723 = vpop.f32.mrf.mxu0
        %v2724 = vadd.f32 0.0, %v2723
        %v2725 = vpop.f32.mrf.mxu0
        %v2726 = vadd.f32 0.0, %v2725
        %v2727 = vpop.f32.mrf.mxu0
        %v2728 = vadd.f32 0.0, %v2727
        %v2729 = vpop.f32.mrf.mxu0
        %v2730 = vadd.f32 0.0, %v2729
        %2731 = vmatprep.mubr.bf16.mxu0 0
        %2732 = vmatmul.mubr.bf16.gmra.mxu0 %v2583
        %v2733 = vpop.f32.mrf.mxu0
        %v2734 = vadd.f32 0.0, %v2733
        %v2735 = vpop.f32.mrf.mxu0
        %v2736 = vadd.f32 0.0, %v2735
        %v2737 = vpop.f32.mrf.mxu0
        %v2738 = vadd.f32 0.0, %v2737
        %v2739 = vpop.f32.mrf.mxu0
        %v2740 = vadd.f32 0.0, %v2739
        %2741 = vmatprep.mubr.bf16.mxu0 0
        %2742 = vmatmul.mubr.bf16.gmra.mxu0 %v2586
        %v2743 = vpop.f32.mrf.mxu0
        %v2744 = vadd.f32 0.0, %v2743
        %v2745 = vpop.f32.mrf.mxu0
        %v2746 = vadd.f32 0.0, %v2745
        %v2747 = vpop.f32.mrf.mxu0
        %v2748 = vadd.f32 0.0, %v2747
        %v2749 = vpop.f32.mrf.mxu0
        %v2750 = vadd.f32 0.0, %v2749
        %2751 = vmatprep.mubr.bf16.mxu0 0
        %2752 = vmatmul.mubr.bf16.gmra.mxu0 %v2589
        %v2753 = vpop.f32.mrf.mxu0
        %v2754 = vadd.f32 0.0, %v2753
        %v2755 = vpop.f32.mrf.mxu0
        %v2756 = vadd.f32 0.0, %v2755
        %v2757 = vpop.f32.mrf.mxu0
        %v2758 = vadd.f32 0.0, %v2757
        %v2759 = vpop.f32.mrf.mxu0
        %v2760 = vadd.f32 0.0, %v2759
        %2761 = vmatprep.mubr.bf16.mxu0 0
        %2762 = vmatmul.mubr.bf16.gmra.mxu0 %v2592
        %v2763 = vpop.f32.mrf.mxu0
        %v2764 = vadd.f32 0.0, %v2763
        %v2765 = vpop.f32.mrf.mxu0
        %v2766 = vadd.f32 0.0, %v2765
        %v2767 = vpop.f32.mrf.mxu0
        %v2768 = vadd.f32 0.0, %v2767
        %v2769 = vpop.f32.mrf.mxu0
        %v2770 = vadd.f32 0.0, %v2769
        %2771 = vmatprep.mubr.bf16.mxu0 0
        %2772 = vmatmul.mubr.bf16.gmra.mxu0 %v2595
        %v2773 = vpop.f32.mrf.mxu0
        %v2774 = vadd.f32 0.0, %v2773
        %v2775 = vpop.f32.mrf.mxu0
        %v2776 = vadd.f32 0.0, %v2775
        %v2777 = vpop.f32.mrf.mxu0
        %v2778 = vadd.f32 0.0, %v2777
        %v2779 = vpop.f32.mrf.mxu0
        %v2780 = vadd.f32 0.0, %v2779
        %2781 = vmatprep.mubr.bf16.mxu0 0
        %2782 = vmatmul.mubr.bf16.gmra.mxu0 %v2598
        %v2783 = vpop.f32.mrf.mxu0
        %v2784 = vadd.f32 0.0, %v2783
        %v2785 = vpop.f32.mrf.mxu0
        %v2786 = vadd.f32 0.0, %v2785
        %v2787 = vpop.f32.mrf.mxu0
        %v2788 = vadd.f32 0.0, %v2787
        %v2789 = vpop.f32.mrf.mxu0
        %v2790 = vadd.f32 0.0, %v2789
        %2791 = vmatprep.mubr.bf16.mxu0 0
        %2792 = vmatmul.mubr.bf16.gmra.mxu0 %v2601
        %v2793 = vpop.f32.mrf.mxu0
        %v2794 = vadd.f32 0.0, %v2793
        %v2795 = vpop.f32.mrf.mxu0
        %v2796 = vadd.f32 0.0, %v2795
        %v2797 = vpop.f32.mrf.mxu0
        %v2798 = vadd.f32 0.0, %v2797
        %v2799 = vpop.f32.mrf.mxu0
        %v2800 = vadd.f32 0.0, %v2799
        %2801 = vmatprep.mubr.bf16.mxu0 0
        %2802 = vmatmul.mubr.bf16.gmra.mxu0 %v2604
        %v2803 = vpop.f32.mrf.mxu0
        %v2804 = vadd.f32 0.0, %v2803
        %v2805 = vpop.f32.mrf.mxu0
        %v2806 = vadd.f32 0.0, %v2805
        %v2807 = vpop.f32.mrf.mxu0
        %v2808 = vadd.f32 0.0, %v2807
        %v2809 = vpop.f32.mrf.mxu0
        %v2810 = vadd.f32 0.0, %v2809
        %2811 = vmatprep.mubr.bf16.mxu0 0
        %2812 = vmatmul.mubr.bf16.gmra.mxu0 %v2607
        %v2813 = vpop.f32.mrf.mxu0
        %v2814 = vadd.f32 0.0, %v2813
        %v2815 = vpop.f32.mrf.mxu0
        %v2816 = vadd.f32 0.0, %v2815
        %v2817 = vpop.f32.mrf.mxu0
        %v2818 = vadd.f32 0.0, %v2817
        %v2819 = vpop.f32.mrf.mxu0
        %v2820 = vadd.f32 0.0, %v2819
        %2821 = vmatprep.mubr.bf16.mxu0 0
        %2822 = vmatmul.mubr.bf16.gmra.mxu0 %v2610
        %v2823 = vpop.f32.mrf.mxu0
        %v2824 = vadd.f32 0.0, %v2823
        %v2825 = vpop.f32.mrf.mxu0
        %v2826 = vadd.f32 0.0, %v2825
        %v2827 = vpop.f32.mrf.mxu0
        %v2828 = vadd.f32 0.0, %v2827
        %v2829 = vpop.f32.mrf.mxu0
        %v2830 = vadd.f32 0.0, %v2829
        %2831 = vmatprep.mubr.bf16.mxu0 0
        %2832 = vmatmul.mubr.bf16.gmra.mxu0 %v2613
        %v2833 = vpop.f32.mrf.mxu0
        %v2834 = vadd.f32 0.0, %v2833
        %v2835 = vpop.f32.mrf.mxu0
        %v2836 = vadd.f32 0.0, %v2835
        %v2837 = vpop.f32.mrf.mxu0
        %v2838 = vadd.f32 0.0, %v2837
        %v2839 = vpop.f32.mrf.mxu0
        %v2840 = vadd.f32 0.0, %v2839
        %2841 = vmatprep.mubr.bf16.mxu0 0
        %2842 = vmatmul.mubr.bf16.gmra.mxu0 %v2616
        %v2843 = vpop.f32.mrf.mxu0
        %v2844 = vadd.f32 0.0, %v2843
        %v2845 = vpop.f32.mrf.mxu0
        %v2846 = vadd.f32 0.0, %v2845
        %v2847 = vpop.f32.mrf.mxu0
        %v2848 = vadd.f32 0.0, %v2847
        %v2849 = vpop.f32.mrf.mxu0
        %v2850 = vadd.f32 0.0, %v2849
        %2851 = vmatprep.mubr.bf16.mxu0 0
        %2852 = vmatmul.mubr.bf16.gmra.mxu0 %v2619
        %v2853 = vpop.f32.mrf.mxu0
        %v2854 = vadd.f32 0.0, %v2853
        %v2855 = vpop.f32.mrf.mxu0
        %v2856 = vadd.f32 0.0, %v2855
        %v2857 = vpop.f32.mrf.mxu0
        %v2858 = vadd.f32 0.0, %v2857
        %v2859 = vpop.f32.mrf.mxu0
        %v2860 = vadd.f32 0.0, %v2859
        %2861 = vdwg.mxu0
        %v2862 = vmax.f32 %v2704, %v2706
        %2863 = vmax.xlane.f32.xlu0 %v2862
        %v2864 = vpop.xlane.xlu0 %2863
        %v2865 = vmax.f32 %v2708, %v2710
        %2866 = vmax.xlane.f32.xlu0 %v2865
        %v2867 = vpop.xlane.xlu0 %2866
        %v2868 = vmax.f32 %v2714, %v2716
        %2869 = vmax.xlane.f32.xlu0 %v2868
        %v2870 = vpop.xlane.xlu0 %2869
        %v2871 = vmax.f32 %v2718, %v2720
        %2872 = vmax.xlane.f32.xlu0 %v2871
        %v2873 = vpop.xlane.xlu0 %2872
        %v2874 = vmax.f32 %v2724, %v2726
        %2875 = vmax.xlane.f32.xlu0 %v2874
        %v2876 = vpop.xlane.xlu0 %2875
        %v2877 = vmax.f32 %v2728, %v2730
        %2878 = vmax.xlane.f32.xlu0 %v2877
        %v2879 = vpop.xlane.xlu0 %2878
        %v2880 = vmax.f32 %v2734, %v2736
        %2881 = vmax.xlane.f32.xlu0 %v2880
        %v2882 = vpop.xlane.xlu0 %2881
        %v2883 = vmax.f32 %v2738, %v2740
        %2884 = vmax.xlane.f32.xlu0 %v2883
        %v2885 = vpop.xlane.xlu0 %2884
        %v2886 = vmax.f32 %v2744, %v2746
        %2887 = vmax.xlane.f32.xlu0 %v2886
        %v2888 = vpop.xlane.xlu0 %2887
        %v2889 = vmax.f32 %v2748, %v2750
        %2890 = vmax.xlane.f32.xlu0 %v2889
        %v2891 = vpop.xlane.xlu0 %2890
        %v2892 = vmax.f32 %v2754, %v2756
        %2893 = vmax.xlane.f32.xlu0 %v2892
        %v2894 = vpop.xlane.xlu0 %2893
        %v2895 = vmax.f32 %v2758, %v2760
        %2896 = vmax.xlane.f32.xlu0 %v2895
        %v2897 = vpop.xlane.xlu0 %2896
        %v2898 = vmax.f32 %v2764, %v2766
        %2899 = vmax.xlane.f32.xlu0 %v2898
        %v2900 = vpop.xlane.xlu0 %2899
        %v2901 = vmax.f32 %v2768, %v2770
        %2902 = vmax.xlane.f32.xlu0 %v2901
        %v2903 = vpop.xlane.xlu0 %2902
        %v2904 = vmax.f32 %v2774, %v2776
        %2905 = vmax.xlane.f32.xlu0 %v2904
        %v2906 = vpop.xlane.xlu0 %2905
        %v2907 = vmax.f32 %v2778, %v2780
        %2908 = vmax.xlane.f32.xlu0 %v2907
        %v2909 = vpop.xlane.xlu0 %2908
        %v2910 = vmax.f32 %v2784, %v2786
        %2911 = vmax.xlane.f32.xlu0 %v2910
        %v2912 = vpop.xlane.xlu0 %2911
        %v2913 = vmax.f32 %v2788, %v2790
        %2914 = vmax.xlane.f32.xlu0 %v2913
        %v2915 = vpop.xlane.xlu0 %2914
        %v2916 = vmax.f32 %v2794, %v2796
        %2917 = vmax.xlane.f32.xlu0 %v2916
        %v2918 = vpop.xlane.xlu0 %2917
        %v2919 = vmax.f32 %v2798, %v2800
        %2920 = vmax.xlane.f32.xlu0 %v2919
        %v2921 = vpop.xlane.xlu0 %2920
        %v2922 = vmax.f32 %v2804, %v2806
        %2923 = vmax.xlane.f32.xlu0 %v2922
        %v2924 = vpop.xlane.xlu0 %2923
        %v2925 = vmax.f32 %v2808, %v2810
        %2926 = vmax.xlane.f32.xlu0 %v2925
        %v2927 = vpop.xlane.xlu0 %2926
        %v2928 = vmax.f32 %v2814, %v2816
        %2929 = vmax.xlane.f32.xlu0 %v2928
        %v2930 = vpop.xlane.xlu0 %2929
        %v2931 = vmax.f32 %v2818, %v2820
        %2932 = vmax.xlane.f32.xlu0 %v2931
        %v2933 = vpop.xlane.xlu0 %2932
        %v2934 = vmax.f32 %v2824, %v2826
        %2935 = vmax.xlane.f32.xlu0 %v2934
        %v2936 = vpop.xlane.xlu0 %2935
        %v2937 = vmax.f32 %v2828, %v2830
        %2938 = vmax.xlane.f32.xlu0 %v2937
        %v2939 = vpop.xlane.xlu0 %2938
        %v2940 = vmax.f32 %v2834, %v2836
        %2941 = vmax.xlane.f32.xlu0 %v2940
        %v2942 = vpop.xlane.xlu0 %2941
        %v2943 = vmax.f32 %v2838, %v2840
        %2944 = vmax.xlane.f32.xlu0 %v2943
        %v2945 = vpop.xlane.xlu0 %2944
        %v2946 = vmax.f32 %v2844, %v2846
        %2947 = vmax.xlane.f32.xlu0 %v2946
        %v2948 = vpop.xlane.xlu0 %2947
        %v2949 = vmax.f32 %v2848, %v2850
        %2950 = vmax.xlane.f32.xlu0 %v2949
        %v2951 = vpop.xlane.xlu0 %2950
        %v2952 = vmax.f32 %v2854, %v2856
        %2953 = vmax.xlane.f32.xlu0 %v2952
        %v2954 = vpop.xlane.xlu0 %2953
        %v2955 = vmax.f32 %v2858, %v2860
        %2956 = vmax.xlane.f32.xlu0 %v2955
        %v2957 = vpop.xlane.xlu0 %2956
        %v2958 = vsub.f32 %v2704, %v2864
        %v2959 = vsub.f32 %v2706, %v2864
        %v2960 = vsub.f32 %v2708, %v2867
        %v2961 = vsub.f32 %v2710, %v2867
        %v2962 = vsub.f32 %v2714, %v2870
        %v2963 = vsub.f32 %v2716, %v2870
        %v2964 = vsub.f32 %v2718, %v2873
        %v2965 = vsub.f32 %v2720, %v2873
        %v2966 = vsub.f32 %v2724, %v2876
        %v2967 = vsub.f32 %v2726, %v2876
        %v2968 = vsub.f32 %v2728, %v2879
        %v2969 = vsub.f32 %v2730, %v2879
        %v2970 = vsub.f32 %v2734, %v2882
        %v2971 = vsub.f32 %v2736, %v2882
        %v2972 = vsub.f32 %v2738, %v2885
        %v2973 = vsub.f32 %v2740, %v2885
        %v2974 = vsub.f32 %v2744, %v2888
        %v2975 = vsub.f32 %v2746, %v2888
        %v2976 = vsub.f32 %v2748, %v2891
        %v2977 = vsub.f32 %v2750, %v2891
        %v2978 = vsub.f32 %v2754, %v2894
        %v2979 = vsub.f32 %v2756, %v2894
        %v2980 = vsub.f32 %v2758, %v2897
        %v2981 = vsub.f32 %v2760, %v2897
        %v2982 = vsub.f32 %v2764, %v2900
        %v2983 = vsub.f32 %v2766, %v2900
        %v2984 = vsub.f32 %v2768, %v2903
        %v2985 = vsub.f32 %v2770, %v2903
        %v2986 = vsub.f32 %v2774, %v2906
        %v2987 = vsub.f32 %v2776, %v2906
        %v2988 = vsub.f32 %v2778, %v2909
        %v2989 = vsub.f32 %v2780, %v2909
        %v2990 = vsub.f32 %v2784, %v2912
        %v2991 = vsub.f32 %v2786, %v2912
        %v2992 = vsub.f32 %v2788, %v2915
        %v2993 = vsub.f32 %v2790, %v2915
        %v2994 = vsub.f32 %v2794, %v2918
        %v2995 = vsub.f32 %v2796, %v2918
        %v2996 = vsub.f32 %v2798, %v2921
        %v2997 = vsub.f32 %v2800, %v2921
        %v2998 = vsub.f32 %v2804, %v2924
        %v2999 = vsub.f32 %v2806, %v2924
        %v3000 = vsub.f32 %v2808, %v2927
        %v3001 = vsub.f32 %v2810, %v2927
        %v3002 = vsub.f32 %v2814, %v2930
        %v3003 = vsub.f32 %v2816, %v2930
        %v3004 = vsub.f32 %v2818, %v2933
        %v3005 = vsub.f32 %v2820, %v2933
        %v3006 = vsub.f32 %v2824, %v2936
        %v3007 = vsub.f32 %v2826, %v2936
        %v3008 = vsub.f32 %v2828, %v2939
        %v3009 = vsub.f32 %v2830, %v2939
        %v3010 = vsub.f32 %v2834, %v2942
        %v3011 = vsub.f32 %v2836, %v2942
        %v3012 = vsub.f32 %v2838, %v2945
        %v3013 = vsub.f32 %v2840, %v2945
        %v3014 = vsub.f32 %v2844, %v2948
        %v3015 = vsub.f32 %v2846, %v2948
        %v3016 = vsub.f32 %v2848, %v2951
        %v3017 = vsub.f32 %v2850, %v2951
        %v3018 = vsub.f32 %v2854, %v2954
        %v3019 = vsub.f32 %v2856, %v2954
        %v3020 = vsub.f32 %v2858, %v2957
        %v3021 = vsub.f32 %v2860, %v2957
        %v3022 = vmul.f32 %v2958, 1.442695
        %v3023 = vpow.pop %v3022
        %v3024 = vmul.f32 %v2959, 1.442695
        %v3025 = vpow.pop %v3024
        %v3026 = vmul.f32 %v2960, 1.442695
        %v3027 = vpow.pop %v3026
        %v3028 = vmul.f32 %v2961, 1.442695
        %v3029 = vpow.pop %v3028
        %v3030 = vmul.f32 %v2962, 1.442695
        %v3031 = vpow.pop %v3030
        %v3032 = vmul.f32 %v2963, 1.442695
        %v3033 = vpow.pop %v3032
        %v3034 = vmul.f32 %v2964, 1.442695
        %v3035 = vpow.pop %v3034
        %v3036 = vmul.f32 %v2965, 1.442695
        %v3037 = vpow.pop %v3036
        %v3038 = vmul.f32 %v2966, 1.442695
        %v3039 = vpow.pop %v3038
        %v3040 = vmul.f32 %v2967, 1.442695
        %v3041 = vpow.pop %v3040
        %v3042 = vmul.f32 %v2968, 1.442695
        %v3043 = vpow.pop %v3042
        %v3044 = vmul.f32 %v2969, 1.442695
        %v3045 = vpow.pop %v3044
        %v3046 = vmul.f32 %v2970, 1.442695
        %v3047 = vpow.pop %v3046
        %v3048 = vmul.f32 %v2971, 1.442695
        %v3049 = vpow.pop %v3048
        %v3050 = vmul.f32 %v2972, 1.442695
        %v3051 = vpow.pop %v3050
        %v3052 = vmul.f32 %v2973, 1.442695
        %v3053 = vpow.pop %v3052
        %v3054 = vmul.f32 %v2974, 1.442695
        %v3055 = vpow.pop %v3054
        %v3056 = vmul.f32 %v2975, 1.442695
        %v3057 = vpow.pop %v3056
        %v3058 = vmul.f32 %v2976, 1.442695
        %v3059 = vpow.pop %v3058
        %v3060 = vmul.f32 %v2977, 1.442695
        %v3061 = vpow.pop %v3060
        %v3062 = vmul.f32 %v2978, 1.442695
        %v3063 = vpow.pop %v3062
        %v3064 = vmul.f32 %v2979, 1.442695
        %v3065 = vpow.pop %v3064
        %v3066 = vmul.f32 %v2980, 1.442695
        %v3067 = vpow.pop %v3066
        %v3068 = vmul.f32 %v2981, 1.442695
        %v3069 = vpow.pop %v3068
        %v3070 = vmul.f32 %v2982, 1.442695
        %v3071 = vpow.pop %v3070
        %v3072 = vmul.f32 %v2983, 1.442695
        %v3073 = vpow.pop %v3072
        %v3074 = vmul.f32 %v2984, 1.442695
        %v3075 = vpow.pop %v3074
        %v3076 = vmul.f32 %v2985, 1.442695
        %v3077 = vpow.pop %v3076
        %v3078 = vmul.f32 %v2986, 1.442695
        %v3079 = vpow.pop %v3078
        %v3080 = vmul.f32 %v2987, 1.442695
        %v3081 = vpow.pop %v3080
        %v3082 = vmul.f32 %v2988, 1.442695
        %v3083 = vpow.pop %v3082
        %v3084 = vmul.f32 %v2989, 1.442695
        %v3085 = vpow.pop %v3084
        %v3086 = vmul.f32 %v2990, 1.442695
        %v3087 = vpow.pop %v3086
        %v3088 = vmul.f32 %v2991, 1.442695
        %v3089 = vpow.pop %v3088
        %v3090 = vmul.f32 %v2992, 1.442695
        %v3091 = vpow.pop %v3090
        %v3092 = vmul.f32 %v2993, 1.442695
        %v3093 = vpow.pop %v3092
        %v3094 = vmul.f32 %v2994, 1.442695
        %v3095 = vpow.pop %v3094
        %v3096 = vmul.f32 %v2995, 1.442695
        %v3097 = vpow.pop %v3096
        %v3098 = vmul.f32 %v2996, 1.442695
        %v3099 = vpow.pop %v3098
        %v3100 = vmul.f32 %v2997, 1.442695
        %v3101 = vpow.pop %v3100
        %v3102 = vmul.f32 %v2998, 1.442695
        %v3103 = vpow.pop %v3102
        %v3104 = vmul.f32 %v2999, 1.442695
        %v3105 = vpow.pop %v3104
        %v3106 = vmul.f32 %v3000, 1.442695
        %v3107 = vpow.pop %v3106
        %v3108 = vmul.f32 %v3001, 1.442695
        %v3109 = vpow.pop %v3108
        %v3110 = vmul.f32 %v3002, 1.442695
        %v3111 = vpow.pop %v3110
        %v3112 = vmul.f32 %v3003, 1.442695
        %v3113 = vpow.pop %v3112
        %v3114 = vmul.f32 %v3004, 1.442695
        %v3115 = vpow.pop %v3114
        %v3116 = vmul.f32 %v3005, 1.442695
        %v3117 = vpow.pop %v3116
        %v3118 = vmul.f32 %v3006, 1.442695
        %v3119 = vpow.pop %v3118
        %v3120 = vmul.f32 %v3007, 1.442695
        %v3121 = vpow.pop %v3120
        %v3122 = vmul.f32 %v3008, 1.442695
        %v3123 = vpow.pop %v3122
        %v3124 = vmul.f32 %v3009, 1.442695
        %v3125 = vpow.pop %v3124
        %v3126 = vmul.f32 %v3010, 1.442695
        %v3127 = vpow.pop %v3126
        %v3128 = vmul.f32 %v3011, 1.442695
        %v3129 = vpow.pop %v3128
        %v3130 = vmul.f32 %v3012, 1.442695
        %v3131 = vpow.pop %v3130
        %v3132 = vmul.f32 %v3013, 1.442695
        %v3133 = vpow.pop %v3132
        %v3134 = vmul.f32 %v3014, 1.442695
        %v3135 = vpow.pop %v3134
        %v3136 = vmul.f32 %v3015, 1.442695
        %v3137 = vpow.pop %v3136
        %v3138 = vmul.f32 %v3016, 1.442695
        %v3139 = vpow.pop %v3138
        %v3140 = vmul.f32 %v3017, 1.442695
        %v3141 = vpow.pop %v3140
        %v3142 = vmul.f32 %v3018, 1.442695
        %v3143 = vpow.pop %v3142
        %v3144 = vmul.f32 %v3019, 1.442695
        %v3145 = vpow.pop %v3144
        %v3146 = vmul.f32 %v3020, 1.442695
        %v3147 = vpow.pop %v3146
        %v3148 = vmul.f32 %v3021, 1.442695
        %v3149 = vpow.pop %v3148
        %v3150 = vadd.f32 %v3023, %v3025
        %3151 = vadd.xlane.f32.xlu0 %v3150
        %v3152 = vpop.xlane.xlu0 %3151
        %v3153 = vadd.f32 %v3027, %v3029
        %3154 = vadd.xlane.f32.xlu0 %v3153
        %v3155 = vpop.xlane.xlu0 %3154
        %v3156 = vadd.f32 %v3031, %v3033
        %3157 = vadd.xlane.f32.xlu0 %v3156
        %v3158 = vpop.xlane.xlu0 %3157
        %v3159 = vadd.f32 %v3035, %v3037
        %3160 = vadd.xlane.f32.xlu0 %v3159
        %v3161 = vpop.xlane.xlu0 %3160
        %v3162 = vadd.f32 %v3039, %v3041
        %3163 = vadd.xlane.f32.xlu0 %v3162
        %v3164 = vpop.xlane.xlu0 %3163
        %v3165 = vadd.f32 %v3043, %v3045
        %3166 = vadd.xlane.f32.xlu0 %v3165
        %v3167 = vpop.xlane.xlu0 %3166
        %v3168 = vadd.f32 %v3047, %v3049
        %3169 = vadd.xlane.f32.xlu0 %v3168
        %v3170 = vpop.xlane.xlu0 %3169
        %v3171 = vadd.f32 %v3051, %v3053
        %3172 = vadd.xlane.f32.xlu0 %v3171
        %v3173 = vpop.xlane.xlu0 %3172
        %v3174 = vadd.f32 %v3055, %v3057
        %3175 = vadd.xlane.f32.xlu0 %v3174
        %v3176 = vpop.xlane.xlu0 %3175
        %v3177 = vadd.f32 %v3059, %v3061
        %3178 = vadd.xlane.f32.xlu0 %v3177
        %v3179 = vpop.xlane.xlu0 %3178
        %v3180 = vadd.f32 %v3063, %v3065
        %3181 = vadd.xlane.f32.xlu0 %v3180
        %v3182 = vpop.xlane.xlu0 %3181
        %v3183 = vadd.f32 %v3067, %v3069
        %3184 = vadd.xlane.f32.xlu0 %v3183
        %v3185 = vpop.xlane.xlu0 %3184
        %v3186 = vadd.f32 %v3071, %v3073
        %3187 = vadd.xlane.f32.xlu0 %v3186
        %v3188 = vpop.xlane.xlu0 %3187
        %v3189 = vadd.f32 %v3075, %v3077
        %3190 = vadd.xlane.f32.xlu0 %v3189
        %v3191 = vpop.xlane.xlu0 %3190
        %v3192 = vadd.f32 %v3079, %v3081
        %3193 = vadd.xlane.f32.xlu0 %v3192
        %v3194 = vpop.xlane.xlu0 %3193
        %v3195 = vadd.f32 %v3083, %v3085
        %3196 = vadd.xlane.f32.xlu0 %v3195
        %v3197 = vpop.xlane.xlu0 %3196
        %v3198 = vadd.f32 %v3087, %v3089
        %3199 = vadd.xlane.f32.xlu0 %v3198
        %v3200 = vpop.xlane.xlu0 %3199
        %v3201 = vadd.f32 %v3091, %v3093
        %3202 = vadd.xlane.f32.xlu0 %v3201
        %v3203 = vpop.xlane.xlu0 %3202
        %v3204 = vadd.f32 %v3095, %v3097
        %3205 = vadd.xlane.f32.xlu0 %v3204
        %v3206 = vpop.xlane.xlu0 %3205
        %v3207 = vadd.f32 %v3099, %v3101
        %3208 = vadd.xlane.f32.xlu0 %v3207
        %v3209 = vpop.xlane.xlu0 %3208
        %v3210 = vadd.f32 %v3103, %v3105
        %3211 = vadd.xlane.f32.xlu0 %v3210
        %v3212 = vpop.xlane.xlu0 %3211
        %v3213 = vadd.f32 %v3107, %v3109
        %3214 = vadd.xlane.f32.xlu0 %v3213
        %v3215 = vpop.xlane.xlu0 %3214
        %v3216 = vadd.f32 %v3111, %v3113
        %3217 = vadd.xlane.f32.xlu0 %v3216
        %v3218 = vpop.xlane.xlu0 %3217
        %v3219 = vadd.f32 %v3115, %v3117
        %3220 = vadd.xlane.f32.xlu0 %v3219
        %v3221 = vpop.xlane.xlu0 %3220
        %v3222 = vadd.f32 %v3119, %v3121
        %3223 = vadd.xlane.f32.xlu0 %v3222
        %v3224 = vpop.xlane.xlu0 %3223
        %v3225 = vadd.f32 %v3123, %v3125
        %3226 = vadd.xlane.f32.xlu0 %v3225
        %v3227 = vpop.xlane.xlu0 %3226
        %v3228 = vadd.f32 %v3127, %v3129
        %3229 = vadd.xlane.f32.xlu0 %v3228
        %v3230 = vpop.xlane.xlu0 %3229
        %v3231 = vadd.f32 %v3131, %v3133
        %3232 = vadd.xlane.f32.xlu0 %v3231
        %v3233 = vpop.xlane.xlu0 %3232
        %v3234 = vadd.f32 %v3135, %v3137
        %3235 = vadd.xlane.f32.xlu0 %v3234
        %v3236 = vpop.xlane.xlu0 %3235
        %v3237 = vadd.f32 %v3139, %v3141
        %3238 = vadd.xlane.f32.xlu0 %v3237
        %v3239 = vpop.xlane.xlu0 %3238
        %v3240 = vadd.f32 %v3143, %v3145
        %3241 = vadd.xlane.f32.xlu0 %v3240
        %v3242 = vpop.xlane.xlu0 %3241
        %v3243 = vadd.f32 %v3147, %v3149
        %3244 = vadd.xlane.f32.xlu0 %v3243
        %v3245 = vpop.xlane.xlu0 %3244
        %v3246 = vrcp.pop %v3152
        %v3247 = vrcp.pop %v3155
        %v3248 = vrcp.pop %v3158
        %v3249 = vrcp.pop %v3161
        %v3250 = vrcp.pop %v3164
        %v3251 = vrcp.pop %v3167
        %v3252 = vrcp.pop %v3170
        %v3253 = vrcp.pop %v3173
        %v3254 = vrcp.pop %v3176
        %v3255 = vrcp.pop %v3179
        %v3256 = vrcp.pop %v3182
        %v3257 = vrcp.pop %v3185
        %v3258 = vrcp.pop %v3188
        %v3259 = vrcp.pop %v3191
        %v3260 = vrcp.pop %v3194
        %v3261 = vrcp.pop %v3197
        %v3262 = vrcp.pop %v3200
        %v3263 = vrcp.pop %v3203
        %v3264 = vrcp.pop %v3206
        %v3265 = vrcp.pop %v3209
        %v3266 = vrcp.pop %v3212
        %v3267 = vrcp.pop %v3215
        %v3268 = vrcp.pop %v3218
        %v3269 = vrcp.pop %v3221
        %v3270 = vrcp.pop %v3224
        %v3271 = vrcp.pop %v3227
        %v3272 = vrcp.pop %v3230
        %v3273 = vrcp.pop %v3233
        %v3274 = vrcp.pop %v3236
        %v3275 = vrcp.pop %v3239
        %v3276 = vrcp.pop %v3242
        %v3277 = vrcp.pop %v3245
        %v3278 = vmul.f32 %v3023, %v3246
        %v3279 = vmul.f32 %v3025, %v3246
        %v3280 = vmul.f32 %v3027, %v3247
        %v3281 = vmul.f32 %v3029, %v3247
        %v3282 = vmul.f32 %v3031, %v3248
        %v3283 = vmul.f32 %v3033, %v3248
        %v3284 = vmul.f32 %v3035, %v3249
        %v3285 = vmul.f32 %v3037, %v3249
        %v3286 = vmul.f32 %v3039, %v3250
        %v3287 = vmul.f32 %v3041, %v3250
        %v3288 = vmul.f32 %v3043, %v3251
        %v3289 = vmul.f32 %v3045, %v3251
        %v3290 = vmul.f32 %v3047, %v3252
        %v3291 = vmul.f32 %v3049, %v3252
        %v3292 = vmul.f32 %v3051, %v3253
        %v3293 = vmul.f32 %v3053, %v3253
        %v3294 = vmul.f32 %v3055, %v3254
        %v3295 = vmul.f32 %v3057, %v3254
        %v3296 = vmul.f32 %v3059, %v3255
        %v3297 = vmul.f32 %v3061, %v3255
        %v3298 = vmul.f32 %v3063, %v3256
        %v3299 = vmul.f32 %v3065, %v3256
        %v3300 = vmul.f32 %v3067, %v3257
        %v3301 = vmul.f32 %v3069, %v3257
        %v3302 = vmul.f32 %v3071, %v3258
        %v3303 = vmul.f32 %v3073, %v3258
        %v3304 = vmul.f32 %v3075, %v3259
        %v3305 = vmul.f32 %v3077, %v3259
        %v3306 = vmul.f32 %v3079, %v3260
        %v3307 = vmul.f32 %v3081, %v3260
        %v3308 = vmul.f32 %v3083, %v3261
        %v3309 = vmul.f32 %v3085, %v3261
        %v3310 = vmul.f32 %v3087, %v3262
        %v3311 = vmul.f32 %v3089, %v3262
        %v3312 = vmul.f32 %v3091, %v3263
        %v3313 = vmul.f32 %v3093, %v3263
        %v3314 = vmul.f32 %v3095, %v3264
        %v3315 = vmul.f32 %v3097, %v3264
        %v3316 = vmul.f32 %v3099, %v3265
        %v3317 = vmul.f32 %v3101, %v3265
        %v3318 = vmul.f32 %v3103, %v3266
        %v3319 = vmul.f32 %v3105, %v3266
        %v3320 = vmul.f32 %v3107, %v3267
        %v3321 = vmul.f32 %v3109, %v3267
        %v3322 = vmul.f32 %v3111, %v3268
        %v3323 = vmul.f32 %v3113, %v3268
        %v3324 = vmul.f32 %v3115, %v3269
        %v3325 = vmul.f32 %v3117, %v3269
        %v3326 = vmul.f32 %v3119, %v3270
        %v3327 = vmul.f32 %v3121, %v3270
        %v3328 = vmul.f32 %v3123, %v3271
        %v3329 = vmul.f32 %v3125, %v3271
        %v3330 = vmul.f32 %v3127, %v3272
        %v3331 = vmul.f32 %v3129, %v3272
        %v3332 = vmul.f32 %v3131, %v3273
        %v3333 = vmul.f32 %v3133, %v3273
        %v3334 = vmul.f32 %v3135, %v3274
        %v3335 = vmul.f32 %v3137, %v3274
        %v3336 = vmul.f32 %v3139, %v3275
        %v3337 = vmul.f32 %v3141, %v3275
        %v3338 = vmul.f32 %v3143, %v3276
        %v3339 = vmul.f32 %v3145, %v3276
        %v3340 = vmul.f32 %v3147, %v3277
        %v3341 = vmul.f32 %v3149, %v3277
        %v3342 = vpack.c.bf16 %v3280, %v3278
        %v3343 = vpack.c.bf16 %v3281, %v3279
        %v3344 = vpack.c.bf16 %v3284, %v3282
        %v3345 = vpack.c.bf16 %v3285, %v3283
        %v3346 = vpack.c.bf16 %v3288, %v3286
        %v3347 = vpack.c.bf16 %v3289, %v3287
        %v3348 = vpack.c.bf16 %v3292, %v3290
        %v3349 = vpack.c.bf16 %v3293, %v3291
        %v3350 = vpack.c.bf16 %v3296, %v3294
        %v3351 = vpack.c.bf16 %v3297, %v3295
        %v3352 = vpack.c.bf16 %v3300, %v3298
        %v3353 = vpack.c.bf16 %v3301, %v3299
        %v3354 = vpack.c.bf16 %v3304, %v3302
        %v3355 = vpack.c.bf16 %v3305, %v3303
        %v3356 = vpack.c.bf16 %v3308, %v3306
        %v3357 = vpack.c.bf16 %v3309, %v3307
        %v3358 = vpack.c.bf16 %v3312, %v3310
        %v3359 = vpack.c.bf16 %v3313, %v3311
        %v3360 = vpack.c.bf16 %v3316, %v3314
        %v3361 = vpack.c.bf16 %v3317, %v3315
        %v3362 = vpack.c.bf16 %v3320, %v3318
        %v3363 = vpack.c.bf16 %v3321, %v3319
        %v3364 = vpack.c.bf16 %v3324, %v3322
        %v3365 = vpack.c.bf16 %v3325, %v3323
        %v3366 = vpack.c.bf16 %v3328, %v3326
        %v3367 = vpack.c.bf16 %v3329, %v3327
        %v3368 = vpack.c.bf16 %v3332, %v3330
        %v3369 = vpack.c.bf16 %v3333, %v3331
        %v3370 = vpack.c.bf16 %v3336, %v3334
        %v3371 = vpack.c.bf16 %v3337, %v3335
        %v3372 = vpack.c.bf16 %v3340, %v3338
        %v3373 = vpack.c.bf16 %v3341, %v3339
        %3374 = vrot.lane.b32.xlu0 %v2268, 96
        %v3375 = vpop.permute.xlu0 %3374
        %3376 = vrot.lane.b32.xlu0 %v2269, 96
        %v3377 = vpop.permute.xlu0 %3376
        %3378 = vrot.lane.b32.xlu0 %v2270, 96
        %v3379 = vpop.permute.xlu0 %3378
        %3380 = vrot.lane.b32.xlu0 %v2271, 96
        %v3381 = vpop.permute.xlu0 %3380
        %3382 = vrot.lane.b32.xlu0 %v2272, 96
        %v3383 = vpop.permute.xlu0 %3382
        %3384 = vrot.lane.b32.xlu0 %v2273, 96
        %v3385 = vpop.permute.xlu0 %3384
        %3386 = vrot.lane.b32.xlu0 %v2274, 96
        %v3387 = vpop.permute.xlu0 %3386
        %3388 = vrot.lane.b32.xlu0 %v2275, 96
        %v3389 = vpop.permute.xlu0 %3388
        %3390 = vrot.lane.b32.xlu0 %v2276, 96
        %v3391 = vpop.permute.xlu0 %3390
        %3392 = vrot.lane.b32.xlu0 %v2277, 96
        %v3393 = vpop.permute.xlu0 %3392
        %3394 = vrot.lane.b32.xlu0 %v2278, 96
        %v3395 = vpop.permute.xlu0 %3394
        %3396 = vrot.lane.b32.xlu0 %v2279, 96
        %v3397 = vpop.permute.xlu0 %3396
        %3398 = vrot.lane.b32.xlu0 %v2280, 96
        %v3399 = vpop.permute.xlu0 %3398
        %3400 = vrot.lane.b32.xlu0 %v2281, 96
        %v3401 = vpop.permute.xlu0 %3400
        %3402 = vrot.lane.b32.xlu0 %v2282, 96
        %v3403 = vpop.permute.xlu0 %3402
        %3404 = vrot.lane.b32.xlu0 %v2283, 96
        %v3405 = vpop.permute.xlu0 %3404
        %3422 = vmatprep.subr.bf16.mxu0 0
        %3423 = vmatpush1.bf16.msra.mxu0 %v3389
        %3424 = vmatprep.subr.bf16.mxu0 0
        %3425 = vmatpush1.bf16.msra.mxu0 %v3387
        %3426 = vmatprep.subr.bf16.mxu0 0
        %3427 = vmatpush1.bf16.msra.mxu0 %v3385
        %3428 = vmatprep.subr.bf16.mxu0 0
        %3429 = vmatpush1.bf16.msra.mxu0 %v3383
        %3430 = vmatprep.subr.bf16.mxu0 0
        %3431 = vmatpush1.bf16.msra.mxu0 %v3381
        %3432 = vmatprep.subr.bf16.mxu0 0
        %3433 = vmatpush1.bf16.msra.mxu0 %v3379
        %3434 = vmatprep.subr.bf16.mxu0 0
        %3435 = vmatpush1.bf16.msra.mxu0 %v3377
        %3436 = vmatprep.subr.bf16.mxu0 0
        %3437 = vmatpush1.bf16.msra.mxu0 %v3375
        %3438 = vmatprep.subr.bf16.mxu0 0
        %3439 = vmatpush2.bf16.msra.mxu0 %v3405
        %3440 = vmatprep.subr.bf16.mxu0 0
        %3441 = vmatpush2.bf16.msra.mxu0 %v3403
        %3442 = vmatprep.subr.bf16.mxu0 0
        %3443 = vmatpush2.bf16.msra.mxu0 %v3401
        %3444 = vmatprep.subr.bf16.mxu0 0
        %3445 = vmatpush2.bf16.msra.mxu0 %v3399
        %3446 = vmatprep.subr.bf16.mxu0 0
        %3447 = vmatpush2.bf16.msra.mxu0 %v3397
        %3448 = vmatprep.subr.bf16.mxu0 0
        %3449 = vmatpush2.bf16.msra.mxu0 %v3395
        %3450 = vmatprep.subr.bf16.mxu0 0
        %3451 = vmatpush2.bf16.msra.mxu0 %v3393
        %3452 = vmatprep.subr.bf16.mxu0 0
        %3453 = vmatpush2.bf16.msra.mxu0 %v3391
        %3454 = vmatprep.mubr.bf16.mxu0 %v3343
        %3455 = vmatmul.mubr.bf16.gmra.mxu0 %v3342
        %v3456 = vpop.f32.mrf.mxu0
        %v3457 = vadd.f32 0.0, %v3456
        %v3458 = vpop.f32.mrf.mxu0
        %v3459 = vpop.f32.mrf.mxu0
        %v3460 = vadd.f32 0.0, %v3459
        %v3461 = vpop.f32.mrf.mxu0
        %3462 = vmatprep.mubr.bf16.mxu0 %v3345
        %3463 = vmatmul.mubr.bf16.gmra.mxu0 %v3344
        %v3464 = vpop.f32.mrf.mxu0
        %v3465 = vadd.f32 0.0, %v3464
        %v3466 = vpop.f32.mrf.mxu0
        %v3467 = vpop.f32.mrf.mxu0
        %v3468 = vadd.f32 0.0, %v3467
        %v3469 = vpop.f32.mrf.mxu0
        %3470 = vmatprep.mubr.bf16.mxu0 %v3347
        %3471 = vmatmul.mubr.bf16.gmra.mxu0 %v3346
        %v3472 = vpop.f32.mrf.mxu0
        %v3473 = vadd.f32 0.0, %v3472
        %v3474 = vpop.f32.mrf.mxu0
        %v3475 = vpop.f32.mrf.mxu0
        %v3476 = vadd.f32 0.0, %v3475
        %v3477 = vpop.f32.mrf.mxu0
        %3478 = vmatprep.mubr.bf16.mxu0 %v3349
        %3479 = vmatmul.mubr.bf16.gmra.mxu0 %v3348
        %v3480 = vpop.f32.mrf.mxu0
        %v3481 = vadd.f32 0.0, %v3480
        %v3482 = vpop.f32.mrf.mxu0
        %v3483 = vpop.f32.mrf.mxu0
        %v3484 = vadd.f32 0.0, %v3483
        %v3485 = vpop.f32.mrf.mxu0
        %3486 = vmatprep.mubr.bf16.mxu0 %v3351
        %3487 = vmatmul.mubr.bf16.gmra.mxu0 %v3350
        %v3488 = vpop.f32.mrf.mxu0
        %v3489 = vadd.f32 0.0, %v3488
        %v3490 = vpop.f32.mrf.mxu0
        %v3491 = vpop.f32.mrf.mxu0
        %v3492 = vadd.f32 0.0, %v3491
        %v3493 = vpop.f32.mrf.mxu0
        %3494 = vmatprep.mubr.bf16.mxu0 %v3353
        %3495 = vmatmul.mubr.bf16.gmra.mxu0 %v3352
        %v3496 = vpop.f32.mrf.mxu0
        %v3497 = vadd.f32 0.0, %v3496
        %v3498 = vpop.f32.mrf.mxu0
        %v3499 = vpop.f32.mrf.mxu0
        %v3500 = vadd.f32 0.0, %v3499
        %v3501 = vpop.f32.mrf.mxu0
        %3502 = vmatprep.mubr.bf16.mxu0 %v3355
        %3503 = vmatmul.mubr.bf16.gmra.mxu0 %v3354
        %v3504 = vpop.f32.mrf.mxu0
        %v3505 = vadd.f32 0.0, %v3504
        %v3506 = vpop.f32.mrf.mxu0
        %v3507 = vpop.f32.mrf.mxu0
        %v3508 = vadd.f32 0.0, %v3507
        %v3509 = vpop.f32.mrf.mxu0
        %3510 = vmatprep.mubr.bf16.mxu0 %v3357
        %3511 = vmatmul.mubr.bf16.gmra.mxu0 %v3356
        %v3512 = vpop.f32.mrf.mxu0
        %v3513 = vadd.f32 0.0, %v3512
        %v3514 = vpop.f32.mrf.mxu0
        %v3515 = vpop.f32.mrf.mxu0
        %v3516 = vadd.f32 0.0, %v3515
        %v3517 = vpop.f32.mrf.mxu0
        %3518 = vmatprep.mubr.bf16.mxu0 %v3359
        %3519 = vmatmul.mubr.bf16.gmra.mxu0 %v3358
        %v3520 = vpop.f32.mrf.mxu0
        %v3521 = vadd.f32 0.0, %v3520
        %v3522 = vpop.f32.mrf.mxu0
        %v3523 = vpop.f32.mrf.mxu0
        %v3524 = vadd.f32 0.0, %v3523
        %v3525 = vpop.f32.mrf.mxu0
        %3526 = vmatprep.mubr.bf16.mxu0 %v3361
        %3527 = vmatmul.mubr.bf16.gmra.mxu0 %v3360
        %v3528 = vpop.f32.mrf.mxu0
        %v3529 = vadd.f32 0.0, %v3528
        %v3530 = vpop.f32.mrf.mxu0
        %v3531 = vpop.f32.mrf.mxu0
        %v3532 = vadd.f32 0.0, %v3531
        %v3533 = vpop.f32.mrf.mxu0
        %3534 = vmatprep.mubr.bf16.mxu0 %v3363
        %3535 = vmatmul.mubr.bf16.gmra.mxu0 %v3362
        %v3536 = vpop.f32.mrf.mxu0
        %v3537 = vadd.f32 0.0, %v3536
        %v3538 = vpop.f32.mrf.mxu0
        %v3539 = vpop.f32.mrf.mxu0
        %v3540 = vadd.f32 0.0, %v3539
        %v3541 = vpop.f32.mrf.mxu0
        %3542 = vmatprep.mubr.bf16.mxu0 %v3365
        %3543 = vmatmul.mubr.bf16.gmra.mxu0 %v3364
        %v3544 = vpop.f32.mrf.mxu0
        %v3545 = vadd.f32 0.0, %v3544
        %v3546 = vpop.f32.mrf.mxu0
        %v3547 = vpop.f32.mrf.mxu0
        %v3548 = vadd.f32 0.0, %v3547
        %v3549 = vpop.f32.mrf.mxu0
        %3550 = vmatprep.mubr.bf16.mxu0 %v3367
        %3551 = vmatmul.mubr.bf16.gmra.mxu0 %v3366
        %v3552 = vpop.f32.mrf.mxu0
        %v3553 = vadd.f32 0.0, %v3552
        %v3554 = vpop.f32.mrf.mxu0
        %v3555 = vpop.f32.mrf.mxu0
        %v3556 = vadd.f32 0.0, %v3555
        %v3557 = vpop.f32.mrf.mxu0
        %3558 = vmatprep.mubr.bf16.mxu0 %v3369
        %3559 = vmatmul.mubr.bf16.gmra.mxu0 %v3368
        %v3560 = vpop.f32.mrf.mxu0
        %v3561 = vadd.f32 0.0, %v3560
        %v3562 = vpop.f32.mrf.mxu0
        %v3563 = vpop.f32.mrf.mxu0
        %v3564 = vadd.f32 0.0, %v3563
        %v3565 = vpop.f32.mrf.mxu0
        %3566 = vmatprep.mubr.bf16.mxu0 %v3371
        %3567 = vmatmul.mubr.bf16.gmra.mxu0 %v3370
        %v3568 = vpop.f32.mrf.mxu0
        %v3569 = vadd.f32 0.0, %v3568
        %v3570 = vpop.f32.mrf.mxu0
        %v3571 = vpop.f32.mrf.mxu0
        %v3572 = vadd.f32 0.0, %v3571
        %v3573 = vpop.f32.mrf.mxu0
        %3574 = vmatprep.mubr.bf16.mxu0 %v3373
        %3575 = vmatmul.mubr.bf16.gmra.mxu0 %v3372
        %v3576 = vpop.f32.mrf.mxu0
        %v3577 = vadd.f32 0.0, %v3576
        %v3578 = vpop.f32.mrf.mxu0
        %v3579 = vpop.f32.mrf.mxu0
        %v3580 = vadd.f32 0.0, %v3579
        %v3581 = vpop.f32.mrf.mxu0
        %3582 = vdwg.mxu0
        %3615 = vrot.lane.b32.xlu0 %v3457, 32
        %v3616 = vpop.permute.xlu0 %3615
        %3617 = vrot.lane.b32.xlu0 %v3460, 32
        %v3618 = vpop.permute.xlu0 %3617
        %3619 = vrot.lane.b32.xlu0 %v3465, 32
        %v3620 = vpop.permute.xlu0 %3619
        %3621 = vrot.lane.b32.xlu0 %v3468, 32
        %v3622 = vpop.permute.xlu0 %3621
        %3623 = vrot.lane.b32.xlu0 %v3473, 32
        %v3624 = vpop.permute.xlu0 %3623
        %3625 = vrot.lane.b32.xlu0 %v3476, 32
        %v3626 = vpop.permute.xlu0 %3625
        %3627 = vrot.lane.b32.xlu0 %v3481, 32
        %v3628 = vpop.permute.xlu0 %3627
        %3629 = vrot.lane.b32.xlu0 %v3484, 32
        %v3630 = vpop.permute.xlu0 %3629
        %3631 = vrot.lane.b32.xlu0 %v3489, 32
        %v3632 = vpop.permute.xlu0 %3631
        %3633 = vrot.lane.b32.xlu0 %v3492, 32
        %v3634 = vpop.permute.xlu0 %3633
        %3635 = vrot.lane.b32.xlu0 %v3497, 32
        %v3636 = vpop.permute.xlu0 %3635
        %3637 = vrot.lane.b32.xlu0 %v3500, 32
        %v3638 = vpop.permute.xlu0 %3637
        %3639 = vrot.lane.b32.xlu0 %v3505, 32
        %v3640 = vpop.permute.xlu0 %3639
        %3641 = vrot.lane.b32.xlu0 %v3508, 32
        %v3642 = vpop.permute.xlu0 %3641
        %3643 = vrot.lane.b32.xlu0 %v3513, 32
        %v3644 = vpop.permute.xlu0 %3643
        %3645 = vrot.lane.b32.xlu0 %v3516, 32
        %v3646 = vpop.permute.xlu0 %3645
        %3647 = vrot.lane.b32.xlu0 %v3521, 32
        %v3648 = vpop.permute.xlu0 %3647
        %3649 = vrot.lane.b32.xlu0 %v3524, 32
        %v3650 = vpop.permute.xlu0 %3649
        %3651 = vrot.lane.b32.xlu0 %v3529, 32
        %v3652 = vpop.permute.xlu0 %3651
        %3653 = vrot.lane.b32.xlu0 %v3532, 32
        %v3654 = vpop.permute.xlu0 %3653
        %3655 = vrot.lane.b32.xlu0 %v3537, 32
        %v3656 = vpop.permute.xlu0 %3655
        %3657 = vrot.lane.b32.xlu0 %v3540, 32
        %v3658 = vpop.permute.xlu0 %3657
        %3659 = vrot.lane.b32.xlu0 %v3545, 32
        %v3660 = vpop.permute.xlu0 %3659
        %3661 = vrot.lane.b32.xlu0 %v3548, 32
        %v3662 = vpop.permute.xlu0 %3661
        %3663 = vrot.lane.b32.xlu0 %v3553, 32
        %v3664 = vpop.permute.xlu0 %3663
        %3665 = vrot.lane.b32.xlu0 %v3556, 32
        %v3666 = vpop.permute.xlu0 %3665
        %3667 = vrot.lane.b32.xlu0 %v3561, 32
        %v3668 = vpop.permute.xlu0 %3667
        %3669 = vrot.lane.b32.xlu0 %v3564, 32
        %v3670 = vpop.permute.xlu0 %3669
        %3671 = vrot.lane.b32.xlu0 %v3569, 32
        %v3672 = vpop.permute.xlu0 %3671
        %3673 = vrot.lane.b32.xlu0 %v3572, 32
        %v3674 = vpop.permute.xlu0 %3673
        %3675 = vrot.lane.b32.xlu0 %v3577, 32
        %v3676 = vpop.permute.xlu0 %3675
        %3677 = vrot.lane.b32.xlu0 %v3580, 32
        %v3678 = vpop.permute.xlu0 %3677
        %vm3711 = vcmask 523520
        %3712 = vst.msk [vmem:[#allocation3] sm:$0xff] %vm3711, %v3616
        %3713 = vst.msk [vmem:[#allocation3 + $0x8] sm:$0xff] %vm3711, %v3618
        %3714 = vst.msk [vmem:[#allocation3 + $0x10] sm:$0xff] %vm3711, %v3620
        %3715 = vst.msk [vmem:[#allocation3 + $0x18] sm:$0xff] %vm3711, %v3622
        %3716 = vst.msk [vmem:[#allocation3 + $0x20] sm:$0xff] %vm3711, %v3624
        %3717 = vst.msk [vmem:[#allocation3 + $0x28] sm:$0xff] %vm3711, %v3626
        %3718 = vst.msk [vmem:[#allocation3 + $0x30] sm:$0xff] %vm3711, %v3628
        %3719 = vst.msk [vmem:[#allocation3 + $0x38] sm:$0xff] %vm3711, %v3630
        %3720 = vst.msk [vmem:[#allocation3 + $0x40] sm:$0xff] %vm3711, %v3632
        %3721 = vst.msk [vmem:[#allocation3 + $0x48] sm:$0xff] %vm3711, %v3634
        %3722 = vst.msk [vmem:[#allocation3 + $0x50] sm:$0xff] %vm3711, %v3636
        %3723 = vst.msk [vmem:[#allocation3 + $0x58] sm:$0xff] %vm3711, %v3638
        %3724 = vst.msk [vmem:[#allocation3 + $0x60] sm:$0xff] %vm3711, %v3640
        %3725 = vst.msk [vmem:[#allocation3 + $0x68] sm:$0xff] %vm3711, %v3642
        %3726 = vst.msk [vmem:[#allocation3 + $0x70] sm:$0xff] %vm3711, %v3644
        %3727 = vst.msk [vmem:[#allocation3 + $0x78] sm:$0xff] %vm3711, %v3646
        %3728 = vst.msk [vmem:[#allocation3 + $0x80] sm:$0xff] %vm3711, %v3648
        %3729 = vst.msk [vmem:[#allocation3 + $0x88] sm:$0xff] %vm3711, %v3650
        %3730 = vst.msk [vmem:[#allocation3 + $0x90] sm:$0xff] %vm3711, %v3652
        %3731 = vst.msk [vmem:[#allocation3 + $0x98] sm:$0xff] %vm3711, %v3654
        %3732 = vst.msk [vmem:[#allocation3 + $0xa0] sm:$0xff] %vm3711, %v3656
        %3733 = vst.msk [vmem:[#allocation3 + $0xa8] sm:$0xff] %vm3711, %v3658
        %3734 = vst.msk [vmem:[#allocation3 + $0xb0] sm:$0xff] %vm3711, %v3660
        %3735 = vst.msk [vmem:[#allocation3 + $0xb8] sm:$0xff] %vm3711, %v3662
        %3736 = vst.msk [vmem:[#allocation3 + $0xc0] sm:$0xff] %vm3711, %v3664
        %3737 = vst.msk [vmem:[#allocation3 + $0xc8] sm:$0xff] %vm3711, %v3666
        %3738 = vst.msk [vmem:[#allocation3 + $0xd0] sm:$0xff] %vm3711, %v3668
        %3739 = vst.msk [vmem:[#allocation3 + $0xd8] sm:$0xff] %vm3711, %v3670
        %3740 = vst.msk [vmem:[#allocation3 + $0xe0] sm:$0xff] %vm3711, %v3672
        %3741 = vst.msk [vmem:[#allocation3 + $0xe8] sm:$0xff] %vm3711, %v3674
        %3742 = vst.msk [vmem:[#allocation3 + $0xf0] sm:$0xff] %vm3711, %v3676
        %3743 = vst.msk [vmem:[#allocation3 + $0xf8] sm:$0xff] %vm3711, %v3678
        %3744 = vrot.lane.b32.xlu0 %v1306, 64
        %v3745 = vpop.permute.xlu0 %3744
        %3746 = vrot.lane.b32.xlu0 %v1307, 64
        %v3747 = vpop.permute.xlu0 %3746
        %3748 = vrot.lane.b32.xlu0 %v1308, 64
        %v3749 = vpop.permute.xlu0 %3748
        %3750 = vrot.lane.b32.xlu0 %v1309, 64
        %v3751 = vpop.permute.xlu0 %3750
        %3752 = vrot.lane.b32.xlu0 %v1310, 64
        %v3753 = vpop.permute.xlu0 %3752
        %3754 = vrot.lane.b32.xlu0 %v1311, 64
        %v3755 = vpop.permute.xlu0 %3754
        %3756 = vrot.lane.b32.xlu0 %v1312, 64
        %v3757 = vpop.permute.xlu0 %3756
        %3758 = vrot.lane.b32.xlu0 %v1313, 64
        %v3759 = vpop.permute.xlu0 %3758
        %3760 = vrot.lane.b32.xlu0 %v1314, 64
        %v3761 = vpop.permute.xlu0 %3760
        %3762 = vrot.lane.b32.xlu0 %v1315, 64
        %v3763 = vpop.permute.xlu0 %3762
        %3764 = vrot.lane.b32.xlu0 %v1316, 64
        %v3765 = vpop.permute.xlu0 %3764
        %3766 = vrot.lane.b32.xlu0 %v1317, 64
        %v3767 = vpop.permute.xlu0 %3766
        %3768 = vrot.lane.b32.xlu0 %v1318, 64
        %v3769 = vpop.permute.xlu0 %3768
        %3770 = vrot.lane.b32.xlu0 %v1319, 64
        %v3771 = vpop.permute.xlu0 %3770
        %3772 = vrot.lane.b32.xlu0 %v1320, 64
        %v3773 = vpop.permute.xlu0 %3772
        %3774 = vrot.lane.b32.xlu0 %v1321, 64
        %v3775 = vpop.permute.xlu0 %3774
        %3776 = vrot.lane.b32.xlu0 %v1418, 64
        %v3777 = vpop.permute.xlu0 %3776
        %3778 = vrot.lane.b32.xlu0 %v1419, 64
        %v3779 = vpop.permute.xlu0 %3778
        %3780 = vrot.lane.b32.xlu0 %v1420, 64
        %v3781 = vpop.permute.xlu0 %3780
        %3782 = vrot.lane.b32.xlu0 %v1421, 64
        %v3783 = vpop.permute.xlu0 %3782
        %3784 = vrot.lane.b32.xlu0 %v1422, 64
        %v3785 = vpop.permute.xlu0 %3784
        %3786 = vrot.lane.b32.xlu0 %v1423, 64
        %v3787 = vpop.permute.xlu0 %3786
        %3788 = vrot.lane.b32.xlu0 %v1424, 64
        %v3789 = vpop.permute.xlu0 %3788
        %3790 = vrot.lane.b32.xlu0 %v1425, 64
        %v3791 = vpop.permute.xlu0 %3790
        %3792 = vrot.lane.b32.xlu0 %v1426, 64
        %v3793 = vpop.permute.xlu0 %3792
        %3794 = vrot.lane.b32.xlu0 %v1427, 64
        %v3795 = vpop.permute.xlu0 %3794
        %3796 = vrot.lane.b32.xlu0 %v1428, 64
        %v3797 = vpop.permute.xlu0 %3796
        %3798 = vrot.lane.b32.xlu0 %v1429, 64
        %v3799 = vpop.permute.xlu0 %3798
        %3800 = vrot.lane.b32.xlu0 %v1430, 64
        %v3801 = vpop.permute.xlu0 %3800
        %3802 = vrot.lane.b32.xlu0 %v1431, 64
        %v3803 = vpop.permute.xlu0 %3802
        %3804 = vrot.lane.b32.xlu0 %v1432, 64
        %v3805 = vpop.permute.xlu0 %3804
        %3806 = vrot.lane.b32.xlu0 %v1433, 64
        %v3807 = vpop.permute.xlu0 %3806
        %v3809 = vsel %vm1434, %v3745, 0
        %v3812 = vsel %vm1434, %v3747, 0
        %v3815 = vsel %vm1434, %v3749, 0
        %v3818 = vsel %vm1434, %v3751, 0
        %v3821 = vsel %vm1434, %v3753, 0
        %v3824 = vsel %vm1434, %v3755, 0
        %v3827 = vsel %vm1434, %v3757, 0
        %v3830 = vsel %vm1434, %v3759, 0
        %v3833 = vsel %vm1434, %v3761, 0
        %v3836 = vsel %vm1434, %v3763, 0
        %v3839 = vsel %vm1434, %v3765, 0
        %v3842 = vsel %vm1434, %v3767, 0
        %v3845 = vsel %vm1434, %v3769, 0
        %v3848 = vsel %vm1434, %v3771, 0
        %v3851 = vsel %vm1434, %v3773, 0
        %v3854 = vsel %vm1434, %v3775, 0
        %v3857 = vsel %vm1434, %v3777, 0
        %v3860 = vsel %vm1434, %v3779, 0
        %v3863 = vsel %vm1434, %v3781, 0
        %v3866 = vsel %vm1434, %v3783, 0
        %v3869 = vsel %vm1434, %v3785, 0
        %v3872 = vsel %vm1434, %v3787, 0
        %v3875 = vsel %vm1434, %v3789, 0
        %v3878 = vsel %vm1434, %v3791, 0
        %v3881 = vsel %vm1434, %v3793, 0
        %v3884 = vsel %vm1434, %v3795, 0
        %v3887 = vsel %vm1434, %v3797, 0
        %v3890 = vsel %vm1434, %v3799, 0
        %v3893 = vsel %vm1434, %v3801, 0
        %v3896 = vsel %vm1434, %v3803, 0
        %v3899 = vsel %vm1434, %v3805, 0
        %v3902 = vsel %vm1434, %v3807, 0
        %3904 = vmatprep.subr.bf16.mxu0 0
        %3905 = vmatpush1.bf16.xpose.msra.mxu0 %v3878
        %3906 = vmatprep.subr.bf16.mxu0 0
        %3907 = vmatpush1.bf16.xpose.msra.mxu0 %v3875
        %3908 = vmatprep.subr.bf16.mxu0 0
        %3909 = vmatpush1.bf16.xpose.msra.mxu0 %v3872
        %3910 = vmatprep.subr.bf16.mxu0 0
        %3911 = vmatpush1.bf16.xpose.msra.mxu0 %v3869
        %3912 = vmatprep.subr.bf16.mxu0 0
        %3913 = vmatpush1.bf16.xpose.msra.mxu0 %v3866
        %3914 = vmatprep.subr.bf16.mxu0 0
        %3915 = vmatpush1.bf16.xpose.msra.mxu0 %v3863
        %3916 = vmatprep.subr.bf16.mxu0 0
        %3917 = vmatpush1.bf16.xpose.msra.mxu0 %v3860
        %3918 = vmatprep.subr.bf16.mxu0 0
        %3919 = vmatpush1.bf16.xpose.msra.mxu0 %v3857
        %3920 = vmatprep.subr.bf16.mxu0 0
        %3921 = vmatpush2.bf16.xpose.msra.mxu0 %v3902
        %3922 = vmatprep.subr.bf16.mxu0 0
        %3923 = vmatpush2.bf16.xpose.msra.mxu0 %v3899
        %3924 = vmatprep.subr.bf16.mxu0 0
        %3925 = vmatpush2.bf16.xpose.msra.mxu0 %v3896
        %3926 = vmatprep.subr.bf16.mxu0 0
        %3927 = vmatpush2.bf16.xpose.msra.mxu0 %v3893
        %3928 = vmatprep.subr.bf16.mxu0 0
        %3929 = vmatpush2.bf16.xpose.msra.mxu0 %v3890
        %3930 = vmatprep.subr.bf16.mxu0 0
        %3931 = vmatpush2.bf16.xpose.msra.mxu0 %v3887
        %3932 = vmatprep.subr.bf16.mxu0 0
        %3933 = vmatpush2.bf16.xpose.msra.mxu0 %v3884
        %3934 = vmatprep.subr.bf16.mxu0 0
        %3935 = vmatpush2.bf16.xpose.msra.mxu0 %v3881
        %3936 = vmatprep.mubr.bf16.mxu0 0
        %3937 = vmatmul.mubr.bf16.gmra.mxu0 %v3809
        %v3938 = vpop.f32.mrf.mxu0
        %v3939 = vadd.f32 0.0, %v3938
        %v3940 = vpop.f32.mrf.mxu0
        %v3941 = vadd.f32 0.0, %v3940
        %v3942 = vpop.f32.mrf.mxu0
        %v3943 = vadd.f32 0.0, %v3942
        %v3944 = vpop.f32.mrf.mxu0
        %v3945 = vadd.f32 0.0, %v3944
        %3946 = vmatprep.mubr.bf16.mxu0 0
        %3947 = vmatmul.mubr.bf16.gmra.mxu0 %v3812
        %v3948 = vpop.f32.mrf.mxu0
        %v3949 = vadd.f32 0.0, %v3948
        %v3950 = vpop.f32.mrf.mxu0
        %v3951 = vadd.f32 0.0, %v3950
        %v3952 = vpop.f32.mrf.mxu0
        %v3953 = vadd.f32 0.0, %v3952
        %v3954 = vpop.f32.mrf.mxu0
        %v3955 = vadd.f32 0.0, %v3954
        %3956 = vmatprep.mubr.bf16.mxu0 0
        %3957 = vmatmul.mubr.bf16.gmra.mxu0 %v3815
        %v3958 = vpop.f32.mrf.mxu0
        %v3959 = vadd.f32 0.0, %v3958
        %v3960 = vpop.f32.mrf.mxu0
        %v3961 = vadd.f32 0.0, %v3960
        %v3962 = vpop.f32.mrf.mxu0
        %v3963 = vadd.f32 0.0, %v3962
        %v3964 = vpop.f32.mrf.mxu0
        %v3965 = vadd.f32 0.0, %v3964
        %3966 = vmatprep.mubr.bf16.mxu0 0
        %3967 = vmatmul.mubr.bf16.gmra.mxu0 %v3818
        %v3968 = vpop.f32.mrf.mxu0
        %v3969 = vadd.f32 0.0, %v3968
        %v3970 = vpop.f32.mrf.mxu0
        %v3971 = vadd.f32 0.0, %v3970
        %v3972 = vpop.f32.mrf.mxu0
        %v3973 = vadd.f32 0.0, %v3972
        %v3974 = vpop.f32.mrf.mxu0
        %v3975 = vadd.f32 0.0, %v3974
        %3976 = vmatprep.mubr.bf16.mxu0 0
        %3977 = vmatmul.mubr.bf16.gmra.mxu0 %v3821
        %v3978 = vpop.f32.mrf.mxu0
        %v3979 = vadd.f32 0.0, %v3978
        %v3980 = vpop.f32.mrf.mxu0
        %v3981 = vadd.f32 0.0, %v3980
        %v3982 = vpop.f32.mrf.mxu0
        %v3983 = vadd.f32 0.0, %v3982
        %v3984 = vpop.f32.mrf.mxu0
        %v3985 = vadd.f32 0.0, %v3984
        %3986 = vmatprep.mubr.bf16.mxu0 0
        %3987 = vmatmul.mubr.bf16.gmra.mxu0 %v3824
        %v3988 = vpop.f32.mrf.mxu0
        %v3989 = vadd.f32 0.0, %v3988
        %v3990 = vpop.f32.mrf.mxu0
        %v3991 = vadd.f32 0.0, %v3990
        %v3992 = vpop.f32.mrf.mxu0
        %v3993 = vadd.f32 0.0, %v3992
        %v3994 = vpop.f32.mrf.mxu0
        %v3995 = vadd.f32 0.0, %v3994
        %3996 = vmatprep.mubr.bf16.mxu0 0
        %3997 = vmatmul.mubr.bf16.gmra.mxu0 %v3827
        %v3998 = vpop.f32.mrf.mxu0
        %v3999 = vadd.f32 0.0, %v3998
        %v4000 = vpop.f32.mrf.mxu0
        %v4001 = vadd.f32 0.0, %v4000
        %v4002 = vpop.f32.mrf.mxu0
        %v4003 = vadd.f32 0.0, %v4002
        %v4004 = vpop.f32.mrf.mxu0
        %v4005 = vadd.f32 0.0, %v4004
        %4006 = vmatprep.mubr.bf16.mxu0 0
        %4007 = vmatmul.mubr.bf16.gmra.mxu0 %v3830
        %v4008 = vpop.f32.mrf.mxu0
        %v4009 = vadd.f32 0.0, %v4008
        %v4010 = vpop.f32.mrf.mxu0
        %v4011 = vadd.f32 0.0, %v4010
        %v4012 = vpop.f32.mrf.mxu0
        %v4013 = vadd.f32 0.0, %v4012
        %v4014 = vpop.f32.mrf.mxu0
        %v4015 = vadd.f32 0.0, %v4014
        %4016 = vmatprep.mubr.bf16.mxu0 0
        %4017 = vmatmul.mubr.bf16.gmra.mxu0 %v3833
        %v4018 = vpop.f32.mrf.mxu0
        %v4019 = vadd.f32 0.0, %v4018
        %v4020 = vpop.f32.mrf.mxu0
        %v4021 = vadd.f32 0.0, %v4020
        %v4022 = vpop.f32.mrf.mxu0
        %v4023 = vadd.f32 0.0, %v4022
        %v4024 = vpop.f32.mrf.mxu0
        %v4025 = vadd.f32 0.0, %v4024
        %4026 = vmatprep.mubr.bf16.mxu0 0
        %4027 = vmatmul.mubr.bf16.gmra.mxu0 %v3836
        %v4028 = vpop.f32.mrf.mxu0
        %v4029 = vadd.f32 0.0, %v4028
        %v4030 = vpop.f32.mrf.mxu0
        %v4031 = vadd.f32 0.0, %v4030
        %v4032 = vpop.f32.mrf.mxu0
        %v4033 = vadd.f32 0.0, %v4032
        %v4034 = vpop.f32.mrf.mxu0
        %v4035 = vadd.f32 0.0, %v4034
        %4036 = vmatprep.mubr.bf16.mxu0 0
        %4037 = vmatmul.mubr.bf16.gmra.mxu0 %v3839
        %v4038 = vpop.f32.mrf.mxu0
        %v4039 = vadd.f32 0.0, %v4038
        %v4040 = vpop.f32.mrf.mxu0
        %v4041 = vadd.f32 0.0, %v4040
        %v4042 = vpop.f32.mrf.mxu0
        %v4043 = vadd.f32 0.0, %v4042
        %v4044 = vpop.f32.mrf.mxu0
        %v4045 = vadd.f32 0.0, %v4044
        %4046 = vmatprep.mubr.bf16.mxu0 0
        %4047 = vmatmul.mubr.bf16.gmra.mxu0 %v3842
        %v4048 = vpop.f32.mrf.mxu0
        %v4049 = vadd.f32 0.0, %v4048
        %v4050 = vpop.f32.mrf.mxu0
        %v4051 = vadd.f32 0.0, %v4050
        %v4052 = vpop.f32.mrf.mxu0
        %v4053 = vadd.f32 0.0, %v4052
        %v4054 = vpop.f32.mrf.mxu0
        %v4055 = vadd.f32 0.0, %v4054
        %4056 = vmatprep.mubr.bf16.mxu0 0
        %4057 = vmatmul.mubr.bf16.gmra.mxu0 %v3845
        %v4058 = vpop.f32.mrf.mxu0
        %v4059 = vadd.f32 0.0, %v4058
        %v4060 = vpop.f32.mrf.mxu0
        %v4061 = vadd.f32 0.0, %v4060
        %v4062 = vpop.f32.mrf.mxu0
        %v4063 = vadd.f32 0.0, %v4062
        %v4064 = vpop.f32.mrf.mxu0
        %v4065 = vadd.f32 0.0, %v4064
        %4066 = vmatprep.mubr.bf16.mxu0 0
        %4067 = vmatmul.mubr.bf16.gmra.mxu0 %v3848
        %v4068 = vpop.f32.mrf.mxu0
        %v4069 = vadd.f32 0.0, %v4068
        %v4070 = vpop.f32.mrf.mxu0
        %v4071 = vadd.f32 0.0, %v4070
        %v4072 = vpop.f32.mrf.mxu0
        %v4073 = vadd.f32 0.0, %v4072
        %v4074 = vpop.f32.mrf.mxu0
        %v4075 = vadd.f32 0.0, %v4074
        %4076 = vmatprep.mubr.bf16.mxu0 0
        %4077 = vmatmul.mubr.bf16.gmra.mxu0 %v3851
        %v4078 = vpop.f32.mrf.mxu0
        %v4079 = vadd.f32 0.0, %v4078
        %v4080 = vpop.f32.mrf.mxu0
        %v4081 = vadd.f32 0.0, %v4080
        %v4082 = vpop.f32.mrf.mxu0
        %v4083 = vadd.f32 0.0, %v4082
        %v4084 = vpop.f32.mrf.mxu0
        %v4085 = vadd.f32 0.0, %v4084
        %4086 = vmatprep.mubr.bf16.mxu0 0
        %4087 = vmatmul.mubr.bf16.gmra.mxu0 %v3854
        %v4088 = vpop.f32.mrf.mxu0
        %v4089 = vadd.f32 0.0, %v4088
        %v4090 = vpop.f32.mrf.mxu0
        %v4091 = vadd.f32 0.0, %v4090
        %v4092 = vpop.f32.mrf.mxu0
        %v4093 = vadd.f32 0.0, %v4092
        %v4094 = vpop.f32.mrf.mxu0
        %v4095 = vadd.f32 0.0, %v4094
        %4096 = vdwg.mxu0
        %v4097 = vmax.f32 %v3939, %v3941
        %4098 = vmax.xlane.f32.xlu0 %v4097
        %v4099 = vpop.xlane.xlu0 %4098
        %v4100 = vmax.f32 %v3943, %v3945
        %4101 = vmax.xlane.f32.xlu0 %v4100
        %v4102 = vpop.xlane.xlu0 %4101
        %v4103 = vmax.f32 %v3949, %v3951
        %4104 = vmax.xlane.f32.xlu0 %v4103
        %v4105 = vpop.xlane.xlu0 %4104
        %v4106 = vmax.f32 %v3953, %v3955
        %4107 = vmax.xlane.f32.xlu0 %v4106
        %v4108 = vpop.xlane.xlu0 %4107
        %v4109 = vmax.f32 %v3959, %v3961
        %4110 = vmax.xlane.f32.xlu0 %v4109
        %v4111 = vpop.xlane.xlu0 %4110
        %v4112 = vmax.f32 %v3963, %v3965
        %4113 = vmax.xlane.f32.xlu0 %v4112
        %v4114 = vpop.xlane.xlu0 %4113
        %v4115 = vmax.f32 %v3969, %v3971
        %4116 = vmax.xlane.f32.xlu0 %v4115
        %v4117 = vpop.xlane.xlu0 %4116
        %v4118 = vmax.f32 %v3973, %v3975
        %4119 = vmax.xlane.f32.xlu0 %v4118
        %v4120 = vpop.xlane.xlu0 %4119
        %v4121 = vmax.f32 %v3979, %v3981
        %4122 = vmax.xlane.f32.xlu0 %v4121
        %v4123 = vpop.xlane.xlu0 %4122
        %v4124 = vmax.f32 %v3983, %v3985
        %4125 = vmax.xlane.f32.xlu0 %v4124
        %v4126 = vpop.xlane.xlu0 %4125
        %v4127 = vmax.f32 %v3989, %v3991
        %4128 = vmax.xlane.f32.xlu0 %v4127
        %v4129 = vpop.xlane.xlu0 %4128
        %v4130 = vmax.f32 %v3993, %v3995
        %4131 = vmax.xlane.f32.xlu0 %v4130
        %v4132 = vpop.xlane.xlu0 %4131
        %v4133 = vmax.f32 %v3999, %v4001
        %4134 = vmax.xlane.f32.xlu0 %v4133
        %v4135 = vpop.xlane.xlu0 %4134
        %v4136 = vmax.f32 %v4003, %v4005
        %4137 = vmax.xlane.f32.xlu0 %v4136
        %v4138 = vpop.xlane.xlu0 %4137
        %v4139 = vmax.f32 %v4009, %v4011
        %4140 = vmax.xlane.f32.xlu0 %v4139
        %v4141 = vpop.xlane.xlu0 %4140
        %v4142 = vmax.f32 %v4013, %v4015
        %4143 = vmax.xlane.f32.xlu0 %v4142
        %v4144 = vpop.xlane.xlu0 %4143
        %v4145 = vmax.f32 %v4019, %v4021
        %4146 = vmax.xlane.f32.xlu0 %v4145
        %v4147 = vpop.xlane.xlu0 %4146
        %v4148 = vmax.f32 %v4023, %v4025
        %4149 = vmax.xlane.f32.xlu0 %v4148
        %v4150 = vpop.xlane.xlu0 %4149
        %v4151 = vmax.f32 %v4029, %v4031
        %4152 = vmax.xlane.f32.xlu0 %v4151
        %v4153 = vpop.xlane.xlu0 %4152
        %v4154 = vmax.f32 %v4033, %v4035
        %4155 = vmax.xlane.f32.xlu0 %v4154
        %v4156 = vpop.xlane.xlu0 %4155
        %v4157 = vmax.f32 %v4039, %v4041
        %4158 = vmax.xlane.f32.xlu0 %v4157
        %v4159 = vpop.xlane.xlu0 %4158
        %v4160 = vmax.f32 %v4043, %v4045
        %4161 = vmax.xlane.f32.xlu0 %v4160
        %v4162 = vpop.xlane.xlu0 %4161
        %v4163 = vmax.f32 %v4049, %v4051
        %4164 = vmax.xlane.f32.xlu0 %v4163
        %v4165 = vpop.xlane.xlu0 %4164
        %v4166 = vmax.f32 %v4053, %v4055
        %4167 = vmax.xlane.f32.xlu0 %v4166
        %v4168 = vpop.xlane.xlu0 %4167
        %v4169 = vmax.f32 %v4059, %v4061
        %4170 = vmax.xlane.f32.xlu0 %v4169
        %v4171 = vpop.xlane.xlu0 %4170
        %v4172 = vmax.f32 %v4063, %v4065
        %4173 = vmax.xlane.f32.xlu0 %v4172
        %v4174 = vpop.xlane.xlu0 %4173
        %v4175 = vmax.f32 %v4069, %v4071
        %4176 = vmax.xlane.f32.xlu0 %v4175
        %v4177 = vpop.xlane.xlu0 %4176
        %v4178 = vmax.f32 %v4073, %v4075
        %4179 = vmax.xlane.f32.xlu0 %v4178
        %v4180 = vpop.xlane.xlu0 %4179
        %v4181 = vmax.f32 %v4079, %v4081
        %4182 = vmax.xlane.f32.xlu0 %v4181
        %v4183 = vpop.xlane.xlu0 %4182
        %v4184 = vmax.f32 %v4083, %v4085
        %4185 = vmax.xlane.f32.xlu0 %v4184
        %v4186 = vpop.xlane.xlu0 %4185
        %v4187 = vmax.f32 %v4089, %v4091
        %4188 = vmax.xlane.f32.xlu0 %v4187
        %v4189 = vpop.xlane.xlu0 %4188
        %v4190 = vmax.f32 %v4093, %v4095
        %4191 = vmax.xlane.f32.xlu0 %v4190
        %v4192 = vpop.xlane.xlu0 %4191
        %v4193 = vsub.f32 %v3939, %v4099
        %v4194 = vsub.f32 %v3941, %v4099
        %v4195 = vsub.f32 %v3943, %v4102
        %v4196 = vsub.f32 %v3945, %v4102
        %v4197 = vsub.f32 %v3949, %v4105
        %v4198 = vsub.f32 %v3951, %v4105
        %v4199 = vsub.f32 %v3953, %v4108
        %v4200 = vsub.f32 %v3955, %v4108
        %v4201 = vsub.f32 %v3959, %v4111
        %v4202 = vsub.f32 %v3961, %v4111
        %v4203 = vsub.f32 %v3963, %v4114
        %v4204 = vsub.f32 %v3965, %v4114
        %v4205 = vsub.f32 %v3969, %v4117
        %v4206 = vsub.f32 %v3971, %v4117
        %v4207 = vsub.f32 %v3973, %v4120
        %v4208 = vsub.f32 %v3975, %v4120
        %v4209 = vsub.f32 %v3979, %v4123
        %v4210 = vsub.f32 %v3981, %v4123
        %v4211 = vsub.f32 %v3983, %v4126
        %v4212 = vsub.f32 %v3985, %v4126
        %v4213 = vsub.f32 %v3989, %v4129
        %v4214 = vsub.f32 %v3991, %v4129
        %v4215 = vsub.f32 %v3993, %v4132
        %v4216 = vsub.f32 %v3995, %v4132
        %v4217 = vsub.f32 %v3999, %v4135
        %v4218 = vsub.f32 %v4001, %v4135
        %v4219 = vsub.f32 %v4003, %v4138
        %v4220 = vsub.f32 %v4005, %v4138
        %v4221 = vsub.f32 %v4009, %v4141
        %v4222 = vsub.f32 %v4011, %v4141
        %v4223 = vsub.f32 %v4013, %v4144
        %v4224 = vsub.f32 %v4015, %v4144
        %v4225 = vsub.f32 %v4019, %v4147
        %v4226 = vsub.f32 %v4021, %v4147
        %v4227 = vsub.f32 %v4023, %v4150
        %v4228 = vsub.f32 %v4025, %v4150
        %v4229 = vsub.f32 %v4029, %v4153
        %v4230 = vsub.f32 %v4031, %v4153
        %v4231 = vsub.f32 %v4033, %v4156
        %v4232 = vsub.f32 %v4035, %v4156
        %v4233 = vsub.f32 %v4039, %v4159
        %v4234 = vsub.f32 %v4041, %v4159
        %v4235 = vsub.f32 %v4043, %v4162
        %v4236 = vsub.f32 %v4045, %v4162
        %v4237 = vsub.f32 %v4049, %v4165
        %v4238 = vsub.f32 %v4051, %v4165
        %v4239 = vsub.f32 %v4053, %v4168
        %v4240 = vsub.f32 %v4055, %v4168
        %v4241 = vsub.f32 %v4059, %v4171
        %v4242 = vsub.f32 %v4061, %v4171
        %v4243 = vsub.f32 %v4063, %v4174
        %v4244 = vsub.f32 %v4065, %v4174
        %v4245 = vsub.f32 %v4069, %v4177
        %v4246 = vsub.f32 %v4071, %v4177
        %v4247 = vsub.f32 %v4073, %v4180
        %v4248 = vsub.f32 %v4075, %v4180
        %v4249 = vsub.f32 %v4079, %v4183
        %v4250 = vsub.f32 %v4081, %v4183
        %v4251 = vsub.f32 %v4083, %v4186
        %v4252 = vsub.f32 %v4085, %v4186
        %v4253 = vsub.f32 %v4089, %v4189
        %v4254 = vsub.f32 %v4091, %v4189
        %v4255 = vsub.f32 %v4093, %v4192
        %v4256 = vsub.f32 %v4095, %v4192
        %v4257 = vmul.f32 %v4193, 1.442695
        %v4258 = vpow.pop %v4257
        %v4259 = vmul.f32 %v4194, 1.442695
        %v4260 = vpow.pop %v4259
        %v4261 = vmul.f32 %v4195, 1.442695
        %v4262 = vpow.pop %v4261
        %v4263 = vmul.f32 %v4196, 1.442695
        %v4264 = vpow.pop %v4263
        %v4265 = vmul.f32 %v4197, 1.442695
        %v4266 = vpow.pop %v4265
        %v4267 = vmul.f32 %v4198, 1.442695
        %v4268 = vpow.pop %v4267
        %v4269 = vmul.f32 %v4199, 1.442695
        %v4270 = vpow.pop %v4269
        %v4271 = vmul.f32 %v4200, 1.442695
        %v4272 = vpow.pop %v4271
        %v4273 = vmul.f32 %v4201, 1.442695
        %v4274 = vpow.pop %v4273
        %v4275 = vmul.f32 %v4202, 1.442695
        %v4276 = vpow.pop %v4275
        %v4277 = vmul.f32 %v4203, 1.442695
        %v4278 = vpow.pop %v4277
        %v4279 = vmul.f32 %v4204, 1.442695
        %v4280 = vpow.pop %v4279
        %v4281 = vmul.f32 %v4205, 1.442695
        %v4282 = vpow.pop %v4281
        %v4283 = vmul.f32 %v4206, 1.442695
        %v4284 = vpow.pop %v4283
        %v4285 = vmul.f32 %v4207, 1.442695
        %v4286 = vpow.pop %v4285
        %v4287 = vmul.f32 %v4208, 1.442695
        %v4288 = vpow.pop %v4287
        %v4289 = vmul.f32 %v4209, 1.442695
        %v4290 = vpow.pop %v4289
        %v4291 = vmul.f32 %v4210, 1.442695
        %v4292 = vpow.pop %v4291
        %v4293 = vmul.f32 %v4211, 1.442695
        %v4294 = vpow.pop %v4293
        %v4295 = vmul.f32 %v4212, 1.442695
        %v4296 = vpow.pop %v4295
        %v4297 = vmul.f32 %v4213, 1.442695
        %v4298 = vpow.pop %v4297
        %v4299 = vmul.f32 %v4214, 1.442695
        %v4300 = vpow.pop %v4299
        %v4301 = vmul.f32 %v4215, 1.442695
        %v4302 = vpow.pop %v4301
        %v4303 = vmul.f32 %v4216, 1.442695
        %v4304 = vpow.pop %v4303
        %v4305 = vmul.f32 %v4217, 1.442695
        %v4306 = vpow.pop %v4305
        %v4307 = vmul.f32 %v4218, 1.442695
        %v4308 = vpow.pop %v4307
        %v4309 = vmul.f32 %v4219, 1.442695
        %v4310 = vpow.pop %v4309
        %v4311 = vmul.f32 %v4220, 1.442695
        %v4312 = vpow.pop %v4311
        %v4313 = vmul.f32 %v4221, 1.442695
        %v4314 = vpow.pop %v4313
        %v4315 = vmul.f32 %v4222, 1.442695
        %v4316 = vpow.pop %v4315
        %v4317 = vmul.f32 %v4223, 1.442695
        %v4318 = vpow.pop %v4317
        %v4319 = vmul.f32 %v4224, 1.442695
        %v4320 = vpow.pop %v4319
        %v4321 = vmul.f32 %v4225, 1.442695
        %v4322 = vpow.pop %v4321
        %v4323 = vmul.f32 %v4226, 1.442695
        %v4324 = vpow.pop %v4323
        %v4325 = vmul.f32 %v4227, 1.442695
        %v4326 = vpow.pop %v4325
        %v4327 = vmul.f32 %v4228, 1.442695
        %v4328 = vpow.pop %v4327
        %v4329 = vmul.f32 %v4229, 1.442695
        %v4330 = vpow.pop %v4329
        %v4331 = vmul.f32 %v4230, 1.442695
        %v4332 = vpow.pop %v4331
        %v4333 = vmul.f32 %v4231, 1.442695
        %v4334 = vpow.pop %v4333
        %v4335 = vmul.f32 %v4232, 1.442695
        %v4336 = vpow.pop %v4335
        %v4337 = vmul.f32 %v4233, 1.442695
        %v4338 = vpow.pop %v4337
        %v4339 = vmul.f32 %v4234, 1.442695
        %v4340 = vpow.pop %v4339
        %v4341 = vmul.f32 %v4235, 1.442695
        %v4342 = vpow.pop %v4341
        %v4343 = vmul.f32 %v4236, 1.442695
        %v4344 = vpow.pop %v4343
        %v4345 = vmul.f32 %v4237, 1.442695
        %v4346 = vpow.pop %v4345
        %v4347 = vmul.f32 %v4238, 1.442695
        %v4348 = vpow.pop %v4347
        %v4349 = vmul.f32 %v4239, 1.442695
        %v4350 = vpow.pop %v4349
        %v4351 = vmul.f32 %v4240, 1.442695
        %v4352 = vpow.pop %v4351
        %v4353 = vmul.f32 %v4241, 1.442695
        %v4354 = vpow.pop %v4353
        %v4355 = vmul.f32 %v4242, 1.442695
        %v4356 = vpow.pop %v4355
        %v4357 = vmul.f32 %v4243, 1.442695
        %v4358 = vpow.pop %v4357
        %v4359 = vmul.f32 %v4244, 1.442695
        %v4360 = vpow.pop %v4359
        %v4361 = vmul.f32 %v4245, 1.442695
        %v4362 = vpow.pop %v4361
        %v4363 = vmul.f32 %v4246, 1.442695
        %v4364 = vpow.pop %v4363
        %v4365 = vmul.f32 %v4247, 1.442695
        %v4366 = vpow.pop %v4365
        %v4367 = vmul.f32 %v4248, 1.442695
        %v4368 = vpow.pop %v4367
        %v4369 = vmul.f32 %v4249, 1.442695
        %v4370 = vpow.pop %v4369
        %v4371 = vmul.f32 %v4250, 1.442695
        %v4372 = vpow.pop %v4371
        %v4373 = vmul.f32 %v4251, 1.442695
        %v4374 = vpow.pop %v4373
        %v4375 = vmul.f32 %v4252, 1.442695
        %v4376 = vpow.pop %v4375
        %v4377 = vmul.f32 %v4253, 1.442695
        %v4378 = vpow.pop %v4377
        %v4379 = vmul.f32 %v4254, 1.442695
        %v4380 = vpow.pop %v4379
        %v4381 = vmul.f32 %v4255, 1.442695
        %v4382 = vpow.pop %v4381
        %v4383 = vmul.f32 %v4256, 1.442695
        %v4384 = vpow.pop %v4383
        %v4385 = vadd.f32 %v4258, %v4260
        %4386 = vadd.xlane.f32.xlu0 %v4385
        %v4387 = vpop.xlane.xlu0 %4386
        %v4388 = vadd.f32 %v4262, %v4264
        %4389 = vadd.xlane.f32.xlu0 %v4388
        %v4390 = vpop.xlane.xlu0 %4389
        %v4391 = vadd.f32 %v4266, %v4268
        %4392 = vadd.xlane.f32.xlu0 %v4391
        %v4393 = vpop.xlane.xlu0 %4392
        %v4394 = vadd.f32 %v4270, %v4272
        %4395 = vadd.xlane.f32.xlu0 %v4394
        %v4396 = vpop.xlane.xlu0 %4395
        %v4397 = vadd.f32 %v4274, %v4276
        %4398 = vadd.xlane.f32.xlu0 %v4397
        %v4399 = vpop.xlane.xlu0 %4398
        %v4400 = vadd.f32 %v4278, %v4280
        %4401 = vadd.xlane.f32.xlu0 %v4400
        %v4402 = vpop.xlane.xlu0 %4401
        %v4403 = vadd.f32 %v4282, %v4284
        %4404 = vadd.xlane.f32.xlu0 %v4403
        %v4405 = vpop.xlane.xlu0 %4404
        %v4406 = vadd.f32 %v4286, %v4288
        %4407 = vadd.xlane.f32.xlu0 %v4406
        %v4408 = vpop.xlane.xlu0 %4407
        %v4409 = vadd.f32 %v4290, %v4292
        %4410 = vadd.xlane.f32.xlu0 %v4409
        %v4411 = vpop.xlane.xlu0 %4410
        %v4412 = vadd.f32 %v4294, %v4296
        %4413 = vadd.xlane.f32.xlu0 %v4412
        %v4414 = vpop.xlane.xlu0 %4413
        %v4415 = vadd.f32 %v4298, %v4300
        %4416 = vadd.xlane.f32.xlu0 %v4415
        %v4417 = vpop.xlane.xlu0 %4416
        %v4418 = vadd.f32 %v4302, %v4304
        %4419 = vadd.xlane.f32.xlu0 %v4418
        %v4420 = vpop.xlane.xlu0 %4419
        %v4421 = vadd.f32 %v4306, %v4308
        %4422 = vadd.xlane.f32.xlu0 %v4421
        %v4423 = vpop.xlane.xlu0 %4422
        %v4424 = vadd.f32 %v4310, %v4312
        %4425 = vadd.xlane.f32.xlu0 %v4424
        %v4426 = vpop.xlane.xlu0 %4425
        %v4427 = vadd.f32 %v4314, %v4316
        %4428 = vadd.xlane.f32.xlu0 %v4427
        %v4429 = vpop.xlane.xlu0 %4428
        %v4430 = vadd.f32 %v4318, %v4320
        %4431 = vadd.xlane.f32.xlu0 %v4430
        %v4432 = vpop.xlane.xlu0 %4431
        %v4433 = vadd.f32 %v4322, %v4324
        %4434 = vadd.xlane.f32.xlu0 %v4433
        %v4435 = vpop.xlane.xlu0 %4434
        %v4436 = vadd.f32 %v4326, %v4328
        %4437 = vadd.xlane.f32.xlu0 %v4436
        %v4438 = vpop.xlane.xlu0 %4437
        %v4439 = vadd.f32 %v4330, %v4332
        %4440 = vadd.xlane.f32.xlu0 %v4439
        %v4441 = vpop.xlane.xlu0 %4440
        %v4442 = vadd.f32 %v4334, %v4336
        %4443 = vadd.xlane.f32.xlu0 %v4442
        %v4444 = vpop.xlane.xlu0 %4443
        %v4445 = vadd.f32 %v4338, %v4340
        %4446 = vadd.xlane.f32.xlu0 %v4445
        %v4447 = vpop.xlane.xlu0 %4446
        %v4448 = vadd.f32 %v4342, %v4344
        %4449 = vadd.xlane.f32.xlu0 %v4448
        %v4450 = vpop.xlane.xlu0 %4449
        %v4451 = vadd.f32 %v4346, %v4348
        %4452 = vadd.xlane.f32.xlu0 %v4451
        %v4453 = vpop.xlane.xlu0 %4452
        %v4454 = vadd.f32 %v4350, %v4352
        %4455 = vadd.xlane.f32.xlu0 %v4454
        %v4456 = vpop.xlane.xlu0 %4455
        %v4457 = vadd.f32 %v4354, %v4356
        %4458 = vadd.xlane.f32.xlu0 %v4457
        %v4459 = vpop.xlane.xlu0 %4458
        %v4460 = vadd.f32 %v4358, %v4360
        %4461 = vadd.xlane.f32.xlu0 %v4460
        %v4462 = vpop.xlane.xlu0 %4461
        %v4463 = vadd.f32 %v4362, %v4364
        %4464 = vadd.xlane.f32.xlu0 %v4463
        %v4465 = vpop.xlane.xlu0 %4464
        %v4466 = vadd.f32 %v4366, %v4368
        %4467 = vadd.xlane.f32.xlu0 %v4466
        %v4468 = vpop.xlane.xlu0 %4467
        %v4469 = vadd.f32 %v4370, %v4372
        %4470 = vadd.xlane.f32.xlu0 %v4469
        %v4471 = vpop.xlane.xlu0 %4470
        %v4472 = vadd.f32 %v4374, %v4376
        %4473 = vadd.xlane.f32.xlu0 %v4472
        %v4474 = vpop.xlane.xlu0 %4473
        %v4475 = vadd.f32 %v4378, %v4380
        %4476 = vadd.xlane.f32.xlu0 %v4475
        %v4477 = vpop.xlane.xlu0 %4476
        %v4478 = vadd.f32 %v4382, %v4384
        %4479 = vadd.xlane.f32.xlu0 %v4478
        %v4480 = vpop.xlane.xlu0 %4479
        %v4481 = vrcp.pop %v4387
        %v4482 = vrcp.pop %v4390
        %v4483 = vrcp.pop %v4393
        %v4484 = vrcp.pop %v4396
        %v4485 = vrcp.pop %v4399
        %v4486 = vrcp.pop %v4402
        %v4487 = vrcp.pop %v4405
        %v4488 = vrcp.pop %v4408
        %v4489 = vrcp.pop %v4411
        %v4490 = vrcp.pop %v4414
        %v4491 = vrcp.pop %v4417
        %v4492 = vrcp.pop %v4420
        %v4493 = vrcp.pop %v4423
        %v4494 = vrcp.pop %v4426
        %v4495 = vrcp.pop %v4429
        %v4496 = vrcp.pop %v4432
        %v4497 = vrcp.pop %v4435
        %v4498 = vrcp.pop %v4438
        %v4499 = vrcp.pop %v4441
        %v4500 = vrcp.pop %v4444
        %v4501 = vrcp.pop %v4447
        %v4502 = vrcp.pop %v4450
        %v4503 = vrcp.pop %v4453
        %v4504 = vrcp.pop %v4456
        %v4505 = vrcp.pop %v4459
        %v4506 = vrcp.pop %v4462
        %v4507 = vrcp.pop %v4465
        %v4508 = vrcp.pop %v4468
        %v4509 = vrcp.pop %v4471
        %v4510 = vrcp.pop %v4474
        %v4511 = vrcp.pop %v4477
        %v4512 = vrcp.pop %v4480
        %v4513 = vmul.f32 %v4258, %v4481
        %v4514 = vmul.f32 %v4260, %v4481
        %v4515 = vmul.f32 %v4262, %v4482
        %v4516 = vmul.f32 %v4264, %v4482
        %v4517 = vmul.f32 %v4266, %v4483
        %v4518 = vmul.f32 %v4268, %v4483
        %v4519 = vmul.f32 %v4270, %v4484
        %v4520 = vmul.f32 %v4272, %v4484
        %v4521 = vmul.f32 %v4274, %v4485
        %v4522 = vmul.f32 %v4276, %v4485
        %v4523 = vmul.f32 %v4278, %v4486
        %v4524 = vmul.f32 %v4280, %v4486
        %v4525 = vmul.f32 %v4282, %v4487
        %v4526 = vmul.f32 %v4284, %v4487
        %v4527 = vmul.f32 %v4286, %v4488
        %v4528 = vmul.f32 %v4288, %v4488
        %v4529 = vmul.f32 %v4290, %v4489
        %v4530 = vmul.f32 %v4292, %v4489
        %v4531 = vmul.f32 %v4294, %v4490
        %v4532 = vmul.f32 %v4296, %v4490
        %v4533 = vmul.f32 %v4298, %v4491
        %v4534 = vmul.f32 %v4300, %v4491
        %v4535 = vmul.f32 %v4302, %v4492
        %v4536 = vmul.f32 %v4304, %v4492
        %v4537 = vmul.f32 %v4306, %v4493
        %v4538 = vmul.f32 %v4308, %v4493
        %v4539 = vmul.f32 %v4310, %v4494
        %v4540 = vmul.f32 %v4312, %v4494
        %v4541 = vmul.f32 %v4314, %v4495
        %v4542 = vmul.f32 %v4316, %v4495
        %v4543 = vmul.f32 %v4318, %v4496
        %v4544 = vmul.f32 %v4320, %v4496
        %v4545 = vmul.f32 %v4322, %v4497
        %v4546 = vmul.f32 %v4324, %v4497
        %v4547 = vmul.f32 %v4326, %v4498
        %v4548 = vmul.f32 %v4328, %v4498
        %v4549 = vmul.f32 %v4330, %v4499
        %v4550 = vmul.f32 %v4332, %v4499
        %v4551 = vmul.f32 %v4334, %v4500
        %v4552 = vmul.f32 %v4336, %v4500
        %v4553 = vmul.f32 %v4338, %v4501
        %v4554 = vmul.f32 %v4340, %v4501
        %v4555 = vmul.f32 %v4342, %v4502
        %v4556 = vmul.f32 %v4344, %v4502
        %v4557 = vmul.f32 %v4346, %v4503
        %v4558 = vmul.f32 %v4348, %v4503
        %v4559 = vmul.f32 %v4350, %v4504
        %v4560 = vmul.f32 %v4352, %v4504
        %v4561 = vmul.f32 %v4354, %v4505
        %v4562 = vmul.f32 %v4356, %v4505
        %v4563 = vmul.f32 %v4358, %v4506
        %v4564 = vmul.f32 %v4360, %v4506
        %v4565 = vmul.f32 %v4362, %v4507
        %v4566 = vmul.f32 %v4364, %v4507
        %v4567 = vmul.f32 %v4366, %v4508
        %v4568 = vmul.f32 %v4368, %v4508
        %v4569 = vmul.f32 %v4370, %v4509
        %v4570 = vmul.f32 %v4372, %v4509
        %v4571 = vmul.f32 %v4374, %v4510
        %v4572 = vmul.f32 %v4376, %v4510
        %v4573 = vmul.f32 %v4378, %v4511
        %v4574 = vmul.f32 %v4380, %v4511
        %v4575 = vmul.f32 %v4382, %v4512
        %v4576 = vmul.f32 %v4384, %v4512
        %v4577 = vpack.c.bf16 %v4515, %v4513
        %v4578 = vpack.c.bf16 %v4516, %v4514
        %v4579 = vpack.c.bf16 %v4519, %v4517
        %v4580 = vpack.c.bf16 %v4520, %v4518
        %v4581 = vpack.c.bf16 %v4523, %v4521
        %v4582 = vpack.c.bf16 %v4524, %v4522
        %v4583 = vpack.c.bf16 %v4527, %v4525
        %v4584 = vpack.c.bf16 %v4528, %v4526
        %v4585 = vpack.c.bf16 %v4531, %v4529
        %v4586 = vpack.c.bf16 %v4532, %v4530
        %v4587 = vpack.c.bf16 %v4535, %v4533
        %v4588 = vpack.c.bf16 %v4536, %v4534
        %v4589 = vpack.c.bf16 %v4539, %v4537
        %v4590 = vpack.c.bf16 %v4540, %v4538
        %v4591 = vpack.c.bf16 %v4543, %v4541
        %v4592 = vpack.c.bf16 %v4544, %v4542
        %v4593 = vpack.c.bf16 %v4547, %v4545
        %v4594 = vpack.c.bf16 %v4548, %v4546
        %v4595 = vpack.c.bf16 %v4551, %v4549
        %v4596 = vpack.c.bf16 %v4552, %v4550
        %v4597 = vpack.c.bf16 %v4555, %v4553
        %v4598 = vpack.c.bf16 %v4556, %v4554
        %v4599 = vpack.c.bf16 %v4559, %v4557
        %v4600 = vpack.c.bf16 %v4560, %v4558
        %v4601 = vpack.c.bf16 %v4563, %v4561
        %v4602 = vpack.c.bf16 %v4564, %v4562
        %v4603 = vpack.c.bf16 %v4567, %v4565
        %v4604 = vpack.c.bf16 %v4568, %v4566
        %v4605 = vpack.c.bf16 %v4571, %v4569
        %v4606 = vpack.c.bf16 %v4572, %v4570
        %v4607 = vpack.c.bf16 %v4575, %v4573
        %v4608 = vpack.c.bf16 %v4576, %v4574
        %4609 = vrot.lane.b32.xlu0 %v2268, 64
        %v4610 = vpop.permute.xlu0 %4609
        %4611 = vrot.lane.b32.xlu0 %v2269, 64
        %v4612 = vpop.permute.xlu0 %4611
        %4613 = vrot.lane.b32.xlu0 %v2270, 64
        %v4614 = vpop.permute.xlu0 %4613
        %4615 = vrot.lane.b32.xlu0 %v2271, 64
        %v4616 = vpop.permute.xlu0 %4615
        %4617 = vrot.lane.b32.xlu0 %v2272, 64
        %v4618 = vpop.permute.xlu0 %4617
        %4619 = vrot.lane.b32.xlu0 %v2273, 64
        %v4620 = vpop.permute.xlu0 %4619
        %4621 = vrot.lane.b32.xlu0 %v2274, 64
        %v4622 = vpop.permute.xlu0 %4621
        %4623 = vrot.lane.b32.xlu0 %v2275, 64
        %v4624 = vpop.permute.xlu0 %4623
        %4625 = vrot.lane.b32.xlu0 %v2276, 64
        %v4626 = vpop.permute.xlu0 %4625
        %4627 = vrot.lane.b32.xlu0 %v2277, 64
        %v4628 = vpop.permute.xlu0 %4627
        %4629 = vrot.lane.b32.xlu0 %v2278, 64
        %v4630 = vpop.permute.xlu0 %4629
        %4631 = vrot.lane.b32.xlu0 %v2279, 64
        %v4632 = vpop.permute.xlu0 %4631
        %4633 = vrot.lane.b32.xlu0 %v2280, 64
        %v4634 = vpop.permute.xlu0 %4633
        %4635 = vrot.lane.b32.xlu0 %v2281, 64
        %v4636 = vpop.permute.xlu0 %4635
        %4637 = vrot.lane.b32.xlu0 %v2282, 64
        %v4638 = vpop.permute.xlu0 %4637
        %4639 = vrot.lane.b32.xlu0 %v2283, 64
        %v4640 = vpop.permute.xlu0 %4639
        %4657 = vmatprep.subr.bf16.mxu0 0
        %4658 = vmatpush1.bf16.msra.mxu0 %v4624
        %4659 = vmatprep.subr.bf16.mxu0 0
        %4660 = vmatpush1.bf16.msra.mxu0 %v4622
        %4661 = vmatprep.subr.bf16.mxu0 0
        %4662 = vmatpush1.bf16.msra.mxu0 %v4620
        %4663 = vmatprep.subr.bf16.mxu0 0
        %4664 = vmatpush1.bf16.msra.mxu0 %v4618
        %4665 = vmatprep.subr.bf16.mxu0 0
        %4666 = vmatpush1.bf16.msra.mxu0 %v4616
        %4667 = vmatprep.subr.bf16.mxu0 0
        %4668 = vmatpush1.bf16.msra.mxu0 %v4614
        %4669 = vmatprep.subr.bf16.mxu0 0
        %4670 = vmatpush1.bf16.msra.mxu0 %v4612
        %4671 = vmatprep.subr.bf16.mxu0 0
        %4672 = vmatpush1.bf16.msra.mxu0 %v4610
        %4673 = vmatprep.subr.bf16.mxu0 0
        %4674 = vmatpush2.bf16.msra.mxu0 %v4640
        %4675 = vmatprep.subr.bf16.mxu0 0
        %4676 = vmatpush2.bf16.msra.mxu0 %v4638
        %4677 = vmatprep.subr.bf16.mxu0 0
        %4678 = vmatpush2.bf16.msra.mxu0 %v4636
        %4679 = vmatprep.subr.bf16.mxu0 0
        %4680 = vmatpush2.bf16.msra.mxu0 %v4634
        %4681 = vmatprep.subr.bf16.mxu0 0
        %4682 = vmatpush2.bf16.msra.mxu0 %v4632
        %4683 = vmatprep.subr.bf16.mxu0 0
        %4684 = vmatpush2.bf16.msra.mxu0 %v4630
        %4685 = vmatprep.subr.bf16.mxu0 0
        %4686 = vmatpush2.bf16.msra.mxu0 %v4628
        %4687 = vmatprep.subr.bf16.mxu0 0
        %4688 = vmatpush2.bf16.msra.mxu0 %v4626
        %4689 = vmatprep.mubr.bf16.mxu0 %v4578
        %4690 = vmatmul.mubr.bf16.gmra.mxu0 %v4577
        %v4691 = vpop.f32.mrf.mxu0
        %v4692 = vadd.f32 0.0, %v4691
        %v4693 = vpop.f32.mrf.mxu0
        %v4694 = vpop.f32.mrf.mxu0
        %v4695 = vadd.f32 0.0, %v4694
        %v4696 = vpop.f32.mrf.mxu0
        %4697 = vmatprep.mubr.bf16.mxu0 %v4580
        %4698 = vmatmul.mubr.bf16.gmra.mxu0 %v4579
        %v4699 = vpop.f32.mrf.mxu0
        %v4700 = vadd.f32 0.0, %v4699
        %v4701 = vpop.f32.mrf.mxu0
        %v4702 = vpop.f32.mrf.mxu0
        %v4703 = vadd.f32 0.0, %v4702
        %v4704 = vpop.f32.mrf.mxu0
        %4705 = vmatprep.mubr.bf16.mxu0 %v4582
        %4706 = vmatmul.mubr.bf16.gmra.mxu0 %v4581
        %v4707 = vpop.f32.mrf.mxu0
        %v4708 = vadd.f32 0.0, %v4707
        %v4709 = vpop.f32.mrf.mxu0
        %v4710 = vpop.f32.mrf.mxu0
        %v4711 = vadd.f32 0.0, %v4710
        %v4712 = vpop.f32.mrf.mxu0
        %4713 = vmatprep.mubr.bf16.mxu0 %v4584
        %4714 = vmatmul.mubr.bf16.gmra.mxu0 %v4583
        %v4715 = vpop.f32.mrf.mxu0
        %v4716 = vadd.f32 0.0, %v4715
        %v4717 = vpop.f32.mrf.mxu0
        %v4718 = vpop.f32.mrf.mxu0
        %v4719 = vadd.f32 0.0, %v4718
        %v4720 = vpop.f32.mrf.mxu0
        %4721 = vmatprep.mubr.bf16.mxu0 %v4586
        %4722 = vmatmul.mubr.bf16.gmra.mxu0 %v4585
        %v4723 = vpop.f32.mrf.mxu0
        %v4724 = vadd.f32 0.0, %v4723
        %v4725 = vpop.f32.mrf.mxu0
        %v4726 = vpop.f32.mrf.mxu0
        %v4727 = vadd.f32 0.0, %v4726
        %v4728 = vpop.f32.mrf.mxu0
        %4729 = vmatprep.mubr.bf16.mxu0 %v4588
        %4730 = vmatmul.mubr.bf16.gmra.mxu0 %v4587
        %v4731 = vpop.f32.mrf.mxu0
        %v4732 = vadd.f32 0.0, %v4731
        %v4733 = vpop.f32.mrf.mxu0
        %v4734 = vpop.f32.mrf.mxu0
        %v4735 = vadd.f32 0.0, %v4734
        %v4736 = vpop.f32.mrf.mxu0
        %4737 = vmatprep.mubr.bf16.mxu0 %v4590
        %4738 = vmatmul.mubr.bf16.gmra.mxu0 %v4589
        %v4739 = vpop.f32.mrf.mxu0
        %v4740 = vadd.f32 0.0, %v4739
        %v4741 = vpop.f32.mrf.mxu0
        %v4742 = vpop.f32.mrf.mxu0
        %v4743 = vadd.f32 0.0, %v4742
        %v4744 = vpop.f32.mrf.mxu0
        %4745 = vmatprep.mubr.bf16.mxu0 %v4592
        %4746 = vmatmul.mubr.bf16.gmra.mxu0 %v4591
        %v4747 = vpop.f32.mrf.mxu0
        %v4748 = vadd.f32 0.0, %v4747
        %v4749 = vpop.f32.mrf.mxu0
        %v4750 = vpop.f32.mrf.mxu0
        %v4751 = vadd.f32 0.0, %v4750
        %v4752 = vpop.f32.mrf.mxu0
        %4753 = vmatprep.mubr.bf16.mxu0 %v4594
        %4754 = vmatmul.mubr.bf16.gmra.mxu0 %v4593
        %v4755 = vpop.f32.mrf.mxu0
        %v4756 = vadd.f32 0.0, %v4755
        %v4757 = vpop.f32.mrf.mxu0
        %v4758 = vpop.f32.mrf.mxu0
        %v4759 = vadd.f32 0.0, %v4758
        %v4760 = vpop.f32.mrf.mxu0
        %4761 = vmatprep.mubr.bf16.mxu0 %v4596
        %4762 = vmatmul.mubr.bf16.gmra.mxu0 %v4595
        %v4763 = vpop.f32.mrf.mxu0
        %v4764 = vadd.f32 0.0, %v4763
        %v4765 = vpop.f32.mrf.mxu0
        %v4766 = vpop.f32.mrf.mxu0
        %v4767 = vadd.f32 0.0, %v4766
        %v4768 = vpop.f32.mrf.mxu0
        %4769 = vmatprep.mubr.bf16.mxu0 %v4598
        %4770 = vmatmul.mubr.bf16.gmra.mxu0 %v4597
        %v4771 = vpop.f32.mrf.mxu0
        %v4772 = vadd.f32 0.0, %v4771
        %v4773 = vpop.f32.mrf.mxu0
        %v4774 = vpop.f32.mrf.mxu0
        %v4775 = vadd.f32 0.0, %v4774
        %v4776 = vpop.f32.mrf.mxu0
        %4777 = vmatprep.mubr.bf16.mxu0 %v4600
        %4778 = vmatmul.mubr.bf16.gmra.mxu0 %v4599
        %v4779 = vpop.f32.mrf.mxu0
        %v4780 = vadd.f32 0.0, %v4779
        %v4781 = vpop.f32.mrf.mxu0
        %v4782 = vpop.f32.mrf.mxu0
        %v4783 = vadd.f32 0.0, %v4782
        %v4784 = vpop.f32.mrf.mxu0
        %4785 = vmatprep.mubr.bf16.mxu0 %v4602
        %4786 = vmatmul.mubr.bf16.gmra.mxu0 %v4601
        %v4787 = vpop.f32.mrf.mxu0
        %v4788 = vadd.f32 0.0, %v4787
        %v4789 = vpop.f32.mrf.mxu0
        %v4790 = vpop.f32.mrf.mxu0
        %v4791 = vadd.f32 0.0, %v4790
        %v4792 = vpop.f32.mrf.mxu0
        %4793 = vmatprep.mubr.bf16.mxu0 %v4604
        %4794 = vmatmul.mubr.bf16.gmra.mxu0 %v4603
        %v4795 = vpop.f32.mrf.mxu0
        %v4796 = vadd.f32 0.0, %v4795
        %v4797 = vpop.f32.mrf.mxu0
        %v4798 = vpop.f32.mrf.mxu0
        %v4799 = vadd.f32 0.0, %v4798
        %v4800 = vpop.f32.mrf.mxu0
        %4801 = vmatprep.mubr.bf16.mxu0 %v4606
        %4802 = vmatmul.mubr.bf16.gmra.mxu0 %v4605
        %v4803 = vpop.f32.mrf.mxu0
        %v4804 = vadd.f32 0.0, %v4803
        %v4805 = vpop.f32.mrf.mxu0
        %v4806 = vpop.f32.mrf.mxu0
        %v4807 = vadd.f32 0.0, %v4806
        %v4808 = vpop.f32.mrf.mxu0
        %4809 = vmatprep.mubr.bf16.mxu0 %v4608
        %4810 = vmatmul.mubr.bf16.gmra.mxu0 %v4607
        %v4811 = vpop.f32.mrf.mxu0
        %v4812 = vadd.f32 0.0, %v4811
        %v4813 = vpop.f32.mrf.mxu0
        %v4814 = vpop.f32.mrf.mxu0
        %v4815 = vadd.f32 0.0, %v4814
        %v4816 = vpop.f32.mrf.mxu0
        %4817 = vdwg.mxu0
        %4850 = vrot.lane.b32.xlu0 %v4692, 64
        %v4851 = vpop.permute.xlu0 %4850
        %4852 = vrot.lane.b32.xlu0 %v4695, 64
        %v4853 = vpop.permute.xlu0 %4852
        %4854 = vrot.lane.b32.xlu0 %v4700, 64
        %v4855 = vpop.permute.xlu0 %4854
        %4856 = vrot.lane.b32.xlu0 %v4703, 64
        %v4857 = vpop.permute.xlu0 %4856
        %4858 = vrot.lane.b32.xlu0 %v4708, 64
        %v4859 = vpop.permute.xlu0 %4858
        %4860 = vrot.lane.b32.xlu0 %v4711, 64
        %v4861 = vpop.permute.xlu0 %4860
        %4862 = vrot.lane.b32.xlu0 %v4716, 64
        %v4863 = vpop.permute.xlu0 %4862
        %4864 = vrot.lane.b32.xlu0 %v4719, 64
        %v4865 = vpop.permute.xlu0 %4864
        %4866 = vrot.lane.b32.xlu0 %v4724, 64
        %v4867 = vpop.permute.xlu0 %4866
        %4868 = vrot.lane.b32.xlu0 %v4727, 64
        %v4869 = vpop.permute.xlu0 %4868
        %4870 = vrot.lane.b32.xlu0 %v4732, 64
        %v4871 = vpop.permute.xlu0 %4870
        %4872 = vrot.lane.b32.xlu0 %v4735, 64
        %v4873 = vpop.permute.xlu0 %4872
        %4874 = vrot.lane.b32.xlu0 %v4740, 64
        %v4875 = vpop.permute.xlu0 %4874
        %4876 = vrot.lane.b32.xlu0 %v4743, 64
        %v4877 = vpop.permute.xlu0 %4876
        %4878 = vrot.lane.b32.xlu0 %v4748, 64
        %v4879 = vpop.permute.xlu0 %4878
        %4880 = vrot.lane.b32.xlu0 %v4751, 64
        %v4881 = vpop.permute.xlu0 %4880
        %4882 = vrot.lane.b32.xlu0 %v4756, 64
        %v4883 = vpop.permute.xlu0 %4882
        %4884 = vrot.lane.b32.xlu0 %v4759, 64
        %v4885 = vpop.permute.xlu0 %4884
        %4886 = vrot.lane.b32.xlu0 %v4764, 64
        %v4887 = vpop.permute.xlu0 %4886
        %4888 = vrot.lane.b32.xlu0 %v4767, 64
        %v4889 = vpop.permute.xlu0 %4888
        %4890 = vrot.lane.b32.xlu0 %v4772, 64
        %v4891 = vpop.permute.xlu0 %4890
        %4892 = vrot.lane.b32.xlu0 %v4775, 64
        %v4893 = vpop.permute.xlu0 %4892
        %4894 = vrot.lane.b32.xlu0 %v4780, 64
        %v4895 = vpop.permute.xlu0 %4894
        %4896 = vrot.lane.b32.xlu0 %v4783, 64
        %v4897 = vpop.permute.xlu0 %4896
        %4898 = vrot.lane.b32.xlu0 %v4788, 64
        %v4899 = vpop.permute.xlu0 %4898
        %4900 = vrot.lane.b32.xlu0 %v4791, 64
        %v4901 = vpop.permute.xlu0 %4900
        %4902 = vrot.lane.b32.xlu0 %v4796, 64
        %v4903 = vpop.permute.xlu0 %4902
        %4904 = vrot.lane.b32.xlu0 %v4799, 64
        %v4905 = vpop.permute.xlu0 %4904
        %4906 = vrot.lane.b32.xlu0 %v4804, 64
        %v4907 = vpop.permute.xlu0 %4906
        %4908 = vrot.lane.b32.xlu0 %v4807, 64
        %v4909 = vpop.permute.xlu0 %4908
        %4910 = vrot.lane.b32.xlu0 %v4812, 64
        %v4911 = vpop.permute.xlu0 %4910
        %4912 = vrot.lane.b32.xlu0 %v4815, 64
        %v4913 = vpop.permute.xlu0 %4912
        %vm4946 = vcmask 785920
        %4947 = vst.msk [vmem:[#allocation3] sm:$0xff] %vm4946, %v4851
        %4948 = vst.msk [vmem:[#allocation3 + $0x8] sm:$0xff] %vm4946, %v4853
        %4949 = vst.msk [vmem:[#allocation3 + $0x10] sm:$0xff] %vm4946, %v4855
        %4950 = vst.msk [vmem:[#allocation3 + $0x18] sm:$0xff] %vm4946, %v4857
        %4951 = vst.msk [vmem:[#allocation3 + $0x20] sm:$0xff] %vm4946, %v4859
        %4952 = vst.msk [vmem:[#allocation3 + $0x28] sm:$0xff] %vm4946, %v4861
        %4953 = vst.msk [vmem:[#allocation3 + $0x30] sm:$0xff] %vm4946, %v4863
        %4954 = vst.msk [vmem:[#allocation3 + $0x38] sm:$0xff] %vm4946, %v4865
        %4955 = vst.msk [vmem:[#allocation3 + $0x40] sm:$0xff] %vm4946, %v4867
        %4956 = vst.msk [vmem:[#allocation3 + $0x48] sm:$0xff] %vm4946, %v4869
        %4957 = vst.msk [vmem:[#allocation3 + $0x50] sm:$0xff] %vm4946, %v4871
        %4958 = vst.msk [vmem:[#allocation3 + $0x58] sm:$0xff] %vm4946, %v4873
        %4959 = vst.msk [vmem:[#allocation3 + $0x60] sm:$0xff] %vm4946, %v4875
        %4960 = vst.msk [vmem:[#allocation3 + $0x68] sm:$0xff] %vm4946, %v4877
        %4961 = vst.msk [vmem:[#allocation3 + $0x70] sm:$0xff] %vm4946, %v4879
        %4962 = vst.msk [vmem:[#allocation3 + $0x78] sm:$0xff] %vm4946, %v4881
        %4963 = vst.msk [vmem:[#allocation3 + $0x80] sm:$0xff] %vm4946, %v4883
        %4964 = vst.msk [vmem:[#allocation3 + $0x88] sm:$0xff] %vm4946, %v4885
        %4965 = vst.msk [vmem:[#allocation3 + $0x90] sm:$0xff] %vm4946, %v4887
        %4966 = vst.msk [vmem:[#allocation3 + $0x98] sm:$0xff] %vm4946, %v4889
        %4967 = vst.msk [vmem:[#allocation3 + $0xa0] sm:$0xff] %vm4946, %v4891
        %4968 = vst.msk [vmem:[#allocation3 + $0xa8] sm:$0xff] %vm4946, %v4893
        %4969 = vst.msk [vmem:[#allocation3 + $0xb0] sm:$0xff] %vm4946, %v4895
        %4970 = vst.msk [vmem:[#allocation3 + $0xb8] sm:$0xff] %vm4946, %v4897
        %4971 = vst.msk [vmem:[#allocation3 + $0xc0] sm:$0xff] %vm4946, %v4899
        %4972 = vst.msk [vmem:[#allocation3 + $0xc8] sm:$0xff] %vm4946, %v4901
        %4973 = vst.msk [vmem:[#allocation3 + $0xd0] sm:$0xff] %vm4946, %v4903
        %4974 = vst.msk [vmem:[#allocation3 + $0xd8] sm:$0xff] %vm4946, %v4905
        %4975 = vst.msk [vmem:[#allocation3 + $0xe0] sm:$0xff] %vm4946, %v4907
        %4976 = vst.msk [vmem:[#allocation3 + $0xe8] sm:$0xff] %vm4946, %v4909
        %4977 = vst.msk [vmem:[#allocation3 + $0xf0] sm:$0xff] %vm4946, %v4911
        %4978 = vst.msk [vmem:[#allocation3 + $0xf8] sm:$0xff] %vm4946, %v4913
        %4979 = vrot.lane.b32.xlu0 %v1306, 32
        %v4980 = vpop.permute.xlu0 %4979
        %4981 = vrot.lane.b32.xlu0 %v1307, 32
        %v4982 = vpop.permute.xlu0 %4981
        %4983 = vrot.lane.b32.xlu0 %v1308, 32
        %v4984 = vpop.permute.xlu0 %4983
        %4985 = vrot.lane.b32.xlu0 %v1309, 32
        %v4986 = vpop.permute.xlu0 %4985
        %4987 = vrot.lane.b32.xlu0 %v1310, 32
        %v4988 = vpop.permute.xlu0 %4987
        %4989 = vrot.lane.b32.xlu0 %v1311, 32
        %v4990 = vpop.permute.xlu0 %4989
        %4991 = vrot.lane.b32.xlu0 %v1312, 32
        %v4992 = vpop.permute.xlu0 %4991
        %4993 = vrot.lane.b32.xlu0 %v1313, 32
        %v4994 = vpop.permute.xlu0 %4993
        %4995 = vrot.lane.b32.xlu0 %v1314, 32
        %v4996 = vpop.permute.xlu0 %4995
        %4997 = vrot.lane.b32.xlu0 %v1315, 32
        %v4998 = vpop.permute.xlu0 %4997
        %4999 = vrot.lane.b32.xlu0 %v1316, 32
        %v5000 = vpop.permute.xlu0 %4999
        %5001 = vrot.lane.b32.xlu0 %v1317, 32
        %v5002 = vpop.permute.xlu0 %5001
        %5003 = vrot.lane.b32.xlu0 %v1318, 32
        %v5004 = vpop.permute.xlu0 %5003
        %5005 = vrot.lane.b32.xlu0 %v1319, 32
        %v5006 = vpop.permute.xlu0 %5005
        %5007 = vrot.lane.b32.xlu0 %v1320, 32
        %v5008 = vpop.permute.xlu0 %5007
        %5009 = vrot.lane.b32.xlu0 %v1321, 32
        %v5010 = vpop.permute.xlu0 %5009
        %5011 = vrot.lane.b32.xlu0 %v1418, 32
        %v5012 = vpop.permute.xlu0 %5011
        %5013 = vrot.lane.b32.xlu0 %v1419, 32
        %v5014 = vpop.permute.xlu0 %5013
        %5015 = vrot.lane.b32.xlu0 %v1420, 32
        %v5016 = vpop.permute.xlu0 %5015
        %5017 = vrot.lane.b32.xlu0 %v1421, 32
        %v5018 = vpop.permute.xlu0 %5017
        %5019 = vrot.lane.b32.xlu0 %v1422, 32
        %v5020 = vpop.permute.xlu0 %5019
        %5021 = vrot.lane.b32.xlu0 %v1423, 32
        %v5022 = vpop.permute.xlu0 %5021
        %5023 = vrot.lane.b32.xlu0 %v1424, 32
        %v5024 = vpop.permute.xlu0 %5023
        %5025 = vrot.lane.b32.xlu0 %v1425, 32
        %v5026 = vpop.permute.xlu0 %5025
        %5027 = vrot.lane.b32.xlu0 %v1426, 32
        %v5028 = vpop.permute.xlu0 %5027
        %5029 = vrot.lane.b32.xlu0 %v1427, 32
        %v5030 = vpop.permute.xlu0 %5029
        %5031 = vrot.lane.b32.xlu0 %v1428, 32
        %v5032 = vpop.permute.xlu0 %5031
        %5033 = vrot.lane.b32.xlu0 %v1429, 32
        %v5034 = vpop.permute.xlu0 %5033
        %5035 = vrot.lane.b32.xlu0 %v1430, 32
        %v5036 = vpop.permute.xlu0 %5035
        %5037 = vrot.lane.b32.xlu0 %v1431, 32
        %v5038 = vpop.permute.xlu0 %5037
        %5039 = vrot.lane.b32.xlu0 %v1432, 32
        %v5040 = vpop.permute.xlu0 %5039
        %5041 = vrot.lane.b32.xlu0 %v1433, 32
        %v5042 = vpop.permute.xlu0 %5041
        %v5044 = vsel %vm1434, %v4980, 0
        %v5047 = vsel %vm1434, %v4982, 0
        %v5050 = vsel %vm1434, %v4984, 0
        %v5053 = vsel %vm1434, %v4986, 0
        %v5056 = vsel %vm1434, %v4988, 0
        %v5059 = vsel %vm1434, %v4990, 0
        %v5062 = vsel %vm1434, %v4992, 0
        %v5065 = vsel %vm1434, %v4994, 0
        %v5068 = vsel %vm1434, %v4996, 0
        %v5071 = vsel %vm1434, %v4998, 0
        %v5074 = vsel %vm1434, %v5000, 0
        %v5077 = vsel %vm1434, %v5002, 0
        %v5080 = vsel %vm1434, %v5004, 0
        %v5083 = vsel %vm1434, %v5006, 0
        %v5086 = vsel %vm1434, %v5008, 0
        %v5089 = vsel %vm1434, %v5010, 0
        %v5092 = vsel %vm1434, %v5012, 0
        %v5095 = vsel %vm1434, %v5014, 0
        %v5098 = vsel %vm1434, %v5016, 0
        %v5101 = vsel %vm1434, %v5018, 0
        %v5104 = vsel %vm1434, %v5020, 0
        %v5107 = vsel %vm1434, %v5022, 0
        %v5110 = vsel %vm1434, %v5024, 0
        %v5113 = vsel %vm1434, %v5026, 0
        %v5116 = vsel %vm1434, %v5028, 0
        %v5119 = vsel %vm1434, %v5030, 0
        %v5122 = vsel %vm1434, %v5032, 0
        %v5125 = vsel %vm1434, %v5034, 0
        %v5128 = vsel %vm1434, %v5036, 0
        %v5131 = vsel %vm1434, %v5038, 0
        %v5134 = vsel %vm1434, %v5040, 0
        %v5137 = vsel %vm1434, %v5042, 0
        %5139 = vmatprep.subr.bf16.mxu0 0
        %5140 = vmatpush1.bf16.xpose.msra.mxu0 %v5113
        %5141 = vmatprep.subr.bf16.mxu0 0
        %5142 = vmatpush1.bf16.xpose.msra.mxu0 %v5110
        %5143 = vmatprep.subr.bf16.mxu0 0
        %5144 = vmatpush1.bf16.xpose.msra.mxu0 %v5107
        %5145 = vmatprep.subr.bf16.mxu0 0
        %5146 = vmatpush1.bf16.xpose.msra.mxu0 %v5104
        %5147 = vmatprep.subr.bf16.mxu0 0
        %5148 = vmatpush1.bf16.xpose.msra.mxu0 %v5101
        %5149 = vmatprep.subr.bf16.mxu0 0
        %5150 = vmatpush1.bf16.xpose.msra.mxu0 %v5098
        %5151 = vmatprep.subr.bf16.mxu0 0
        %5152 = vmatpush1.bf16.xpose.msra.mxu0 %v5095
        %5153 = vmatprep.subr.bf16.mxu0 0
        %5154 = vmatpush1.bf16.xpose.msra.mxu0 %v5092
        %5155 = vmatprep.subr.bf16.mxu0 0
        %5156 = vmatpush2.bf16.xpose.msra.mxu0 %v5137
        %5157 = vmatprep.subr.bf16.mxu0 0
        %5158 = vmatpush2.bf16.xpose.msra.mxu0 %v5134
        %5159 = vmatprep.subr.bf16.mxu0 0
        %5160 = vmatpush2.bf16.xpose.msra.mxu0 %v5131
        %5161 = vmatprep.subr.bf16.mxu0 0
        %5162 = vmatpush2.bf16.xpose.msra.mxu0 %v5128
        %5163 = vmatprep.subr.bf16.mxu0 0
        %5164 = vmatpush2.bf16.xpose.msra.mxu0 %v5125
        %5165 = vmatprep.subr.bf16.mxu0 0
        %5166 = vmatpush2.bf16.xpose.msra.mxu0 %v5122
        %5167 = vmatprep.subr.bf16.mxu0 0
        %5168 = vmatpush2.bf16.xpose.msra.mxu0 %v5119
        %5169 = vmatprep.subr.bf16.mxu0 0
        %5170 = vmatpush2.bf16.xpose.msra.mxu0 %v5116
        %5171 = vmatprep.mubr.bf16.mxu0 0
        %5172 = vmatmul.mubr.bf16.gmra.mxu0 %v5044
        %v5173 = vpop.f32.mrf.mxu0
        %v5174 = vadd.f32 0.0, %v5173
        %v5175 = vpop.f32.mrf.mxu0
        %v5176 = vadd.f32 0.0, %v5175
        %v5177 = vpop.f32.mrf.mxu0
        %v5178 = vadd.f32 0.0, %v5177
        %v5179 = vpop.f32.mrf.mxu0
        %v5180 = vadd.f32 0.0, %v5179
        %5181 = vmatprep.mubr.bf16.mxu0 0
        %5182 = vmatmul.mubr.bf16.gmra.mxu0 %v5047
        %v5183 = vpop.f32.mrf.mxu0
        %v5184 = vadd.f32 0.0, %v5183
        %v5185 = vpop.f32.mrf.mxu0
        %v5186 = vadd.f32 0.0, %v5185
        %v5187 = vpop.f32.mrf.mxu0
        %v5188 = vadd.f32 0.0, %v5187
        %v5189 = vpop.f32.mrf.mxu0
        %v5190 = vadd.f32 0.0, %v5189
        %5191 = vmatprep.mubr.bf16.mxu0 0
        %5192 = vmatmul.mubr.bf16.gmra.mxu0 %v5050
        %v5193 = vpop.f32.mrf.mxu0
        %v5194 = vadd.f32 0.0, %v5193
        %v5195 = vpop.f32.mrf.mxu0
        %v5196 = vadd.f32 0.0, %v5195
        %v5197 = vpop.f32.mrf.mxu0
        %v5198 = vadd.f32 0.0, %v5197
        %v5199 = vpop.f32.mrf.mxu0
        %v5200 = vadd.f32 0.0, %v5199
        %5201 = vmatprep.mubr.bf16.mxu0 0
        %5202 = vmatmul.mubr.bf16.gmra.mxu0 %v5053
        %v5203 = vpop.f32.mrf.mxu0
        %v5204 = vadd.f32 0.0, %v5203
        %v5205 = vpop.f32.mrf.mxu0
        %v5206 = vadd.f32 0.0, %v5205
        %v5207 = vpop.f32.mrf.mxu0
        %v5208 = vadd.f32 0.0, %v5207
        %v5209 = vpop.f32.mrf.mxu0
        %v5210 = vadd.f32 0.0, %v5209
        %5211 = vmatprep.mubr.bf16.mxu0 0
        %5212 = vmatmul.mubr.bf16.gmra.mxu0 %v5056
        %v5213 = vpop.f32.mrf.mxu0
        %v5214 = vadd.f32 0.0, %v5213
        %v5215 = vpop.f32.mrf.mxu0
        %v5216 = vadd.f32 0.0, %v5215
        %v5217 = vpop.f32.mrf.mxu0
        %v5218 = vadd.f32 0.0, %v5217
        %v5219 = vpop.f32.mrf.mxu0
        %v5220 = vadd.f32 0.0, %v5219
        %5221 = vmatprep.mubr.bf16.mxu0 0
        %5222 = vmatmul.mubr.bf16.gmra.mxu0 %v5059
        %v5223 = vpop.f32.mrf.mxu0
        %v5224 = vadd.f32 0.0, %v5223
        %v5225 = vpop.f32.mrf.mxu0
        %v5226 = vadd.f32 0.0, %v5225
        %v5227 = vpop.f32.mrf.mxu0
        %v5228 = vadd.f32 0.0, %v5227
        %v5229 = vpop.f32.mrf.mxu0
        %v5230 = vadd.f32 0.0, %v5229
        %5231 = vmatprep.mubr.bf16.mxu0 0
        %5232 = vmatmul.mubr.bf16.gmra.mxu0 %v5062
        %v5233 = vpop.f32.mrf.mxu0
        %v5234 = vadd.f32 0.0, %v5233
        %v5235 = vpop.f32.mrf.mxu0
        %v5236 = vadd.f32 0.0, %v5235
        %v5237 = vpop.f32.mrf.mxu0
        %v5238 = vadd.f32 0.0, %v5237
        %v5239 = vpop.f32.mrf.mxu0
        %v5240 = vadd.f32 0.0, %v5239
        %5241 = vmatprep.mubr.bf16.mxu0 0
        %5242 = vmatmul.mubr.bf16.gmra.mxu0 %v5065
        %v5243 = vpop.f32.mrf.mxu0
        %v5244 = vadd.f32 0.0, %v5243
        %v5245 = vpop.f32.mrf.mxu0
        %v5246 = vadd.f32 0.0, %v5245
        %v5247 = vpop.f32.mrf.mxu0
        %v5248 = vadd.f32 0.0, %v5247
        %v5249 = vpop.f32.mrf.mxu0
        %v5250 = vadd.f32 0.0, %v5249
        %5251 = vmatprep.mubr.bf16.mxu0 0
        %5252 = vmatmul.mubr.bf16.gmra.mxu0 %v5068
        %v5253 = vpop.f32.mrf.mxu0
        %v5254 = vadd.f32 0.0, %v5253
        %v5255 = vpop.f32.mrf.mxu0
        %v5256 = vadd.f32 0.0, %v5255
        %v5257 = vpop.f32.mrf.mxu0
        %v5258 = vadd.f32 0.0, %v5257
        %v5259 = vpop.f32.mrf.mxu0
        %v5260 = vadd.f32 0.0, %v5259
        %5261 = vmatprep.mubr.bf16.mxu0 0
        %5262 = vmatmul.mubr.bf16.gmra.mxu0 %v5071
        %v5263 = vpop.f32.mrf.mxu0
        %v5264 = vadd.f32 0.0, %v5263
        %v5265 = vpop.f32.mrf.mxu0
        %v5266 = vadd.f32 0.0, %v5265
        %v5267 = vpop.f32.mrf.mxu0
        %v5268 = vadd.f32 0.0, %v5267
        %v5269 = vpop.f32.mrf.mxu0
        %v5270 = vadd.f32 0.0, %v5269
        %5271 = vmatprep.mubr.bf16.mxu0 0
        %5272 = vmatmul.mubr.bf16.gmra.mxu0 %v5074
        %v5273 = vpop.f32.mrf.mxu0
        %v5274 = vadd.f32 0.0, %v5273
        %v5275 = vpop.f32.mrf.mxu0
        %v5276 = vadd.f32 0.0, %v5275
        %v5277 = vpop.f32.mrf.mxu0
        %v5278 = vadd.f32 0.0, %v5277
        %v5279 = vpop.f32.mrf.mxu0
        %v5280 = vadd.f32 0.0, %v5279
        %5281 = vmatprep.mubr.bf16.mxu0 0
        %5282 = vmatmul.mubr.bf16.gmra.mxu0 %v5077
        %v5283 = vpop.f32.mrf.mxu0
        %v5284 = vadd.f32 0.0, %v5283
        %v5285 = vpop.f32.mrf.mxu0
        %v5286 = vadd.f32 0.0, %v5285
        %v5287 = vpop.f32.mrf.mxu0
        %v5288 = vadd.f32 0.0, %v5287
        %v5289 = vpop.f32.mrf.mxu0
        %v5290 = vadd.f32 0.0, %v5289
        %5291 = vmatprep.mubr.bf16.mxu0 0
        %5292 = vmatmul.mubr.bf16.gmra.mxu0 %v5080
        %v5293 = vpop.f32.mrf.mxu0
        %v5294 = vadd.f32 0.0, %v5293
        %v5295 = vpop.f32.mrf.mxu0
        %v5296 = vadd.f32 0.0, %v5295
        %v5297 = vpop.f32.mrf.mxu0
        %v5298 = vadd.f32 0.0, %v5297
        %v5299 = vpop.f32.mrf.mxu0
        %v5300 = vadd.f32 0.0, %v5299
        %5301 = vmatprep.mubr.bf16.mxu0 0
        %5302 = vmatmul.mubr.bf16.gmra.mxu0 %v5083
        %v5303 = vpop.f32.mrf.mxu0
        %v5304 = vadd.f32 0.0, %v5303
        %v5305 = vpop.f32.mrf.mxu0
        %v5306 = vadd.f32 0.0, %v5305
        %v5307 = vpop.f32.mrf.mxu0
        %v5308 = vadd.f32 0.0, %v5307
        %v5309 = vpop.f32.mrf.mxu0
        %v5310 = vadd.f32 0.0, %v5309
        %5311 = vmatprep.mubr.bf16.mxu0 0
        %5312 = vmatmul.mubr.bf16.gmra.mxu0 %v5086
        %v5313 = vpop.f32.mrf.mxu0
        %v5314 = vadd.f32 0.0, %v5313
        %v5315 = vpop.f32.mrf.mxu0
        %v5316 = vadd.f32 0.0, %v5315
        %v5317 = vpop.f32.mrf.mxu0
        %v5318 = vadd.f32 0.0, %v5317
        %v5319 = vpop.f32.mrf.mxu0
        %v5320 = vadd.f32 0.0, %v5319
        %5321 = vmatprep.mubr.bf16.mxu0 0
        %5322 = vmatmul.mubr.bf16.gmra.mxu0 %v5089
        %v5323 = vpop.f32.mrf.mxu0
        %v5324 = vadd.f32 0.0, %v5323
        %v5325 = vpop.f32.mrf.mxu0
        %v5326 = vadd.f32 0.0, %v5325
        %v5327 = vpop.f32.mrf.mxu0
        %v5328 = vadd.f32 0.0, %v5327
        %v5329 = vpop.f32.mrf.mxu0
        %v5330 = vadd.f32 0.0, %v5329
        %5331 = vdwg.mxu0
        %v5332 = vmax.f32 %v5174, %v5176
        %5333 = vmax.xlane.f32.xlu0 %v5332
        %v5334 = vpop.xlane.xlu0 %5333
        %v5335 = vmax.f32 %v5178, %v5180
        %5336 = vmax.xlane.f32.xlu0 %v5335
        %v5337 = vpop.xlane.xlu0 %5336
        %v5338 = vmax.f32 %v5184, %v5186
        %5339 = vmax.xlane.f32.xlu0 %v5338
        %v5340 = vpop.xlane.xlu0 %5339
        %v5341 = vmax.f32 %v5188, %v5190
        %5342 = vmax.xlane.f32.xlu0 %v5341
        %v5343 = vpop.xlane.xlu0 %5342
        %v5344 = vmax.f32 %v5194, %v5196
        %5345 = vmax.xlane.f32.xlu0 %v5344
        %v5346 = vpop.xlane.xlu0 %5345
        %v5347 = vmax.f32 %v5198, %v5200
        %5348 = vmax.xlane.f32.xlu0 %v5347
        %v5349 = vpop.xlane.xlu0 %5348
        %v5350 = vmax.f32 %v5204, %v5206
        %5351 = vmax.xlane.f32.xlu0 %v5350
        %v5352 = vpop.xlane.xlu0 %5351
        %v5353 = vmax.f32 %v5208, %v5210
        %5354 = vmax.xlane.f32.xlu0 %v5353
        %v5355 = vpop.xlane.xlu0 %5354
        %v5356 = vmax.f32 %v5214, %v5216
        %5357 = vmax.xlane.f32.xlu0 %v5356
        %v5358 = vpop.xlane.xlu0 %5357
        %v5359 = vmax.f32 %v5218, %v5220
        %5360 = vmax.xlane.f32.xlu0 %v5359
        %v5361 = vpop.xlane.xlu0 %5360
        %v5362 = vmax.f32 %v5224, %v5226
        %5363 = vmax.xlane.f32.xlu0 %v5362
        %v5364 = vpop.xlane.xlu0 %5363
        %v5365 = vmax.f32 %v5228, %v5230
        %5366 = vmax.xlane.f32.xlu0 %v5365
        %v5367 = vpop.xlane.xlu0 %5366
        %v5368 = vmax.f32 %v5234, %v5236
        %5369 = vmax.xlane.f32.xlu0 %v5368
        %v5370 = vpop.xlane.xlu0 %5369
        %v5371 = vmax.f32 %v5238, %v5240
        %5372 = vmax.xlane.f32.xlu0 %v5371
        %v5373 = vpop.xlane.xlu0 %5372
        %v5374 = vmax.f32 %v5244, %v5246
        %5375 = vmax.xlane.f32.xlu0 %v5374
        %v5376 = vpop.xlane.xlu0 %5375
        %v5377 = vmax.f32 %v5248, %v5250
        %5378 = vmax.xlane.f32.xlu0 %v5377
        %v5379 = vpop.xlane.xlu0 %5378
        %v5380 = vmax.f32 %v5254, %v5256
        %5381 = vmax.xlane.f32.xlu0 %v5380
        %v5382 = vpop.xlane.xlu0 %5381
        %v5383 = vmax.f32 %v5258, %v5260
        %5384 = vmax.xlane.f32.xlu0 %v5383
        %v5385 = vpop.xlane.xlu0 %5384
        %v5386 = vmax.f32 %v5264, %v5266
        %5387 = vmax.xlane.f32.xlu0 %v5386
        %v5388 = vpop.xlane.xlu0 %5387
        %v5389 = vmax.f32 %v5268, %v5270
        %5390 = vmax.xlane.f32.xlu0 %v5389
        %v5391 = vpop.xlane.xlu0 %5390
        %v5392 = vmax.f32 %v5274, %v5276
        %5393 = vmax.xlane.f32.xlu0 %v5392
        %v5394 = vpop.xlane.xlu0 %5393
        %v5395 = vmax.f32 %v5278, %v5280
        %5396 = vmax.xlane.f32.xlu0 %v5395
        %v5397 = vpop.xlane.xlu0 %5396
        %v5398 = vmax.f32 %v5284, %v5286
        %5399 = vmax.xlane.f32.xlu0 %v5398
        %v5400 = vpop.xlane.xlu0 %5399
        %v5401 = vmax.f32 %v5288, %v5290
        %5402 = vmax.xlane.f32.xlu0 %v5401
        %v5403 = vpop.xlane.xlu0 %5402
        %v5404 = vmax.f32 %v5294, %v5296
        %5405 = vmax.xlane.f32.xlu0 %v5404
        %v5406 = vpop.xlane.xlu0 %5405
        %v5407 = vmax.f32 %v5298, %v5300
        %5408 = vmax.xlane.f32.xlu0 %v5407
        %v5409 = vpop.xlane.xlu0 %5408
        %v5410 = vmax.f32 %v5304, %v5306
        %5411 = vmax.xlane.f32.xlu0 %v5410
        %v5412 = vpop.xlane.xlu0 %5411
        %v5413 = vmax.f32 %v5308, %v5310
        %5414 = vmax.xlane.f32.xlu0 %v5413
        %v5415 = vpop.xlane.xlu0 %5414
        %v5416 = vmax.f32 %v5314, %v5316
        %5417 = vmax.xlane.f32.xlu0 %v5416
        %v5418 = vpop.xlane.xlu0 %5417
        %v5419 = vmax.f32 %v5318, %v5320
        %5420 = vmax.xlane.f32.xlu0 %v5419
        %v5421 = vpop.xlane.xlu0 %5420
        %v5422 = vmax.f32 %v5324, %v5326
        %5423 = vmax.xlane.f32.xlu0 %v5422
        %v5424 = vpop.xlane.xlu0 %5423
        %v5425 = vmax.f32 %v5328, %v5330
        %5426 = vmax.xlane.f32.xlu0 %v5425
        %v5427 = vpop.xlane.xlu0 %5426
        %v5428 = vsub.f32 %v5174, %v5334
        %v5429 = vsub.f32 %v5176, %v5334
        %v5430 = vsub.f32 %v5178, %v5337
        %v5431 = vsub.f32 %v5180, %v5337
        %v5432 = vsub.f32 %v5184, %v5340
        %v5433 = vsub.f32 %v5186, %v5340
        %v5434 = vsub.f32 %v5188, %v5343
        %v5435 = vsub.f32 %v5190, %v5343
        %v5436 = vsub.f32 %v5194, %v5346
        %v5437 = vsub.f32 %v5196, %v5346
        %v5438 = vsub.f32 %v5198, %v5349
        %v5439 = vsub.f32 %v5200, %v5349
        %v5440 = vsub.f32 %v5204, %v5352
        %v5441 = vsub.f32 %v5206, %v5352
        %v5442 = vsub.f32 %v5208, %v5355
        %v5443 = vsub.f32 %v5210, %v5355
        %v5444 = vsub.f32 %v5214, %v5358
        %v5445 = vsub.f32 %v5216, %v5358
        %v5446 = vsub.f32 %v5218, %v5361
        %v5447 = vsub.f32 %v5220, %v5361
        %v5448 = vsub.f32 %v5224, %v5364
        %v5449 = vsub.f32 %v5226, %v5364
        %v5450 = vsub.f32 %v5228, %v5367
        %v5451 = vsub.f32 %v5230, %v5367
        %v5452 = vsub.f32 %v5234, %v5370
        %v5453 = vsub.f32 %v5236, %v5370
        %v5454 = vsub.f32 %v5238, %v5373
        %v5455 = vsub.f32 %v5240, %v5373
        %v5456 = vsub.f32 %v5244, %v5376
        %v5457 = vsub.f32 %v5246, %v5376
        %v5458 = vsub.f32 %v5248, %v5379
        %v5459 = vsub.f32 %v5250, %v5379
        %v5460 = vsub.f32 %v5254, %v5382
        %v5461 = vsub.f32 %v5256, %v5382
        %v5462 = vsub.f32 %v5258, %v5385
        %v5463 = vsub.f32 %v5260, %v5385
        %v5464 = vsub.f32 %v5264, %v5388
        %v5465 = vsub.f32 %v5266, %v5388
        %v5466 = vsub.f32 %v5268, %v5391
        %v5467 = vsub.f32 %v5270, %v5391
        %v5468 = vsub.f32 %v5274, %v5394
        %v5469 = vsub.f32 %v5276, %v5394
        %v5470 = vsub.f32 %v5278, %v5397
        %v5471 = vsub.f32 %v5280, %v5397
        %v5472 = vsub.f32 %v5284, %v5400
        %v5473 = vsub.f32 %v5286, %v5400
        %v5474 = vsub.f32 %v5288, %v5403
        %v5475 = vsub.f32 %v5290, %v5403
        %v5476 = vsub.f32 %v5294, %v5406
        %v5477 = vsub.f32 %v5296, %v5406
        %v5478 = vsub.f32 %v5298, %v5409
        %v5479 = vsub.f32 %v5300, %v5409
        %v5480 = vsub.f32 %v5304, %v5412
        %v5481 = vsub.f32 %v5306, %v5412
        %v5482 = vsub.f32 %v5308, %v5415
        %v5483 = vsub.f32 %v5310, %v5415
        %v5484 = vsub.f32 %v5314, %v5418
        %v5485 = vsub.f32 %v5316, %v5418
        %v5486 = vsub.f32 %v5318, %v5421
        %v5487 = vsub.f32 %v5320, %v5421
        %v5488 = vsub.f32 %v5324, %v5424
        %v5489 = vsub.f32 %v5326, %v5424
        %v5490 = vsub.f32 %v5328, %v5427
        %v5491 = vsub.f32 %v5330, %v5427
        %v5492 = vmul.f32 %v5428, 1.442695
        %v5493 = vpow.pop %v5492
        %v5494 = vmul.f32 %v5429, 1.442695
        %v5495 = vpow.pop %v5494
        %v5496 = vmul.f32 %v5430, 1.442695
        %v5497 = vpow.pop %v5496
        %v5498 = vmul.f32 %v5431, 1.442695
        %v5499 = vpow.pop %v5498
        %v5500 = vmul.f32 %v5432, 1.442695
        %v5501 = vpow.pop %v5500
        %v5502 = vmul.f32 %v5433, 1.442695
        %v5503 = vpow.pop %v5502
        %v5504 = vmul.f32 %v5434, 1.442695
        %v5505 = vpow.pop %v5504
        %v5506 = vmul.f32 %v5435, 1.442695
        %v5507 = vpow.pop %v5506
        %v5508 = vmul.f32 %v5436, 1.442695
        %v5509 = vpow.pop %v5508
        %v5510 = vmul.f32 %v5437, 1.442695
        %v5511 = vpow.pop %v5510
        %v5512 = vmul.f32 %v5438, 1.442695
        %v5513 = vpow.pop %v5512
        %v5514 = vmul.f32 %v5439, 1.442695
        %v5515 = vpow.pop %v5514
        %v5516 = vmul.f32 %v5440, 1.442695
        %v5517 = vpow.pop %v5516
        %v5518 = vmul.f32 %v5441, 1.442695
        %v5519 = vpow.pop %v5518
        %v5520 = vmul.f32 %v5442, 1.442695
        %v5521 = vpow.pop %v5520
        %v5522 = vmul.f32 %v5443, 1.442695
        %v5523 = vpow.pop %v5522
        %v5524 = vmul.f32 %v5444, 1.442695
        %v5525 = vpow.pop %v5524
        %v5526 = vmul.f32 %v5445, 1.442695
        %v5527 = vpow.pop %v5526
        %v5528 = vmul.f32 %v5446, 1.442695
        %v5529 = vpow.pop %v5528
        %v5530 = vmul.f32 %v5447, 1.442695
        %v5531 = vpow.pop %v5530
        %v5532 = vmul.f32 %v5448, 1.442695
        %v5533 = vpow.pop %v5532
        %v5534 = vmul.f32 %v5449, 1.442695
        %v5535 = vpow.pop %v5534
        %v5536 = vmul.f32 %v5450, 1.442695
        %v5537 = vpow.pop %v5536
        %v5538 = vmul.f32 %v5451, 1.442695
        %v5539 = vpow.pop %v5538
        %v5540 = vmul.f32 %v5452, 1.442695
        %v5541 = vpow.pop %v5540
        %v5542 = vmul.f32 %v5453, 1.442695
        %v5543 = vpow.pop %v5542
        %v5544 = vmul.f32 %v5454, 1.442695
        %v5545 = vpow.pop %v5544
        %v5546 = vmul.f32 %v5455, 1.442695
        %v5547 = vpow.pop %v5546
        %v5548 = vmul.f32 %v5456, 1.442695
        %v5549 = vpow.pop %v5548
        %v5550 = vmul.f32 %v5457, 1.442695
        %v5551 = vpow.pop %v5550
        %v5552 = vmul.f32 %v5458, 1.442695
        %v5553 = vpow.pop %v5552
        %v5554 = vmul.f32 %v5459, 1.442695
        %v5555 = vpow.pop %v5554
        %v5556 = vmul.f32 %v5460, 1.442695
        %v5557 = vpow.pop %v5556
        %v5558 = vmul.f32 %v5461, 1.442695
        %v5559 = vpow.pop %v5558
        %v5560 = vmul.f32 %v5462, 1.442695
        %v5561 = vpow.pop %v5560
        %v5562 = vmul.f32 %v5463, 1.442695
        %v5563 = vpow.pop %v5562
        %v5564 = vmul.f32 %v5464, 1.442695
        %v5565 = vpow.pop %v5564
        %v5566 = vmul.f32 %v5465, 1.442695
        %v5567 = vpow.pop %v5566
        %v5568 = vmul.f32 %v5466, 1.442695
        %v5569 = vpow.pop %v5568
        %v5570 = vmul.f32 %v5467, 1.442695
        %v5571 = vpow.pop %v5570
        %v5572 = vmul.f32 %v5468, 1.442695
        %v5573 = vpow.pop %v5572
        %v5574 = vmul.f32 %v5469, 1.442695
        %v5575 = vpow.pop %v5574
        %v5576 = vmul.f32 %v5470, 1.442695
        %v5577 = vpow.pop %v5576
        %v5578 = vmul.f32 %v5471, 1.442695
        %v5579 = vpow.pop %v5578
        %v5580 = vmul.f32 %v5472, 1.442695
        %v5581 = vpow.pop %v5580
        %v5582 = vmul.f32 %v5473, 1.442695
        %v5583 = vpow.pop %v5582
        %v5584 = vmul.f32 %v5474, 1.442695
        %v5585 = vpow.pop %v5584
        %v5586 = vmul.f32 %v5475, 1.442695
        %v5587 = vpow.pop %v5586
        %v5588 = vmul.f32 %v5476, 1.442695
        %v5589 = vpow.pop %v5588
        %v5590 = vmul.f32 %v5477, 1.442695
        %v5591 = vpow.pop %v5590
        %v5592 = vmul.f32 %v5478, 1.442695
        %v5593 = vpow.pop %v5592
        %v5594 = vmul.f32 %v5479, 1.442695
        %v5595 = vpow.pop %v5594
        %v5596 = vmul.f32 %v5480, 1.442695
        %v5597 = vpow.pop %v5596
        %v5598 = vmul.f32 %v5481, 1.442695
        %v5599 = vpow.pop %v5598
        %v5600 = vmul.f32 %v5482, 1.442695
        %v5601 = vpow.pop %v5600
        %v5602 = vmul.f32 %v5483, 1.442695
        %v5603 = vpow.pop %v5602
        %v5604 = vmul.f32 %v5484, 1.442695
        %v5605 = vpow.pop %v5604
        %v5606 = vmul.f32 %v5485, 1.442695
        %v5607 = vpow.pop %v5606
        %v5608 = vmul.f32 %v5486, 1.442695
        %v5609 = vpow.pop %v5608
        %v5610 = vmul.f32 %v5487, 1.442695
        %v5611 = vpow.pop %v5610
        %v5612 = vmul.f32 %v5488, 1.442695
        %v5613 = vpow.pop %v5612
        %v5614 = vmul.f32 %v5489, 1.442695
        %v5615 = vpow.pop %v5614
        %v5616 = vmul.f32 %v5490, 1.442695
        %v5617 = vpow.pop %v5616
        %v5618 = vmul.f32 %v5491, 1.442695
        %v5619 = vpow.pop %v5618
        %v5620 = vadd.f32 %v5493, %v5495
        %5621 = vadd.xlane.f32.xlu0 %v5620
        %v5622 = vpop.xlane.xlu0 %5621
        %v5623 = vadd.f32 %v5497, %v5499
        %5624 = vadd.xlane.f32.xlu0 %v5623
        %v5625 = vpop.xlane.xlu0 %5624
        %v5626 = vadd.f32 %v5501, %v5503
        %5627 = vadd.xlane.f32.xlu0 %v5626
        %v5628 = vpop.xlane.xlu0 %5627
        %v5629 = vadd.f32 %v5505, %v5507
        %5630 = vadd.xlane.f32.xlu0 %v5629
        %v5631 = vpop.xlane.xlu0 %5630
        %v5632 = vadd.f32 %v5509, %v5511
        %5633 = vadd.xlane.f32.xlu0 %v5632
        %v5634 = vpop.xlane.xlu0 %5633
        %v5635 = vadd.f32 %v5513, %v5515
        %5636 = vadd.xlane.f32.xlu0 %v5635
        %v5637 = vpop.xlane.xlu0 %5636
        %v5638 = vadd.f32 %v5517, %v5519
        %5639 = vadd.xlane.f32.xlu0 %v5638
        %v5640 = vpop.xlane.xlu0 %5639
        %v5641 = vadd.f32 %v5521, %v5523
        %5642 = vadd.xlane.f32.xlu0 %v5641
        %v5643 = vpop.xlane.xlu0 %5642
        %v5644 = vadd.f32 %v5525, %v5527
        %5645 = vadd.xlane.f32.xlu0 %v5644
        %v5646 = vpop.xlane.xlu0 %5645
        %v5647 = vadd.f32 %v5529, %v5531
        %5648 = vadd.xlane.f32.xlu0 %v5647
        %v5649 = vpop.xlane.xlu0 %5648
        %v5650 = vadd.f32 %v5533, %v5535
        %5651 = vadd.xlane.f32.xlu0 %v5650
        %v5652 = vpop.xlane.xlu0 %5651
        %v5653 = vadd.f32 %v5537, %v5539
        %5654 = vadd.xlane.f32.xlu0 %v5653
        %v5655 = vpop.xlane.xlu0 %5654
        %v5656 = vadd.f32 %v5541, %v5543
        %5657 = vadd.xlane.f32.xlu0 %v5656
        %v5658 = vpop.xlane.xlu0 %5657
        %v5659 = vadd.f32 %v5545, %v5547
        %5660 = vadd.xlane.f32.xlu0 %v5659
        %v5661 = vpop.xlane.xlu0 %5660
        %v5662 = vadd.f32 %v5549, %v5551
        %5663 = vadd.xlane.f32.xlu0 %v5662
        %v5664 = vpop.xlane.xlu0 %5663
        %v5665 = vadd.f32 %v5553, %v5555
        %5666 = vadd.xlane.f32.xlu0 %v5665
        %v5667 = vpop.xlane.xlu0 %5666
        %v5668 = vadd.f32 %v5557, %v5559
        %5669 = vadd.xlane.f32.xlu0 %v5668
        %v5670 = vpop.xlane.xlu0 %5669
        %v5671 = vadd.f32 %v5561, %v5563
        %5672 = vadd.xlane.f32.xlu0 %v5671
        %v5673 = vpop.xlane.xlu0 %5672
        %v5674 = vadd.f32 %v5565, %v5567
        %5675 = vadd.xlane.f32.xlu0 %v5674
        %v5676 = vpop.xlane.xlu0 %5675
        %v5677 = vadd.f32 %v5569, %v5571
        %5678 = vadd.xlane.f32.xlu0 %v5677
        %v5679 = vpop.xlane.xlu0 %5678
        %v5680 = vadd.f32 %v5573, %v5575
        %5681 = vadd.xlane.f32.xlu0 %v5680
        %v5682 = vpop.xlane.xlu0 %5681
        %v5683 = vadd.f32 %v5577, %v5579
        %5684 = vadd.xlane.f32.xlu0 %v5683
        %v5685 = vpop.xlane.xlu0 %5684
        %v5686 = vadd.f32 %v5581, %v5583
        %5687 = vadd.xlane.f32.xlu0 %v5686
        %v5688 = vpop.xlane.xlu0 %5687
        %v5689 = vadd.f32 %v5585, %v5587
        %5690 = vadd.xlane.f32.xlu0 %v5689
        %v5691 = vpop.xlane.xlu0 %5690
        %v5692 = vadd.f32 %v5589, %v5591
        %5693 = vadd.xlane.f32.xlu0 %v5692
        %v5694 = vpop.xlane.xlu0 %5693
        %v5695 = vadd.f32 %v5593, %v5595
        %5696 = vadd.xlane.f32.xlu0 %v5695
        %v5697 = vpop.xlane.xlu0 %5696
        %v5698 = vadd.f32 %v5597, %v5599
        %5699 = vadd.xlane.f32.xlu0 %v5698
        %v5700 = vpop.xlane.xlu0 %5699
        %v5701 = vadd.f32 %v5601, %v5603
        %5702 = vadd.xlane.f32.xlu0 %v5701
        %v5703 = vpop.xlane.xlu0 %5702
        %v5704 = vadd.f32 %v5605, %v5607
        %5705 = vadd.xlane.f32.xlu0 %v5704
        %v5706 = vpop.xlane.xlu0 %5705
        %v5707 = vadd.f32 %v5609, %v5611
        %5708 = vadd.xlane.f32.xlu0 %v5707
        %v5709 = vpop.xlane.xlu0 %5708
        %v5710 = vadd.f32 %v5613, %v5615
        %5711 = vadd.xlane.f32.xlu0 %v5710
        %v5712 = vpop.xlane.xlu0 %5711
        %v5713 = vadd.f32 %v5617, %v5619
        %5714 = vadd.xlane.f32.xlu0 %v5713
        %v5715 = vpop.xlane.xlu0 %5714
        %v5716 = vrcp.pop %v5622
        %v5717 = vrcp.pop %v5625
        %v5718 = vrcp.pop %v5628
        %v5719 = vrcp.pop %v5631
        %v5720 = vrcp.pop %v5634
        %v5721 = vrcp.pop %v5637
        %v5722 = vrcp.pop %v5640
        %v5723 = vrcp.pop %v5643
        %v5724 = vrcp.pop %v5646
        %v5725 = vrcp.pop %v5649
        %v5726 = vrcp.pop %v5652
        %v5727 = vrcp.pop %v5655
        %v5728 = vrcp.pop %v5658
        %v5729 = vrcp.pop %v5661
        %v5730 = vrcp.pop %v5664
        %v5731 = vrcp.pop %v5667
        %v5732 = vrcp.pop %v5670
        %v5733 = vrcp.pop %v5673
        %v5734 = vrcp.pop %v5676
        %v5735 = vrcp.pop %v5679
        %v5736 = vrcp.pop %v5682
        %v5737 = vrcp.pop %v5685
        %v5738 = vrcp.pop %v5688
        %v5739 = vrcp.pop %v5691
        %v5740 = vrcp.pop %v5694
        %v5741 = vrcp.pop %v5697
        %v5742 = vrcp.pop %v5700
        %v5743 = vrcp.pop %v5703
        %v5744 = vrcp.pop %v5706
        %v5745 = vrcp.pop %v5709
        %v5746 = vrcp.pop %v5712
        %v5747 = vrcp.pop %v5715
        %v5748 = vmul.f32 %v5493, %v5716
        %v5749 = vmul.f32 %v5495, %v5716
        %v5750 = vmul.f32 %v5497, %v5717
        %v5751 = vmul.f32 %v5499, %v5717
        %v5752 = vmul.f32 %v5501, %v5718
        %v5753 = vmul.f32 %v5503, %v5718
        %v5754 = vmul.f32 %v5505, %v5719
        %v5755 = vmul.f32 %v5507, %v5719
        %v5756 = vmul.f32 %v5509, %v5720
        %v5757 = vmul.f32 %v5511, %v5720
        %v5758 = vmul.f32 %v5513, %v5721
        %v5759 = vmul.f32 %v5515, %v5721
        %v5760 = vmul.f32 %v5517, %v5722
        %v5761 = vmul.f32 %v5519, %v5722
        %v5762 = vmul.f32 %v5521, %v5723
        %v5763 = vmul.f32 %v5523, %v5723
        %v5764 = vmul.f32 %v5525, %v5724
        %v5765 = vmul.f32 %v5527, %v5724
        %v5766 = vmul.f32 %v5529, %v5725
        %v5767 = vmul.f32 %v5531, %v5725
        %v5768 = vmul.f32 %v5533, %v5726
        %v5769 = vmul.f32 %v5535, %v5726
        %v5770 = vmul.f32 %v5537, %v5727
        %v5771 = vmul.f32 %v5539, %v5727
        %v5772 = vmul.f32 %v5541, %v5728
        %v5773 = vmul.f32 %v5543, %v5728
        %v5774 = vmul.f32 %v5545, %v5729
        %v5775 = vmul.f32 %v5547, %v5729
        %v5776 = vmul.f32 %v5549, %v5730
        %v5777 = vmul.f32 %v5551, %v5730
        %v5778 = vmul.f32 %v5553, %v5731
        %v5779 = vmul.f32 %v5555, %v5731
        %v5780 = vmul.f32 %v5557, %v5732
        %v5781 = vmul.f32 %v5559, %v5732
        %v5782 = vmul.f32 %v5561, %v5733
        %v5783 = vmul.f32 %v5563, %v5733
        %v5784 = vmul.f32 %v5565, %v5734
        %v5785 = vmul.f32 %v5567, %v5734
        %v5786 = vmul.f32 %v5569, %v5735
        %v5787 = vmul.f32 %v5571, %v5735
        %v5788 = vmul.f32 %v5573, %v5736
        %v5789 = vmul.f32 %v5575, %v5736
        %v5790 = vmul.f32 %v5577, %v5737
        %v5791 = vmul.f32 %v5579, %v5737
        %v5792 = vmul.f32 %v5581, %v5738
        %v5793 = vmul.f32 %v5583, %v5738
        %v5794 = vmul.f32 %v5585, %v5739
        %v5795 = vmul.f32 %v5587, %v5739
        %v5796 = vmul.f32 %v5589, %v5740
        %v5797 = vmul.f32 %v5591, %v5740
        %v5798 = vmul.f32 %v5593, %v5741
        %v5799 = vmul.f32 %v5595, %v5741
        %v5800 = vmul.f32 %v5597, %v5742
        %v5801 = vmul.f32 %v5599, %v5742
        %v5802 = vmul.f32 %v5601, %v5743
        %v5803 = vmul.f32 %v5603, %v5743
        %v5804 = vmul.f32 %v5605, %v5744
        %v5805 = vmul.f32 %v5607, %v5744
        %v5806 = vmul.f32 %v5609, %v5745
        %v5807 = vmul.f32 %v5611, %v5745
        %v5808 = vmul.f32 %v5613, %v5746
        %v5809 = vmul.f32 %v5615, %v5746
        %v5810 = vmul.f32 %v5617, %v5747
        %v5811 = vmul.f32 %v5619, %v5747
        %v5812 = vpack.c.bf16 %v5750, %v5748
        %v5813 = vpack.c.bf16 %v5751, %v5749
        %v5814 = vpack.c.bf16 %v5754, %v5752
        %v5815 = vpack.c.bf16 %v5755, %v5753
        %v5816 = vpack.c.bf16 %v5758, %v5756
        %v5817 = vpack.c.bf16 %v5759, %v5757
        %v5818 = vpack.c.bf16 %v5762, %v5760
        %v5819 = vpack.c.bf16 %v5763, %v5761
        %v5820 = vpack.c.bf16 %v5766, %v5764
        %v5821 = vpack.c.bf16 %v5767, %v5765
        %v5822 = vpack.c.bf16 %v5770, %v5768
        %v5823 = vpack.c.bf16 %v5771, %v5769
        %v5824 = vpack.c.bf16 %v5774, %v5772
        %v5825 = vpack.c.bf16 %v5775, %v5773
        %v5826 = vpack.c.bf16 %v5778, %v5776
        %v5827 = vpack.c.bf16 %v5779, %v5777
        %v5828 = vpack.c.bf16 %v5782, %v5780
        %v5829 = vpack.c.bf16 %v5783, %v5781
        %v5830 = vpack.c.bf16 %v5786, %v5784
        %v5831 = vpack.c.bf16 %v5787, %v5785
        %v5832 = vpack.c.bf16 %v5790, %v5788
        %v5833 = vpack.c.bf16 %v5791, %v5789
        %v5834 = vpack.c.bf16 %v5794, %v5792
        %v5835 = vpack.c.bf16 %v5795, %v5793
        %v5836 = vpack.c.bf16 %v5798, %v5796
        %v5837 = vpack.c.bf16 %v5799, %v5797
        %v5838 = vpack.c.bf16 %v5802, %v5800
        %v5839 = vpack.c.bf16 %v5803, %v5801
        %v5840 = vpack.c.bf16 %v5806, %v5804
        %v5841 = vpack.c.bf16 %v5807, %v5805
        %v5842 = vpack.c.bf16 %v5810, %v5808
        %v5843 = vpack.c.bf16 %v5811, %v5809
        %5844 = vrot.lane.b32.xlu0 %v2268, 32
        %v5845 = vpop.permute.xlu0 %5844
        %5846 = vrot.lane.b32.xlu0 %v2269, 32
        %v5847 = vpop.permute.xlu0 %5846
        %5848 = vrot.lane.b32.xlu0 %v2270, 32
        %v5849 = vpop.permute.xlu0 %5848
        %5850 = vrot.lane.b32.xlu0 %v2271, 32
        %v5851 = vpop.permute.xlu0 %5850
        %5852 = vrot.lane.b32.xlu0 %v2272, 32
        %v5853 = vpop.permute.xlu0 %5852
        %5854 = vrot.lane.b32.xlu0 %v2273, 32
        %v5855 = vpop.permute.xlu0 %5854
        %5856 = vrot.lane.b32.xlu0 %v2274, 32
        %v5857 = vpop.permute.xlu0 %5856
        %5858 = vrot.lane.b32.xlu0 %v2275, 32
        %v5859 = vpop.permute.xlu0 %5858
        %5860 = vrot.lane.b32.xlu0 %v2276, 32
        %v5861 = vpop.permute.xlu0 %5860
        %5862 = vrot.lane.b32.xlu0 %v2277, 32
        %v5863 = vpop.permute.xlu0 %5862
        %5864 = vrot.lane.b32.xlu0 %v2278, 32
        %v5865 = vpop.permute.xlu0 %5864
        %5866 = vrot.lane.b32.xlu0 %v2279, 32
        %v5867 = vpop.permute.xlu0 %5866
        %5868 = vrot.lane.b32.xlu0 %v2280, 32
        %v5869 = vpop.permute.xlu0 %5868
        %5870 = vrot.lane.b32.xlu0 %v2281, 32
        %v5871 = vpop.permute.xlu0 %5870
        %5872 = vrot.lane.b32.xlu0 %v2282, 32
        %v5873 = vpop.permute.xlu0 %5872
        %5874 = vrot.lane.b32.xlu0 %v2283, 32
        %v5875 = vpop.permute.xlu0 %5874
        %5892 = vmatprep.subr.bf16.mxu0 0
        %5893 = vmatpush1.bf16.msra.mxu0 %v5859
        %5894 = vmatprep.subr.bf16.mxu0 0
        %5895 = vmatpush1.bf16.msra.mxu0 %v5857
        %5896 = vmatprep.subr.bf16.mxu0 0
        %5897 = vmatpush1.bf16.msra.mxu0 %v5855
        %5898 = vmatprep.subr.bf16.mxu0 0
        %5899 = vmatpush1.bf16.msra.mxu0 %v5853
        %5900 = vmatprep.subr.bf16.mxu0 0
        %5901 = vmatpush1.bf16.msra.mxu0 %v5851
        %5902 = vmatprep.subr.bf16.mxu0 0
        %5903 = vmatpush1.bf16.msra.mxu0 %v5849
        %5904 = vmatprep.subr.bf16.mxu0 0
        %5905 = vmatpush1.bf16.msra.mxu0 %v5847
        %5906 = vmatprep.subr.bf16.mxu0 0
        %5907 = vmatpush1.bf16.msra.mxu0 %v5845
        %5908 = vmatprep.subr.bf16.mxu0 0
        %5909 = vmatpush2.bf16.msra.mxu0 %v5875
        %5910 = vmatprep.subr.bf16.mxu0 0
        %5911 = vmatpush2.bf16.msra.mxu0 %v5873
        %5912 = vmatprep.subr.bf16.mxu0 0
        %5913 = vmatpush2.bf16.msra.mxu0 %v5871
        %5914 = vmatprep.subr.bf16.mxu0 0
        %5915 = vmatpush2.bf16.msra.mxu0 %v5869
        %5916 = vmatprep.subr.bf16.mxu0 0
        %5917 = vmatpush2.bf16.msra.mxu0 %v5867
        %5918 = vmatprep.subr.bf16.mxu0 0
        %5919 = vmatpush2.bf16.msra.mxu0 %v5865
        %5920 = vmatprep.subr.bf16.mxu0 0
        %5921 = vmatpush2.bf16.msra.mxu0 %v5863
        %5922 = vmatprep.subr.bf16.mxu0 0
        %5923 = vmatpush2.bf16.msra.mxu0 %v5861
        %5924 = vmatprep.mubr.bf16.mxu0 %v5813
        %5925 = vmatmul.mubr.bf16.gmra.mxu0 %v5812
        %v5926 = vpop.f32.mrf.mxu0
        %v5927 = vadd.f32 0.0, %v5926
        %v5928 = vpop.f32.mrf.mxu0
        %v5929 = vpop.f32.mrf.mxu0
        %v5930 = vadd.f32 0.0, %v5929
        %v5931 = vpop.f32.mrf.mxu0
        %5932 = vmatprep.mubr.bf16.mxu0 %v5815
        %5933 = vmatmul.mubr.bf16.gmra.mxu0 %v5814
        %v5934 = vpop.f32.mrf.mxu0
        %v5935 = vadd.f32 0.0, %v5934
        %v5936 = vpop.f32.mrf.mxu0
        %v5937 = vpop.f32.mrf.mxu0
        %v5938 = vadd.f32 0.0, %v5937
        %v5939 = vpop.f32.mrf.mxu0
        %5940 = vmatprep.mubr.bf16.mxu0 %v5817
        %5941 = vmatmul.mubr.bf16.gmra.mxu0 %v5816
        %v5942 = vpop.f32.mrf.mxu0
        %v5943 = vadd.f32 0.0, %v5942
        %v5944 = vpop.f32.mrf.mxu0
        %v5945 = vpop.f32.mrf.mxu0
        %v5946 = vadd.f32 0.0, %v5945
        %v5947 = vpop.f32.mrf.mxu0
        %5948 = vmatprep.mubr.bf16.mxu0 %v5819
        %5949 = vmatmul.mubr.bf16.gmra.mxu0 %v5818
        %v5950 = vpop.f32.mrf.mxu0
        %v5951 = vadd.f32 0.0, %v5950
        %v5952 = vpop.f32.mrf.mxu0
        %v5953 = vpop.f32.mrf.mxu0
        %v5954 = vadd.f32 0.0, %v5953
        %v5955 = vpop.f32.mrf.mxu0
        %5956 = vmatprep.mubr.bf16.mxu0 %v5821
        %5957 = vmatmul.mubr.bf16.gmra.mxu0 %v5820
        %v5958 = vpop.f32.mrf.mxu0
        %v5959 = vadd.f32 0.0, %v5958
        %v5960 = vpop.f32.mrf.mxu0
        %v5961 = vpop.f32.mrf.mxu0
        %v5962 = vadd.f32 0.0, %v5961
        %v5963 = vpop.f32.mrf.mxu0
        %5964 = vmatprep.mubr.bf16.mxu0 %v5823
        %5965 = vmatmul.mubr.bf16.gmra.mxu0 %v5822
        %v5966 = vpop.f32.mrf.mxu0
        %v5967 = vadd.f32 0.0, %v5966
        %v5968 = vpop.f32.mrf.mxu0
        %v5969 = vpop.f32.mrf.mxu0
        %v5970 = vadd.f32 0.0, %v5969
        %v5971 = vpop.f32.mrf.mxu0
        %5972 = vmatprep.mubr.bf16.mxu0 %v5825
        %5973 = vmatmul.mubr.bf16.gmra.mxu0 %v5824
        %v5974 = vpop.f32.mrf.mxu0
        %v5975 = vadd.f32 0.0, %v5974
        %v5976 = vpop.f32.mrf.mxu0
        %v5977 = vpop.f32.mrf.mxu0
        %v5978 = vadd.f32 0.0, %v5977
        %v5979 = vpop.f32.mrf.mxu0
        %5980 = vmatprep.mubr.bf16.mxu0 %v5827
        %5981 = vmatmul.mubr.bf16.gmra.mxu0 %v5826
        %v5982 = vpop.f32.mrf.mxu0
        %v5983 = vadd.f32 0.0, %v5982
        %v5984 = vpop.f32.mrf.mxu0
        %v5985 = vpop.f32.mrf.mxu0
        %v5986 = vadd.f32 0.0, %v5985
        %v5987 = vpop.f32.mrf.mxu0
        %5988 = vmatprep.mubr.bf16.mxu0 %v5829
        %5989 = vmatmul.mubr.bf16.gmra.mxu0 %v5828
        %v5990 = vpop.f32.mrf.mxu0
        %v5991 = vadd.f32 0.0, %v5990
        %v5992 = vpop.f32.mrf.mxu0
        %v5993 = vpop.f32.mrf.mxu0
        %v5994 = vadd.f32 0.0, %v5993
        %v5995 = vpop.f32.mrf.mxu0
        %5996 = vmatprep.mubr.bf16.mxu0 %v5831
        %5997 = vmatmul.mubr.bf16.gmra.mxu0 %v5830
        %v5998 = vpop.f32.mrf.mxu0
        %v5999 = vadd.f32 0.0, %v5998
        %v6000 = vpop.f32.mrf.mxu0
        %v6001 = vpop.f32.mrf.mxu0
        %v6002 = vadd.f32 0.0, %v6001
        %v6003 = vpop.f32.mrf.mxu0
        %6004 = vmatprep.mubr.bf16.mxu0 %v5833
        %6005 = vmatmul.mubr.bf16.gmra.mxu0 %v5832
        %v6006 = vpop.f32.mrf.mxu0
        %v6007 = vadd.f32 0.0, %v6006
        %v6008 = vpop.f32.mrf.mxu0
        %v6009 = vpop.f32.mrf.mxu0
        %v6010 = vadd.f32 0.0, %v6009
        %v6011 = vpop.f32.mrf.mxu0
        %6012 = vmatprep.mubr.bf16.mxu0 %v5835
        %6013 = vmatmul.mubr.bf16.gmra.mxu0 %v5834
        %v6014 = vpop.f32.mrf.mxu0
        %v6015 = vadd.f32 0.0, %v6014
        %v6016 = vpop.f32.mrf.mxu0
        %v6017 = vpop.f32.mrf.mxu0
        %v6018 = vadd.f32 0.0, %v6017
        %v6019 = vpop.f32.mrf.mxu0
        %6020 = vmatprep.mubr.bf16.mxu0 %v5837
        %6021 = vmatmul.mubr.bf16.gmra.mxu0 %v5836
        %v6022 = vpop.f32.mrf.mxu0
        %v6023 = vadd.f32 0.0, %v6022
        %v6024 = vpop.f32.mrf.mxu0
        %v6025 = vpop.f32.mrf.mxu0
        %v6026 = vadd.f32 0.0, %v6025
        %v6027 = vpop.f32.mrf.mxu0
        %6028 = vmatprep.mubr.bf16.mxu0 %v5839
        %6029 = vmatmul.mubr.bf16.gmra.mxu0 %v5838
        %v6030 = vpop.f32.mrf.mxu0
        %v6031 = vadd.f32 0.0, %v6030
        %v6032 = vpop.f32.mrf.mxu0
        %v6033 = vpop.f32.mrf.mxu0
        %v6034 = vadd.f32 0.0, %v6033
        %v6035 = vpop.f32.mrf.mxu0
        %6036 = vmatprep.mubr.bf16.mxu0 %v5841
        %6037 = vmatmul.mubr.bf16.gmra.mxu0 %v5840
        %v6038 = vpop.f32.mrf.mxu0
        %v6039 = vadd.f32 0.0, %v6038
        %v6040 = vpop.f32.mrf.mxu0
        %v6041 = vpop.f32.mrf.mxu0
        %v6042 = vadd.f32 0.0, %v6041
        %v6043 = vpop.f32.mrf.mxu0
        %6044 = vmatprep.mubr.bf16.mxu0 %v5843
        %6045 = vmatmul.mubr.bf16.gmra.mxu0 %v5842
        %v6046 = vpop.f32.mrf.mxu0
        %v6047 = vadd.f32 0.0, %v6046
        %v6048 = vpop.f32.mrf.mxu0
        %v6049 = vpop.f32.mrf.mxu0
        %v6050 = vadd.f32 0.0, %v6049
        %v6051 = vpop.f32.mrf.mxu0
        %6052 = vdwg.mxu0
        %6085 = vrot.lane.b32.xlu0 %v5927, 96
        %v6086 = vpop.permute.xlu0 %6085
        %6087 = vrot.lane.b32.xlu0 %v5930, 96
        %v6088 = vpop.permute.xlu0 %6087
        %6089 = vrot.lane.b32.xlu0 %v5935, 96
        %v6090 = vpop.permute.xlu0 %6089
        %6091 = vrot.lane.b32.xlu0 %v5938, 96
        %v6092 = vpop.permute.xlu0 %6091
        %6093 = vrot.lane.b32.xlu0 %v5943, 96
        %v6094 = vpop.permute.xlu0 %6093
        %6095 = vrot.lane.b32.xlu0 %v5946, 96
        %v6096 = vpop.permute.xlu0 %6095
        %6097 = vrot.lane.b32.xlu0 %v5951, 96
        %v6098 = vpop.permute.xlu0 %6097
        %6099 = vrot.lane.b32.xlu0 %v5954, 96
        %v6100 = vpop.permute.xlu0 %6099
        %6101 = vrot.lane.b32.xlu0 %v5959, 96
        %v6102 = vpop.permute.xlu0 %6101
        %6103 = vrot.lane.b32.xlu0 %v5962, 96
        %v6104 = vpop.permute.xlu0 %6103
        %6105 = vrot.lane.b32.xlu0 %v5967, 96
        %v6106 = vpop.permute.xlu0 %6105
        %6107 = vrot.lane.b32.xlu0 %v5970, 96
        %v6108 = vpop.permute.xlu0 %6107
        %6109 = vrot.lane.b32.xlu0 %v5975, 96
        %v6110 = vpop.permute.xlu0 %6109
        %6111 = vrot.lane.b32.xlu0 %v5978, 96
        %v6112 = vpop.permute.xlu0 %6111
        %6113 = vrot.lane.b32.xlu0 %v5983, 96
        %v6114 = vpop.permute.xlu0 %6113
        %6115 = vrot.lane.b32.xlu0 %v5986, 96
        %v6116 = vpop.permute.xlu0 %6115
        %6117 = vrot.lane.b32.xlu0 %v5991, 96
        %v6118 = vpop.permute.xlu0 %6117
        %6119 = vrot.lane.b32.xlu0 %v5994, 96
        %v6120 = vpop.permute.xlu0 %6119
        %6121 = vrot.lane.b32.xlu0 %v5999, 96
        %v6122 = vpop.permute.xlu0 %6121
        %6123 = vrot.lane.b32.xlu0 %v6002, 96
        %v6124 = vpop.permute.xlu0 %6123
        %6125 = vrot.lane.b32.xlu0 %v6007, 96
        %v6126 = vpop.permute.xlu0 %6125
        %6127 = vrot.lane.b32.xlu0 %v6010, 96
        %v6128 = vpop.permute.xlu0 %6127
        %6129 = vrot.lane.b32.xlu0 %v6015, 96
        %v6130 = vpop.permute.xlu0 %6129
        %6131 = vrot.lane.b32.xlu0 %v6018, 96
        %v6132 = vpop.permute.xlu0 %6131
        %6133 = vrot.lane.b32.xlu0 %v6023, 96
        %v6134 = vpop.permute.xlu0 %6133
        %6135 = vrot.lane.b32.xlu0 %v6026, 96
        %v6136 = vpop.permute.xlu0 %6135
        %6137 = vrot.lane.b32.xlu0 %v6031, 96
        %v6138 = vpop.permute.xlu0 %6137
        %6139 = vrot.lane.b32.xlu0 %v6034, 96
        %v6140 = vpop.permute.xlu0 %6139
        %6141 = vrot.lane.b32.xlu0 %v6039, 96
        %v6142 = vpop.permute.xlu0 %6141
        %6143 = vrot.lane.b32.xlu0 %v6042, 96
        %v6144 = vpop.permute.xlu0 %6143
        %6145 = vrot.lane.b32.xlu0 %v6047, 96
        %v6146 = vpop.permute.xlu0 %6145
        %6147 = vrot.lane.b32.xlu0 %v6050, 96
        %v6148 = vpop.permute.xlu0 %6147
        %vm6181 = vcmask 1048320
        %6182 = vst.msk [vmem:[#allocation3] sm:$0xff] %vm6181, %v6086
        %6183 = vst.msk [vmem:[#allocation3 + $0x8] sm:$0xff] %vm6181, %v6088
        %6184 = vst.msk [vmem:[#allocation3 + $0x10] sm:$0xff] %vm6181, %v6090
        %6185 = vst.msk [vmem:[#allocation3 + $0x18] sm:$0xff] %vm6181, %v6092
        %6186 = vst.msk [vmem:[#allocation3 + $0x20] sm:$0xff] %vm6181, %v6094
        %6187 = vst.msk [vmem:[#allocation3 + $0x28] sm:$0xff] %vm6181, %v6096
        %6188 = vst.msk [vmem:[#allocation3 + $0x30] sm:$0xff] %vm6181, %v6098
        %6189 = vst.msk [vmem:[#allocation3 + $0x38] sm:$0xff] %vm6181, %v6100
        %6190 = vst.msk [vmem:[#allocation3 + $0x40] sm:$0xff] %vm6181, %v6102
        %6191 = vst.msk [vmem:[#allocation3 + $0x48] sm:$0xff] %vm6181, %v6104
        %6192 = vst.msk [vmem:[#allocation3 + $0x50] sm:$0xff] %vm6181, %v6106
        %6193 = vst.msk [vmem:[#allocation3 + $0x58] sm:$0xff] %vm6181, %v6108
        %6194 = vst.msk [vmem:[#allocation3 + $0x60] sm:$0xff] %vm6181, %v6110
        %6195 = vst.msk [vmem:[#allocation3 + $0x68] sm:$0xff] %vm6181, %v6112
        %6196 = vst.msk [vmem:[#allocation3 + $0x70] sm:$0xff] %vm6181, %v6114
        %6197 = vst.msk [vmem:[#allocation3 + $0x78] sm:$0xff] %vm6181, %v6116
        %6198 = vst.msk [vmem:[#allocation3 + $0x80] sm:$0xff] %vm6181, %v6118
        %6199 = vst.msk [vmem:[#allocation3 + $0x88] sm:$0xff] %vm6181, %v6120
        %6200 = vst.msk [vmem:[#allocation3 + $0x90] sm:$0xff] %vm6181, %v6122
        %6201 = vst.msk [vmem:[#allocation3 + $0x98] sm:$0xff] %vm6181, %v6124
        %6202 = vst.msk [vmem:[#allocation3 + $0xa0] sm:$0xff] %vm6181, %v6126
        %6203 = vst.msk [vmem:[#allocation3 + $0xa8] sm:$0xff] %vm6181, %v6128
        %6204 = vst.msk [vmem:[#allocation3 + $0xb0] sm:$0xff] %vm6181, %v6130
        %6205 = vst.msk [vmem:[#allocation3 + $0xb8] sm:$0xff] %vm6181, %v6132
        %6206 = vst.msk [vmem:[#allocation3 + $0xc0] sm:$0xff] %vm6181, %v6134
        %6207 = vst.msk [vmem:[#allocation3 + $0xc8] sm:$0xff] %vm6181, %v6136
        %6208 = vst.msk [vmem:[#allocation3 + $0xd0] sm:$0xff] %vm6181, %v6138
        %6209 = vst.msk [vmem:[#allocation3 + $0xd8] sm:$0xff] %vm6181, %v6140
        %6210 = vst.msk [vmem:[#allocation3 + $0xe0] sm:$0xff] %vm6181, %v6142
        %6211 = vst.msk [vmem:[#allocation3 + $0xe8] sm:$0xff] %vm6181, %v6144
        %6212 = vst.msk [vmem:[#allocation3 + $0xf0] sm:$0xff] %vm6181, %v6146
        %6213 = vst.msk [vmem:[#allocation3 + $0xf8] sm:$0xff] %vm6181, %v6148
        %v6214 = vld [vmem:[#allocation3] sm:$0xff]
        %v6215 = vld [vmem:[#allocation3 + $0x8] sm:$0xff]
        %v6216 = vld [vmem:[#allocation3 + $0x10] sm:$0xff]
        %v6217 = vld [vmem:[#allocation3 + $0x18] sm:$0xff]
        %v6218 = vld [vmem:[#allocation3 + $0x20] sm:$0xff]
        %v6219 = vld [vmem:[#allocation3 + $0x28] sm:$0xff]
        %v6220 = vld [vmem:[#allocation3 + $0x30] sm:$0xff]
        %v6221 = vld [vmem:[#allocation3 + $0x38] sm:$0xff]
        %v6222 = vld [vmem:[#allocation3 + $0x40] sm:$0xff]
        %v6223 = vld [vmem:[#allocation3 + $0x48] sm:$0xff]
        %v6224 = vld [vmem:[#allocation3 + $0x50] sm:$0xff]
        %v6225 = vld [vmem:[#allocation3 + $0x58] sm:$0xff]
        %v6226 = vld [vmem:[#allocation3 + $0x60] sm:$0xff]
        %v6227 = vld [vmem:[#allocation3 + $0x68] sm:$0xff]
        %v6228 = vld [vmem:[#allocation3 + $0x70] sm:$0xff]
        %v6229 = vld [vmem:[#allocation3 + $0x78] sm:$0xff]
        %v6230 = vld [vmem:[#allocation3 + $0x80] sm:$0xff]
        %v6231 = vld [vmem:[#allocation3 + $0x88] sm:$0xff]
        %v6232 = vld [vmem:[#allocation3 + $0x90] sm:$0xff]
        %v6233 = vld [vmem:[#allocation3 + $0x98] sm:$0xff]
        %v6234 = vld [vmem:[#allocation3 + $0xa0] sm:$0xff]
        %v6235 = vld [vmem:[#allocation3 + $0xa8] sm:$0xff]
        %v6236 = vld [vmem:[#allocation3 + $0xb0] sm:$0xff]
        %v6237 = vld [vmem:[#allocation3 + $0xb8] sm:$0xff]
        %v6238 = vld [vmem:[#allocation3 + $0xc0] sm:$0xff]
        %v6239 = vld [vmem:[#allocation3 + $0xc8] sm:$0xff]
        %v6240 = vld [vmem:[#allocation3 + $0xd0] sm:$0xff]
        %v6241 = vld [vmem:[#allocation3 + $0xd8] sm:$0xff]
        %v6242 = vld [vmem:[#allocation3 + $0xe0] sm:$0xff]
        %v6243 = vld [vmem:[#allocation3 + $0xe8] sm:$0xff]
        %v6244 = vld [vmem:[#allocation3 + $0xf0] sm:$0xff]
        %v6245 = vld [vmem:[#allocation3 + $0xf8] sm:$0xff]
        %v6246 = vpack.c.bf16 %v6215, %v6214
        %v6247 = vpack.c.bf16 %v6217, %v6216
        %v6248 = vpack.c.bf16 %v6219, %v6218
        %v6249 = vpack.c.bf16 %v6221, %v6220
        %v6250 = vpack.c.bf16 %v6223, %v6222
        %v6251 = vpack.c.bf16 %v6225, %v6224
        %v6252 = vpack.c.bf16 %v6227, %v6226
        %v6253 = vpack.c.bf16 %v6229, %v6228
        %v6254 = vpack.c.bf16 %v6231, %v6230
        %v6255 = vpack.c.bf16 %v6233, %v6232
        %v6256 = vpack.c.bf16 %v6235, %v6234
        %v6257 = vpack.c.bf16 %v6237, %v6236
        %v6258 = vpack.c.bf16 %v6239, %v6238
        %v6259 = vpack.c.bf16 %v6241, %v6240
        %v6260 = vpack.c.bf16 %v6243, %v6242
        %v6261 = vpack.c.bf16 %v6245, %v6244
        %v6262 = vld [vmem:[#allocation10] sm:$0xf]
        %v6263 = vld [vmem:[#allocation10 + $0x4] sm:$0xf]
        %v6264 = vld [vmem:[#allocation10 + $0x8] sm:$0xf]
        %v6265 = vld [vmem:[#allocation10 + $0xc] sm:$0xf]
        %v6266 = vld [vmem:[#allocation10 + $0x10] sm:$0xf]
        %v6267 = vld [vmem:[#allocation10 + $0x14] sm:$0xf]
        %v6268 = vld [vmem:[#allocation10 + $0x18] sm:$0xf]
        %v6269 = vld [vmem:[#allocation10 + $0x1c] sm:$0xf]
        %v6270 = vld [vmem:[#allocation10 + $0x20] sm:$0xf]
        %v6271 = vld [vmem:[#allocation10 + $0x24] sm:$0xf]
        %v6272 = vld [vmem:[#allocation10 + $0x28] sm:$0xf]
        %v6273 = vld [vmem:[#allocation10 + $0x2c] sm:$0xf]
        %v6274 = vld [vmem:[#allocation10 + $0x30] sm:$0xf]
        %v6275 = vld [vmem:[#allocation10 + $0x34] sm:$0xf]
        %v6276 = vld [vmem:[#allocation10 + $0x38] sm:$0xf]
        %v6277 = vld [vmem:[#allocation10 + $0x3c] sm:$0xf]
        %v6278 = vld [vmem:[%s4] sm:$0x1]
        %v6280 = vlaneseq
        %v6281 = vshrl.u32 %v6280, 7
        %v6282 = vsub.s32 0, %v6281
        %v6283 = vrot.slane %v6278, %v6282
        %v6301 = vunpack.c.l.b16 %v6262
        %v6302 = vunpack.c.l.b16 %v6263
        %v6303 = vunpack.c.l.b16 %v6264
        %v6304 = vunpack.c.l.b16 %v6265
        %v6305 = vunpack.c.l.b16 %v6266
        %v6306 = vunpack.c.l.b16 %v6267
        %v6307 = vunpack.c.l.b16 %v6268
        %v6308 = vunpack.c.l.b16 %v6269
        %v6309 = vunpack.c.l.b16 %v6270
        %v6310 = vunpack.c.l.b16 %v6271
        %v6311 = vunpack.c.l.b16 %v6272
        %v6312 = vunpack.c.l.b16 %v6273
        %v6313 = vunpack.c.l.b16 %v6274
        %v6314 = vunpack.c.l.b16 %v6275
        %v6315 = vunpack.c.l.b16 %v6276
        %v6316 = vunpack.c.l.b16 %v6277
        %v6317 = vpack.c.b16 %v6302, %v6301
        %v6318 = vpack.c.b16 %v6304, %v6303
        %v6319 = vpack.c.b16 %v6306, %v6305
        %v6320 = vpack.c.b16 %v6308, %v6307
        %v6321 = vpack.c.b16 %v6310, %v6309
        %v6322 = vpack.c.b16 %v6312, %v6311
        %v6323 = vpack.c.b16 %v6314, %v6313
        %v6324 = vpack.c.b16 %v6316, %v6315
        %6333 = vmatprep.subr.bf16.mxu0 0
        %6334 = vmatpush1.bf16.msra.mxu0 %v6324
        %6335 = vmatprep.subr.bf16.mxu0 0
        %6336 = vmatpush1.bf16.msra.mxu0 %v6323
        %6337 = vmatprep.subr.bf16.mxu0 0
        %6338 = vmatpush1.bf16.msra.mxu0 %v6322
        %6339 = vmatprep.subr.bf16.mxu0 0
        %6340 = vmatpush1.bf16.msra.mxu0 %v6321
        %6341 = vmatprep.subr.bf16.mxu0 0
        %6342 = vmatpush1.bf16.msra.mxu0 %v6320
        %6343 = vmatprep.subr.bf16.mxu0 0
        %6344 = vmatpush1.bf16.msra.mxu0 %v6319
        %6345 = vmatprep.subr.bf16.mxu0 0
        %6346 = vmatpush1.bf16.msra.mxu0 %v6318
        %6347 = vmatprep.subr.bf16.mxu0 0
        %6348 = vmatpush1.bf16.msra.mxu0 %v6317
        %6349 = vmatprep.subr.bf16.mxu0 0
        %6350 = vmatpush2.bf16.msra.mxu0 0
        %6351 = vmatprep.subr.bf16.mxu0 0
        %6352 = vmatpush2.bf16.msra.mxu0 0
        %6353 = vmatprep.subr.bf16.mxu0 0
        %6354 = vmatpush2.bf16.msra.mxu0 0
        %6355 = vmatprep.subr.bf16.mxu0 0
        %6356 = vmatpush2.bf16.msra.mxu0 0
        %6357 = vmatprep.subr.bf16.mxu0 0
        %6358 = vmatpush2.bf16.msra.mxu0 0
        %6359 = vmatprep.subr.bf16.mxu0 0
        %6360 = vmatpush2.bf16.msra.mxu0 0
        %6361 = vmatprep.subr.bf16.mxu0 0
        %6362 = vmatpush2.bf16.msra.mxu0 0
        %6363 = vmatprep.subr.bf16.mxu0 0
        %6364 = vmatpush2.bf16.msra.mxu0 0
        %6365 = vmatprep.mubr.bf16.mxu0 0
        %6366 = vmatmul.mubr.bf16.gmra.mxu0 %v6246
        %v6367 = vpop.f32.mrf.mxu0
        %v6368 = vadd.f32 %v6283, %v6367
        %v6369 = vpop.f32.mrf.mxu0
        %v6370 = vpop.f32.mrf.mxu0
        %v6371 = vadd.f32 %v6283, %v6370
        %v6372 = vpop.f32.mrf.mxu0
        %6373 = vmatprep.mubr.bf16.mxu0 0
        %6374 = vmatmul.mubr.bf16.gmra.mxu0 %v6247
        %v6375 = vpop.f32.mrf.mxu0
        %v6376 = vadd.f32 %v6283, %v6375
        %v6377 = vpop.f32.mrf.mxu0
        %v6378 = vpop.f32.mrf.mxu0
        %v6379 = vadd.f32 %v6283, %v6378
        %v6380 = vpop.f32.mrf.mxu0
        %6381 = vmatprep.mubr.bf16.mxu0 0
        %6382 = vmatmul.mubr.bf16.gmra.mxu0 %v6248
        %v6383 = vpop.f32.mrf.mxu0
        %v6384 = vadd.f32 %v6283, %v6383
        %v6385 = vpop.f32.mrf.mxu0
        %v6386 = vpop.f32.mrf.mxu0
        %v6387 = vadd.f32 %v6283, %v6386
        %v6388 = vpop.f32.mrf.mxu0
        %6389 = vmatprep.mubr.bf16.mxu0 0
        %6390 = vmatmul.mubr.bf16.gmra.mxu0 %v6249
        %v6391 = vpop.f32.mrf.mxu0
        %v6392 = vadd.f32 %v6283, %v6391
        %v6393 = vpop.f32.mrf.mxu0
        %v6394 = vpop.f32.mrf.mxu0
        %v6395 = vadd.f32 %v6283, %v6394
        %v6396 = vpop.f32.mrf.mxu0
        %6397 = vmatprep.mubr.bf16.mxu0 0
        %6398 = vmatmul.mubr.bf16.gmra.mxu0 %v6250
        %v6399 = vpop.f32.mrf.mxu0
        %v6400 = vadd.f32 %v6283, %v6399
        %v6401 = vpop.f32.mrf.mxu0
        %v6402 = vpop.f32.mrf.mxu0
        %v6403 = vadd.f32 %v6283, %v6402
        %v6404 = vpop.f32.mrf.mxu0
        %6405 = vmatprep.mubr.bf16.mxu0 0
        %6406 = vmatmul.mubr.bf16.gmra.mxu0 %v6251
        %v6407 = vpop.f32.mrf.mxu0
        %v6408 = vadd.f32 %v6283, %v6407
        %v6409 = vpop.f32.mrf.mxu0
        %v6410 = vpop.f32.mrf.mxu0
        %v6411 = vadd.f32 %v6283, %v6410
        %v6412 = vpop.f32.mrf.mxu0
        %6413 = vmatprep.mubr.bf16.mxu0 0
        %6414 = vmatmul.mubr.bf16.gmra.mxu0 %v6252
        %v6415 = vpop.f32.mrf.mxu0
        %v6416 = vadd.f32 %v6283, %v6415
        %v6417 = vpop.f32.mrf.mxu0
        %v6418 = vpop.f32.mrf.mxu0
        %v6419 = vadd.f32 %v6283, %v6418
        %v6420 = vpop.f32.mrf.mxu0
        %6421 = vmatprep.mubr.bf16.mxu0 0
        %6422 = vmatmul.mubr.bf16.gmra.mxu0 %v6253
        %v6423 = vpop.f32.mrf.mxu0
        %v6424 = vadd.f32 %v6283, %v6423
        %v6425 = vpop.f32.mrf.mxu0
        %v6426 = vpop.f32.mrf.mxu0
        %v6427 = vadd.f32 %v6283, %v6426
        %v6428 = vpop.f32.mrf.mxu0
        %6429 = vmatprep.mubr.bf16.mxu0 0
        %6430 = vmatmul.mubr.bf16.gmra.mxu0 %v6254
        %v6431 = vpop.f32.mrf.mxu0
        %v6432 = vadd.f32 %v6283, %v6431
        %v6433 = vpop.f32.mrf.mxu0
        %v6434 = vpop.f32.mrf.mxu0
        %v6435 = vadd.f32 %v6283, %v6434
        %v6436 = vpop.f32.mrf.mxu0
        %6437 = vmatprep.mubr.bf16.mxu0 0
        %6438 = vmatmul.mubr.bf16.gmra.mxu0 %v6255
        %v6439 = vpop.f32.mrf.mxu0
        %v6440 = vadd.f32 %v6283, %v6439
        %v6441 = vpop.f32.mrf.mxu0
        %v6442 = vpop.f32.mrf.mxu0
        %v6443 = vadd.f32 %v6283, %v6442
        %v6444 = vpop.f32.mrf.mxu0
        %6445 = vmatprep.mubr.bf16.mxu0 0
        %6446 = vmatmul.mubr.bf16.gmra.mxu0 %v6256
        %v6447 = vpop.f32.mrf.mxu0
        %v6448 = vadd.f32 %v6283, %v6447
        %v6449 = vpop.f32.mrf.mxu0
        %v6450 = vpop.f32.mrf.mxu0
        %v6451 = vadd.f32 %v6283, %v6450
        %v6452 = vpop.f32.mrf.mxu0
        %6453 = vmatprep.mubr.bf16.mxu0 0
        %6454 = vmatmul.mubr.bf16.gmra.mxu0 %v6257
        %v6455 = vpop.f32.mrf.mxu0
        %v6456 = vadd.f32 %v6283, %v6455
        %v6457 = vpop.f32.mrf.mxu0
        %v6458 = vpop.f32.mrf.mxu0
        %v6459 = vadd.f32 %v6283, %v6458
        %v6460 = vpop.f32.mrf.mxu0
        %6461 = vmatprep.mubr.bf16.mxu0 0
        %6462 = vmatmul.mubr.bf16.gmra.mxu0 %v6258
        %v6463 = vpop.f32.mrf.mxu0
        %v6464 = vadd.f32 %v6283, %v6463
        %v6465 = vpop.f32.mrf.mxu0
        %v6466 = vpop.f32.mrf.mxu0
        %v6467 = vadd.f32 %v6283, %v6466
        %v6468 = vpop.f32.mrf.mxu0
        %6469 = vmatprep.mubr.bf16.mxu0 0
        %6470 = vmatmul.mubr.bf16.gmra.mxu0 %v6259
        %v6471 = vpop.f32.mrf.mxu0
        %v6472 = vadd.f32 %v6283, %v6471
        %v6473 = vpop.f32.mrf.mxu0
        %v6474 = vpop.f32.mrf.mxu0
        %v6475 = vadd.f32 %v6283, %v6474
        %v6476 = vpop.f32.mrf.mxu0
        %6477 = vmatprep.mubr.bf16.mxu0 0
        %6478 = vmatmul.mubr.bf16.gmra.mxu0 %v6260
        %v6479 = vpop.f32.mrf.mxu0
        %v6480 = vadd.f32 %v6283, %v6479
        %v6481 = vpop.f32.mrf.mxu0
        %v6482 = vpop.f32.mrf.mxu0
        %v6483 = vadd.f32 %v6283, %v6482
        %v6484 = vpop.f32.mrf.mxu0
        %6485 = vmatprep.mubr.bf16.mxu0 0
        %6486 = vmatmul.mubr.bf16.gmra.mxu0 %v6261
        %v6487 = vpop.f32.mrf.mxu0
        %v6488 = vadd.f32 %v6283, %v6487
        %v6489 = vpop.f32.mrf.mxu0
        %v6490 = vpop.f32.mrf.mxu0
        %v6491 = vadd.f32 %v6283, %v6490
        %v6492 = vpop.f32.mrf.mxu0
        %6493 = vdwg.mxu0
        %6494 = vst [vmem:[%s300] sm:$0xff] %v6368
        %6495 = vst [vmem:[%s300 + $0x8] sm:$0xff] %v6371
        %6496 = vst [vmem:[%s300 + $0x10] sm:$0xff] %v6376
        %6497 = vst [vmem:[%s300 + $0x18] sm:$0xff] %v6379
        %6498 = vst [vmem:[%s300 + $0x20] sm:$0xff] %v6384
        %6499 = vst [vmem:[%s300 + $0x28] sm:$0xff] %v6387
        %6500 = vst [vmem:[%s300 + $0x30] sm:$0xff] %v6392
        %6501 = vst [vmem:[%s300 + $0x38] sm:$0xff] %v6395
        %6502 = vst [vmem:[%s300 + $0x40] sm:$0xff] %v6400
        %6503 = vst [vmem:[%s300 + $0x48] sm:$0xff] %v6403
        %6504 = vst [vmem:[%s300 + $0x50] sm:$0xff] %v6408
        %6505 = vst [vmem:[%s300 + $0x58] sm:$0xff] %v6411
        %6506 = vst [vmem:[%s300 + $0x60] sm:$0xff] %v6416
        %6507 = vst [vmem:[%s300 + $0x68] sm:$0xff] %v6419
        %6508 = vst [vmem:[%s300 + $0x70] sm:$0xff] %v6424
        %6509 = vst [vmem:[%s300 + $0x78] sm:$0xff] %v6427
        %6510 = vst [vmem:[%s300 + $0x80] sm:$0xff] %v6432
        %6511 = vst [vmem:[%s300 + $0x88] sm:$0xff] %v6435
        %6512 = vst [vmem:[%s300 + $0x90] sm:$0xff] %v6440
        %6513 = vst [vmem:[%s300 + $0x98] sm:$0xff] %v6443
        %6514 = vst [vmem:[%s300 + $0xa0] sm:$0xff] %v6448
        %6515 = vst [vmem:[%s300 + $0xa8] sm:$0xff] %v6451
        %6516 = vst [vmem:[%s300 + $0xb0] sm:$0xff] %v6456
        %6517 = vst [vmem:[%s300 + $0xb8] sm:$0xff] %v6459
        %6518 = vst [vmem:[%s300 + $0xc0] sm:$0xff] %v6464
        %6519 = vst [vmem:[%s300 + $0xc8] sm:$0xff] %v6467
        %6520 = vst [vmem:[%s300 + $0xd0] sm:$0xff] %v6472
        %6521 = vst [vmem:[%s300 + $0xd8] sm:$0xff] %v6475
        %6522 = vst [vmem:[%s300 + $0xe0] sm:$0xff] %v6480
        %6523 = vst [vmem:[%s300 + $0xe8] sm:$0xff] %v6483
        %6524 = vst [vmem:[%s300 + $0xf0] sm:$0xff] %v6488
        %6525 = vst [vmem:[%s300 + $0xf8] sm:$0xff] %v6491
        %s6526 = sand.u32 %s156, 1
        %s6527 = scalar_lea.sflag [#allocation6], %s6526
        %s6528 = sand.u32 %s156, 1
        %s6529 = smul.addr %s6528, 256
        %s6530 = scalar_lea.vmem [#allocation12], %s6529
        // Predicated region
        $region61: #{tpu_custom_call.1} parent=39 // pred_check
          %p6531 = pneg %p166
        $region62: #{tpu_custom_call.1} parent=39 // pred_check_branch
          %6533 = sbr.rel (%p6531) target = $region64
        $region63: #{tpu_custom_call.1} parent=39 // pred_region
          %s6534 = smul.u32 32, %s29
          %s6536 = ssub.s32 4096, 4096
          %6537 = vsyncadd %s6527, %s6536
          %s6538 = smul.addr %s28, 32
          %s6539 = sadd.s32 %s6534, %s6538
          %s6540 = smul.addr %s6539, 128
          %s6541 = scalar_lea.hbm %s5, %s6540
          %s6542 = sshll.u32 %s6530, 4
          %s6543 = int_to_ptr.vmem [resolvable:$true] %s6542
          %6548 = dma.vmem_to_hbm [thread:$0]  %s6543, 4096, %s6541, %s6527, 128, 128, 8
        $region64: #{tpu_custom_call.1} parent=39 // pred_fallthru
          _
      $region40: #{tpu_custom_call.1} parent=5 // pred_fallthru
        _
      %p6549 = scmp.le.s32.totalorder 2, %s19
      // Predicated region
      $region65: #{tpu_custom_call.1} parent=5 // pred_check
        %p6550 = pneg %p6549
      $region66: #{tpu_custom_call.1} parent=5 // pred_check_branch
        %6552 = sbr.rel (%p6550) target = $region68
      $region67: #{tpu_custom_call.1} parent=5 // pred_region
        %s6553 = ssub.s32 %s19, 2
        // Predicated region
        $region69: #{tpu_custom_call.1} parent=67 // pred_check
          %p6554 = pneg %p172
        $region70: #{tpu_custom_call.1} parent=67 // pred_check_branch
          %6556 = sbr.rel (%p6554) target = $region72
        $region71: #{tpu_custom_call.1} parent=67 // pred_region
          %s6557 = sand.u32 %s157, 1
          %s6558 = scalar_lea.sflag [#allocation6], %s6557
          %s6559 = sand.u32 %s157, 1
          %s6560 = smul.addr %s6559, 256
          %s6561 = scalar_lea.vmem [#allocation12], %s6560
          %6562 = dma.done %s6558, 4096
        $region72: #{tpu_custom_call.1} parent=67 // pred_fallthru
          _
      $region68: #{tpu_custom_call.1} parent=5 // pred_fallthru
        _
    $region6: #{tpu_custom_call.1} parent=1 // loop_footer
      %s23 = sadd.s32 1, %s19
    $region7: #{tpu_custom_call.1} parent=1 // loop_footer_branch
      %18 = sbr.rel target = $region3
    $region8: #{tpu_custom_call.1} parent=1 // loop_exit
      _
    %6563 = vsyncpa [#allocation5], 1
    %s6564 = scalar_lea.sflag [#allocation5], 1
    %6565 = vsyncpa %s6564, 1
    %6566 = vsyncpa [#allocation8], 1
    %6567 = vsyncpa [#allocation11], 1
    %6568 = vsyncpa [#allocation6], 1
    %s6569 = scalar_lea.sflag [#allocation6], 1
    %6570 = vsyncpa %s6569, 1

</llo_original>
